<compile_context>
chip_gen: v7x
topology: tpu7x:2x2x1
jax: 0.10.0
libtpu: 0.0.40
codegen_flags: <defaults>
</compile_context>

<pallas_src>
import jax
import jax.numpy as jnp
import numpy as np
from jax.experimental import pallas as pl
from jax.experimental.pallas import tpu as pltpu


# Which original 3x3 taps (dy or dx in {0,1,2}) contribute to output parity p in {0,1}
# when reading the zero-padded original-resolution input at shift s in {0,1,2}.
# Derived from  out[2i+p] = sum_d w[d] * up[2i+p+d-1],  up[j] = x[j//2]:
#   p=0:  x[i-1] <- w[0],          x[i]   <- w[1]+w[2]
#   p=1:  x[i]   <- w[0]+w[1],     x[i+1] <- w[2]
_TAPS = {(0, 0): (0,), (1, 0): (1, 2), (1, 1): (0, 1), (2, 1): (2,)}


def _parity_weights(w_hwio):
    """(3,3,Cin,Cout) conv weights -> (2,2,3,Cin,2*Cout) parity-combined weights.

    Entry [a, u, t] multiplies the padded original-resolution pixel at
    (row p + a + u, col q + t) and produces both column parities b (stacked along the
    last axis, lane = b*Cout + c) of output pixels (2p+a, 2q+b).
    """
    cin, cout = w_hwio.shape[2], w_hwio.shape[3]
    zero = jnp.zeros((cin, cout), w_hwio.dtype)
    a_blocks = []
    for a in range(2):
        u_blocks = []
        for u in range(2):
            dys = _TAPS[(a + u, a)]
            t_blocks = []
            for t in range(3):
                halves = []
                for b in range(2):
                    dxs = _TAPS.get((t, b), ())
                    acc = zero
                    for dy in dys:
                        for dx in dxs:
                            acc = acc + w_hwio[dy, dx]
                    halves.append(acc)
                t_blocks.append(jnp.concatenate(halves, axis=-1))   # (Cin, 2*Cout)
            u_blocks.append(jnp.stack(t_blocks, axis=0))            # (3, Cin, 2*Cout)
        a_blocks.append(jnp.stack(u_blocks, axis=0))                # (2, 3, Cin, 2*Cout)
    return jnp.stack(a_blocks, axis=0)                              # (2, 2, 3, Cin, 2*Cout)


def _make_kernel(th, wid, cin, tn, stack_k):
    """Kernel closure over the static tile sizes.

    Refs:
      x_ref : (1, H+2, W+2, Cin)   whole padded image, resident per batch (bf16)
      w_ref : (2, 2, 3, Cin, TN)   parity-combined weights, one 2*Cout tile (bf16)
      b_ref : (1, TN)              bias tiled for both column parities (f32)
      o_ref : (1, TH, 2, W, TN)    rows (p, a), lanes (b*Cout + c) within this TN tile
    """

    def kernel(x_ref, w_ref, b_ref, o_ref):
        j = pl.program_id(2)                      # row-tile index (innermost grid axis)
        row0 = j * th
        bias = b_ref[0].astype(jnp.float32)[None, :]                  # (1, TN)

        # Three row slabs of the RESIDENT padded image; the +1/+2 shifts supply the
        # row halo.  Slicing the outermost (major) dim is pure addressing.
        slabs = [x_ref[0, pl.ds(row0 + s, th), :, :] for s in range(3)]  # (TH, W+2, Cin)
        # Column-shifted patches flattened to (TH*W, Cin).
        cols = [[slabs[s][:, t:t + wid, :].reshape(th * wid, cin) for t in range(3)]
                for s in range(3)]

        for a in (0, 1):                          # output row parity
            if stack_k:
                # One MXU pass per parity: K = 6*Cin (lane-aligned concat only).
                patch = jnp.concatenate(
                    [cols[a + u][t] for u in (0, 1) for t in range(3)], axis=-1)
                w_a = w_ref[a].reshape(6 * cin, tn)   # (u, t, cin) row-major == patch
                acc = jnp.dot(patch, w_a, preferred_element_type=jnp.float32)
            else:
                # Small / unaligned Cin: per-tap matmuls, accumulate in f32.
                acc = None
                for u in (0, 1):
                    for t in range(3):
                        part = jnp.dot(cols[a + u][t], w_ref[a, u, t],
                                       preferred_element_type=jnp.float32)
                        acc = part if acc is None else acc + part
            out = (acc + bias).reshape(th, wid, tn).astype(o_ref.dtype)
            # One dense, sublane/lane-aligned store per parity (no interleave temp).
            o_ref[0, :, a, :, :] = out

    return kernel


def _pick_tiles(n, h, w, cin, cout, out_itemsize, compute_itemsize=2):
    """Generation-aware tile choice with honest VMEM accounting."""
    cout2 = 2 * cout
    # Lane tile over the stacked output-channel axis: multiple of 128 when possible.
    tn_cands = [t for t in range(128, min(cout2, 512) + 1, 128) if cout2 % t == 0]
    tn = max(tn_cands) if tn_cands else cout2
    n_k = cout2 // tn

    try:
        vmem_cap = int(pltpu.get_tpu_info().vmem_capacity_bytes)
    except Exception:  # pragma: no cover - conservative fallback (v7x per-TC VMEM)
        vmem_cap = 64 * 1024 * 1024
    budget = int(vmem_cap * 0.55)
    vmem_limit = min(int(vmem_cap * 0.9), 128 * 1024 * 1024)

    x_resident = 2 * (h + 2) * (w + 2) * cin * compute_itemsize   # padded image, 2 bufs
    w_resident = 2 * 12 * cin * tn * compute_itemsize             # weight tile, 2 bufs

    def tile_bytes(th):
        out_blk = 2 * (2 * th * w * tn) * out_itemsize            # output tile, 2 bufs
        patches = (3 * 3 + 2 * 6) * th * w * cin * compute_itemsize  # col slices + stacks
        accs = 2 * th * w * tn * 4                                # f32 matmul results
        return x_resident + w_resident + out_blk + patches + accs

    divs = [t for t in range(1, h + 1) if h % t == 0]
    pref = [t for t in divs if t % 4 == 0] or divs
    fits = [t for t in pref if tile_bytes(t) <= budget] or [min(pref)]
    th = max(fits)                                                # biggest tile that fits
    # v7x has 2 TensorCores: keep at least 2 parallel grid steps when possible.
    if n * n_k * (h // th) < 2:
        smaller = [t for t in fits if h // t >= 2]
        if smaller:
            th = max(smaller)
    return th, tn, vmem_limit


def make_upsample_params(weight_oihw, bias, compute_dtype=jnp.bfloat16):
    """Precompute parity-combined conv weights / bias ONCE per layer.

    Note: taps are summed in f32 then cast once to compute_dtype, so rounding differs
    slightly from a bf16 conv on the upsampled image (well inside the test tolerance).
    """
    cout = weight_oihw.shape[0]
    w_hwio = jnp.transpose(weight_oihw, (2, 3, 1, 0)).astype(jnp.float32)
    wcomb = _parity_weights(w_hwio).astype(compute_dtype)          # (2, 2, 3, Cin, 2*Cout)
    b2 = jnp.concatenate([bias, bias]).reshape(1, 2 * cout).astype(jnp.float32)
    return wcomb, b2


def upsample_forward(x_nchw, wcomb=None, b2=None, *, use_conv=True,
                     channels_last=False, compute_dtype=jnp.bfloat16):
    """Equivalent of Upsample(channels, use_conv, dims=2).forward for NCHW input."""
    n, c, h, w = x_nchw.shape
    if not use_conv:
        out = jnp.repeat(jnp.repeat(x_nchw, 2, axis=2), 2, axis=3)  # pure data movement
        return jnp.transpose(out, (0, 2, 3, 1)) if channels_last else out

    cin = wcomb.shape[3]
    cout2 = wcomb.shape[4]
    cout = cout2 // 2
    assert cin == c, (cin, c)
    out_dtype = x_nchw.dtype
    out_itemsize = jnp.dtype(out_dtype).itemsize

    th, tn, vmem_limit = _pick_tiles(n, h, w, c, cout, out_itemsize)
    n_k = cout2 // tn
    n_row = h // th
    stack_k = (c % 128 == 0)   # lane-aligned K-stacking only (see header note 3)

    # NCHW -> NHWC on the small original-resolution input; cast once; zero-pad halo.
    x_nhwc = jnp.transpose(x_nchw, (0, 2, 3, 1)).astype(compute_dtype)
    xp = jnp.pad(x_nhwc, ((0, 0), (1, 1), (1, 1), (0, 0)))          # (N, H+2, W+2, C)

    flops = 4 * n * h * w * (6 * c) * cout2                         # 2 parities * 2*M*K*N
    bytes_accessed = (n * (h + 2) * (w + 2) * c * 2                 # input, read once/img
                      + n * n_k * 12 * c * tn * 2                   # weights, once/(img,k)
                      + n * 4 * h * w * cout * out_itemsize)        # output

    out5 = pl.pallas_call(
        _make_kernel(th, w, c, tn, stack_k),
        out_shape=jax.ShapeDtypeStruct((n, h, 2, w, cout2), out_dtype),
        grid=(n, n_k, n_row),                     # row tiles innermost: weights & image
                                                  # stay resident across them
        in_specs=[
            # Whole padded image: index depends on the batch axis only -> one DMA/image.
            pl.BlockSpec((1, h + 2, w + 2, c), lambda i, k, j: (i, 0, 0, 0)),
            pl.BlockSpec((2, 2, 3, c, tn), lambda i, k, j: (0, 0, 0, 0, k)),
            pl.BlockSpec((1, tn), lambda i, k, j: (0, k)),
        ],
        out_specs=pl.BlockSpec((1, th, 2, w, tn), lambda i, k, j: (i, j, 0, 0, k)),
        compiler_params=pltpu.CompilerParams(
            dimension_semantics=("parallel", "parallel", "parallel"),
            vmem_limit_bytes=vmem_limit),
        cost_estimate=pl.CostEstimate(flops=int(flops), transcendentals=0,
                                      bytes_accessed=int(bytes_accessed)),
    )(xp, wcomb, b2)

    # Rows are (p, a) and lanes (b*Cout + c): reshape to NHWC (N, 2H, 2W, Cout) is free.
    out_nhwc = out5.reshape(n, 2 * h, 2 * w, cout)
    if channels_last:
        return out_nhwc
    # NCHW to match the PyTorch module; this transpose is the one remaining HBM round
    # trip of the upsampled tensor — use channels_last=True for fused NHWC consumers.
    return jnp.transpose(out_nhwc, (0, 3, 1, 2))


def _reference_upsample_conv(x_nchw, weight_oihw, bias):
    """Pure-JAX f32 reference: F.interpolate(scale=2, 'nearest') + Conv2d(3x3, pad=1)."""
    xu = jnp.repeat(jnp.repeat(x_nchw, 2, axis=2), 2, axis=3)
    out = jax.lax.conv_general_dilated(
        xu, weight_oihw, window_strides=(1, 1), padding=((1, 1), (1, 1)),
        dimension_numbers=("NCHW", "OIHW", "NCHW"))
    return out + bias.reshape(1, -1, 1, 1)


if __name__ == "__main__":
    # Small shapes consistent with the module: batch=2, channels=4, spatial=16.
    N, C, H, W = 2, 4, 16, 16
    COUT = C  # out_channels = out_channels or channels

    key = jax.random.PRNGKey(0)
    kx, kw, kb = jax.random.split(key, 3)

    x = jax.random.normal(kx, (N, C, H, W), dtype=jnp.float32)
    fan_in = C * 3 * 3
    weight = jax.random.normal(kw, (COUT, C, 3, 3), dtype=jnp.float32) / jnp.sqrt(fan_in)
    bias = jax.random.normal(kb, (COUT,), dtype=jnp.float32) * 0.01

    # Parity-combined weights are precomputed once per layer, not per forward call.
    wcomb, b2 = make_upsample_params(weight, bias)

    fwd = jax.jit(upsample_forward)
    out = jax.block_until_ready(fwd(x, wcomb, b2))
    assert out.shape == (N, COUT, 2 * H, 2 * W), out.shape

    ref = jax.block_until_ready(_reference_upsample_conv(x, weight, bias))
    np.testing.assert_allclose(np.asarray(out, dtype=np.float32),
                               np.asarray(ref, dtype=np.float32),
                               rtol=5e-2, atol=5e-2)
    print("KERNEL_OK")
</pallas_src>

<mosaic_0001>
module attributes {stable_mosaic.version = 11 : i64} {
  func.func @kernel(%arg0: i32, %arg1: i32, %arg2: i32, %arg3: memref<1x18x18x4xbf16, #tpu.memory_space<vmem>>, %arg4: memref<2x2x3x4x8xbf16, #tpu.memory_space<vmem>>, %arg5: memref<1x8xf32, #tpu.memory_space<vmem>>, %arg6: memref<1x16x2x16x8xf32, #tpu.memory_space<vmem>>) attributes {dimension_semantics = [#tpu.dimension_semantics<parallel>, #tpu.dimension_semantics<parallel>, #tpu.dimension_semantics<parallel>], iteration_bounds = array<i64: 2, 1, 1>, scalar_prefetch = 0 : i64, scratch_operands = 0 : i64, tpu.core_type = #tpu.core_type<tc>, window_params = [{transform_indices = @transform_0, window_bounds = array<i64: 1, 18, 18, 4>}, {transform_indices = @transform_1, window_bounds = array<i64: 2, 2, 3, 4, 8>}, {transform_indices = @transform_2, window_bounds = array<i64: 1, 8>}, {transform_indices = @transform_3, window_bounds = array<i64: 1, 16, 2, 16, 8>}]} {
    %c16_i32 = arith.constant 16 : i32
    %0 = arith.muli %arg2, %c16_i32 : i32
    %c0 = arith.constant 0 : index
    %c0_0 = arith.constant 0 : index
    %1 = vector.load %arg5[%c0, %c0_0] : memref<1x8xf32, #tpu.memory_space<vmem>>, vector<1x8xf32>
    %2 = vector.shape_cast %1 : vector<1x8xf32> to vector<8xf32>
    %3 = vector.shape_cast %2 : vector<8xf32> to vector<1x8xf32>
    %c0_i32 = arith.constant 0 : i32
    %4 = arith.addi %0, %c0_i32 : i32
    %c0_1 = arith.constant 0 : index
    %5 = arith.index_cast %4 : i32 to index
    %c0_2 = arith.constant 0 : index
    %c0_3 = arith.constant 0 : index
    %6 = vector.load %arg3[%c0_1, %5, %c0_2, %c0_3] : memref<1x18x18x4xbf16, #tpu.memory_space<vmem>>, vector<1x16x18x4xbf16>
    %7 = vector.shape_cast %6 : vector<1x16x18x4xbf16> to vector<16x18x4xbf16>
    %c1_i32 = arith.constant 1 : i32
    %8 = arith.addi %0, %c1_i32 : i32
    %c0_4 = arith.constant 0 : index
    %9 = arith.index_cast %8 : i32 to index
    %c0_5 = arith.constant 0 : index
    %c0_6 = arith.constant 0 : index
    %10 = vector.load %arg3[%c0_4, %9, %c0_5, %c0_6] : memref<1x18x18x4xbf16, #tpu.memory_space<vmem>>, vector<1x16x18x4xbf16>
    %11 = vector.shape_cast %10 : vector<1x16x18x4xbf16> to vector<16x18x4xbf16>
    %c2_i32 = arith.constant 2 : i32
    %12 = arith.addi %0, %c2_i32 : i32
    %c0_7 = arith.constant 0 : index
    %13 = arith.index_cast %12 : i32 to index
    %c0_8 = arith.constant 0 : index
    %c0_9 = arith.constant 0 : index
    %14 = vector.load %arg3[%c0_7, %13, %c0_8, %c0_9] : memref<1x18x18x4xbf16, #tpu.memory_space<vmem>>, vector<1x16x18x4xbf16>
    %15 = vector.shape_cast %14 : vector<1x16x18x4xbf16> to vector<16x18x4xbf16>
    %16 = vector.extract_strided_slice %7 {offsets = [0, 0, 0], sizes = [16, 16, 4], strides = [1, 1, 1]} : vector<16x18x4xbf16> to vector<16x16x4xbf16>
    %17 = vector.shape_cast %16 : vector<16x16x4xbf16> to vector<256x4xbf16>
    %18 = vector.extract_strided_slice %7 {offsets = [0, 1, 0], sizes = [16, 16, 4], strides = [1, 1, 1]} : vector<16x18x4xbf16> to vector<16x16x4xbf16>
    %19 = vector.shape_cast %18 : vector<16x16x4xbf16> to vector<256x4xbf16>
    %20 = vector.extract_strided_slice %7 {offsets = [0, 2, 0], sizes = [16, 16, 4], strides = [1, 1, 1]} : vector<16x18x4xbf16> to vector<16x16x4xbf16>
    %21 = vector.shape_cast %20 : vector<16x16x4xbf16> to vector<256x4xbf16>
    %22 = vector.extract_strided_slice %11 {offsets = [0, 0, 0], sizes = [16, 16, 4], strides = [1, 1, 1]} : vector<16x18x4xbf16> to vector<16x16x4xbf16>
    %23 = vector.shape_cast %22 : vector<16x16x4xbf16> to vector<256x4xbf16>
    %24 = vector.extract_strided_slice %11 {offsets = [0, 1, 0], sizes = [16, 16, 4], strides = [1, 1, 1]} : vector<16x18x4xbf16> to vector<16x16x4xbf16>
    %25 = vector.shape_cast %24 : vector<16x16x4xbf16> to vector<256x4xbf16>
    %26 = vector.extract_strided_slice %11 {offsets = [0, 2, 0], sizes = [16, 16, 4], strides = [1, 1, 1]} : vector<16x18x4xbf16> to vector<16x16x4xbf16>
    %27 = vector.shape_cast %26 : vector<16x16x4xbf16> to vector<256x4xbf16>
    %28 = vector.extract_strided_slice %15 {offsets = [0, 0, 0], sizes = [16, 16, 4], strides = [1, 1, 1]} : vector<16x18x4xbf16> to vector<16x16x4xbf16>
    %29 = vector.shape_cast %28 : vector<16x16x4xbf16> to vector<256x4xbf16>
    %30 = vector.extract_strided_slice %15 {offsets = [0, 1, 0], sizes = [16, 16, 4], strides = [1, 1, 1]} : vector<16x18x4xbf16> to vector<16x16x4xbf16>
    %31 = vector.shape_cast %30 : vector<16x16x4xbf16> to vector<256x4xbf16>
    %32 = vector.extract_strided_slice %15 {offsets = [0, 2, 0], sizes = [16, 16, 4], strides = [1, 1, 1]} : vector<16x18x4xbf16> to vector<16x16x4xbf16>
    %33 = vector.shape_cast %32 : vector<16x16x4xbf16> to vector<256x4xbf16>
    %c0_10 = arith.constant 0 : index
    %c0_11 = arith.constant 0 : index
    %c0_12 = arith.constant 0 : index
    %c0_13 = arith.constant 0 : index
    %c0_14 = arith.constant 0 : index
    %34 = vector.load %arg4[%c0_10, %c0_11, %c0_12, %c0_13, %c0_14] : memref<2x2x3x4x8xbf16, #tpu.memory_space<vmem>>, vector<1x1x1x4x8xbf16>
    %35 = vector.shape_cast %34 : vector<1x1x1x4x8xbf16> to vector<4x8xbf16>
    %cst = arith.constant dense<0.000000e+00> : vector<256x8xf32>
    %36 = tpu.matmul %17, %35, %cst {dimension_numbers = #tpu.dot_dimension_numbers<[1], [0], [0], [1], [0, 0, 1, 1], [], []>} : vector<256x4xbf16>, vector<4x8xbf16>, vector<256x8xf32> -> vector<256x8xf32>
    %c0_15 = arith.constant 0 : index
    %c0_16 = arith.constant 0 : index
    %c1 = arith.constant 1 : index
    %c0_17 = arith.constant 0 : index
    %c0_18 = arith.constant 0 : index
    %37 = vector.load %arg4[%c0_15, %c0_16, %c1, %c0_17, %c0_18] : memref<2x2x3x4x8xbf16, #tpu.memory_space<vmem>>, vector<1x1x1x4x8xbf16>
    %38 = vector.shape_cast %37 : vector<1x1x1x4x8xbf16> to vector<4x8xbf16>
    %cst_19 = arith.constant dense<0.000000e+00> : vector<256x8xf32>
    %39 = tpu.matmul %19, %38, %cst_19 {dimension_numbers = #tpu.dot_dimension_numbers<[1], [0], [0], [1], [0, 0, 1, 1], [], []>} : vector<256x4xbf16>, vector<4x8xbf16>, vector<256x8xf32> -> vector<256x8xf32>
    %40 = arith.addf %36, %39 : vector<256x8xf32>
    %c0_20 = arith.constant 0 : index
    %c0_21 = arith.constant 0 : index
    %c2 = arith.constant 2 : index
    %c0_22 = arith.constant 0 : index
    %c0_23 = arith.constant 0 : index
    %41 = vector.load %arg4[%c0_20, %c0_21, %c2, %c0_22, %c0_23] : memref<2x2x3x4x8xbf16, #tpu.memory_space<vmem>>, vector<1x1x1x4x8xbf16>
    %42 = vector.shape_cast %41 : vector<1x1x1x4x8xbf16> to vector<4x8xbf16>
    %cst_24 = arith.constant dense<0.000000e+00> : vector<256x8xf32>
    %43 = tpu.matmul %21, %42, %cst_24 {dimension_numbers = #tpu.dot_dimension_numbers<[1], [0], [0], [1], [0, 0, 1, 1], [], []>} : vector<256x4xbf16>, vector<4x8xbf16>, vector<256x8xf32> -> vector<256x8xf32>
    %44 = arith.addf %40, %43 : vector<256x8xf32>
    %c0_25 = arith.constant 0 : index
    %c1_26 = arith.constant 1 : index
    %c0_27 = arith.constant 0 : index
    %c0_28 = arith.constant 0 : index
    %c0_29 = arith.constant 0 : index
    %45 = vector.load %arg4[%c0_25, %c1_26, %c0_27, %c0_28, %c0_29] : memref<2x2x3x4x8xbf16, #tpu.memory_space<vmem>>, vector<1x1x1x4x8xbf16>
    %46 = vector.shape_cast %45 : vector<1x1x1x4x8xbf16> to vector<4x8xbf16>
    %cst_30 = arith.constant dense<0.000000e+00> : vector<256x8xf32>
    %47 = tpu.matmul %23, %46, %cst_30 {dimension_numbers = #tpu.dot_dimension_numbers<[1], [0], [0], [1], [0, 0, 1, 1], [], []>} : vector<256x4xbf16>, vector<4x8xbf16>, vector<256x8xf32> -> vector<256x8xf32>
    %48 = arith.addf %44, %47 : vector<256x8xf32>
    %c0_31 = arith.constant 0 : index
    %c1_32 = arith.constant 1 : index
    %c1_33 = arith.constant 1 : index
    %c0_34 = arith.constant 0 : index
    %c0_35 = arith.constant 0 : index
    %49 = vector.load %arg4[%c0_31, %c1_32, %c1_33, %c0_34, %c0_35] : memref<2x2x3x4x8xbf16, #tpu.memory_space<vmem>>, vector<1x1x1x4x8xbf16>
    %50 = vector.shape_cast %49 : vector<1x1x1x4x8xbf16> to vector<4x8xbf16>
    %cst_36 = arith.constant dense<0.000000e+00> : vector<256x8xf32>
    %51 = tpu.matmul %25, %50, %cst_36 {dimension_numbers = #tpu.dot_dimension_numbers<[1], [0], [0], [1], [0, 0, 1, 1], [], []>} : vector<256x4xbf16>, vector<4x8xbf16>, vector<256x8xf32> -> vector<256x8xf32>
    %52 = arith.addf %48, %51 : vector<256x8xf32>
    %c0_37 = arith.constant 0 : index
    %c1_38 = arith.constant 1 : index
    %c2_39 = arith.constant 2 : index
    %c0_40 = arith.constant 0 : index
    %c0_41 = arith.constant 0 : index
    %53 = vector.load %arg4[%c0_37, %c1_38, %c2_39, %c0_40, %c0_41] : memref<2x2x3x4x8xbf16, #tpu.memory_space<vmem>>, vector<1x1x1x4x8xbf16>
    %54 = vector.shape_cast %53 : vector<1x1x1x4x8xbf16> to vector<4x8xbf16>
    %cst_42 = arith.constant dense<0.000000e+00> : vector<256x8xf32>
    %55 = tpu.matmul %27, %54, %cst_42 {dimension_numbers = #tpu.dot_dimension_numbers<[1], [0], [0], [1], [0, 0, 1, 1], [], []>} : vector<256x4xbf16>, vector<4x8xbf16>, vector<256x8xf32> -> vector<256x8xf32>
    %56 = arith.addf %52, %55 : vector<256x8xf32>
    %57 = vector.broadcast %3 : vector<1x8xf32> to vector<256x8xf32>
    %58 = arith.addf %56, %57 : vector<256x8xf32>
    %59 = vector.shape_cast %58 : vector<256x8xf32> to vector<16x16x8xf32>
    %c0_43 = arith.constant 0 : index
    %c0_44 = arith.constant 0 : index
    %c0_45 = arith.constant 0 : index
    %c0_46 = arith.constant 0 : index
    %c0_47 = arith.constant 0 : index
    %60 = vector.load %arg6[%c0_43, %c0_44, %c0_45, %c0_46, %c0_47] : memref<1x16x2x16x8xf32, #tpu.memory_space<vmem>>, vector<1x16x1x16x8xf32>
    %61 = vector.shape_cast %60 : vector<1x16x1x16x8xf32> to vector<16x16x8xf32>
    %62 = vector.shape_cast %59 : vector<16x16x8xf32> to vector<1x16x1x16x8xf32>
    tpu.vector_store %arg6[%c0_43, %c0_44, %c0_45, %c0_46, %c0_47], %62 {strides = array<i32>} : memref<1x16x2x16x8xf32, #tpu.memory_space<vmem>>, vector<1x16x1x16x8xf32>,
    %c1_48 = arith.constant 1 : index
    %c0_49 = arith.constant 0 : index
    %c0_50 = arith.constant 0 : index
    %c0_51 = arith.constant 0 : index
    %c0_52 = arith.constant 0 : index
    %63 = vector.load %arg4[%c1_48, %c0_49, %c0_50, %c0_51, %c0_52] : memref<2x2x3x4x8xbf16, #tpu.memory_space<vmem>>, vector<1x1x1x4x8xbf16>
    %64 = vector.shape_cast %63 : vector<1x1x1x4x8xbf16> to vector<4x8xbf16>
    %cst_53 = arith.constant dense<0.000000e+00> : vector<256x8xf32>
    %65 = tpu.matmul %23, %64, %cst_53 {dimension_numbers = #tpu.dot_dimension_numbers<[1], [0], [0], [1], [0, 0, 1, 1], [], []>} : vector<256x4xbf16>, vector<4x8xbf16>, vector<256x8xf32> -> vector<256x8xf32>
    %c1_54 = arith.constant 1 : index
    %c0_55 = arith.constant 0 : index
    %c1_56 = arith.constant 1 : index
    %c0_57 = arith.constant 0 : index
    %c0_58 = arith.constant 0 : index
    %66 = vector.load %arg4[%c1_54, %c0_55, %c1_56, %c0_57, %c0_58] : memref<2x2x3x4x8xbf16, #tpu.memory_space<vmem>>, vector<1x1x1x4x8xbf16>
    %67 = vector.shape_cast %66 : vector<1x1x1x4x8xbf16> to vector<4x8xbf16>
    %cst_59 = arith.constant dense<0.000000e+00> : vector<256x8xf32>
    %68 = tpu.matmul %25, %67, %cst_59 {dimension_numbers = #tpu.dot_dimension_numbers<[1], [0], [0], [1], [0, 0, 1, 1], [], []>} : vector<256x4xbf16>, vector<4x8xbf16>, vector<256x8xf32> -> vector<256x8xf32>
    %69 = arith.addf %65, %68 : vector<256x8xf32>
    %c1_60 = arith.constant 1 : index
    %c0_61 = arith.constant 0 : index
    %c2_62 = arith.constant 2 : index
    %c0_63 = arith.constant 0 : index
    %c0_64 = arith.constant 0 : index
    %70 = vector.load %arg4[%c1_60, %c0_61, %c2_62, %c0_63, %c0_64] : memref<2x2x3x4x8xbf16, #tpu.memory_space<vmem>>, vector<1x1x1x4x8xbf16>
    %71 = vector.shape_cast %70 : vector<1x1x1x4x8xbf16> to vector<4x8xbf16>
    %cst_65 = arith.constant dense<0.000000e+00> : vector<256x8xf32>
    %72 = tpu.matmul %27, %71, %cst_65 {dimension_numbers = #tpu.dot_dimension_numbers<[1], [0], [0], [1], [0, 0, 1, 1], [], []>} : vector<256x4xbf16>, vector<4x8xbf16>, vector<256x8xf32> -> vector<256x8xf32>
    %73 = arith.addf %69, %72 : vector<256x8xf32>
    %c1_66 = arith.constant 1 : index
    %c1_67 = arith.constant 1 : index
    %c0_68 = arith.constant 0 : index
    %c0_69 = arith.constant 0 : index
    %c0_70 = arith.constant 0 : index
    %74 = vector.load %arg4[%c1_66, %c1_67, %c0_68, %c0_69, %c0_70] : memref<2x2x3x4x8xbf16, #tpu.memory_space<vmem>>, vector<1x1x1x4x8xbf16>
    %75 = vector.shape_cast %74 : vector<1x1x1x4x8xbf16> to vector<4x8xbf16>
    %cst_71 = arith.constant dense<0.000000e+00> : vector<256x8xf32>
    %76 = tpu.matmul %29, %75, %cst_71 {dimension_numbers = #tpu.dot_dimension_numbers<[1], [0], [0], [1], [0, 0, 1, 1], [], []>} : vector<256x4xbf16>, vector<4x8xbf16>, vector<256x8xf32> -> vector<256x8xf32>
    %77 = arith.addf %73, %76 : vector<256x8xf32>
    %c1_72 = arith.constant 1 : index
    %c1_73 = arith.constant 1 : index
    %c1_74 = arith.constant 1 : index
    %c0_75 = arith.constant 0 : index
    %c0_76 = arith.constant 0 : index
    %78 = vector.load %arg4[%c1_72, %c1_73, %c1_74, %c0_75, %c0_76] : memref<2x2x3x4x8xbf16, #tpu.memory_space<vmem>>, vector<1x1x1x4x8xbf16>
    %79 = vector.shape_cast %78 : vector<1x1x1x4x8xbf16> to vector<4x8xbf16>
    %cst_77 = arith.constant dense<0.000000e+00> : vector<256x8xf32>
    %80 = tpu.matmul %31, %79, %cst_77 {dimension_numbers = #tpu.dot_dimension_numbers<[1], [0], [0], [1], [0, 0, 1, 1], [], []>} : vector<256x4xbf16>, vector<4x8xbf16>, vector<256x8xf32> -> vector<256x8xf32>
    %81 = arith.addf %77, %80 : vector<256x8xf32>
    %c1_78 = arith.constant 1 : index
    %c1_79 = arith.constant 1 : index
    %c2_80 = arith.constant 2 : index
    %c0_81 = arith.constant 0 : index
    %c0_82 = arith.constant 0 : index
    %82 = vector.load %arg4[%c1_78, %c1_79, %c2_80, %c0_81, %c0_82] : memref<2x2x3x4x8xbf16, #tpu.memory_space<vmem>>, vector<1x1x1x4x8xbf16>
    %83 = vector.shape_cast %82 : vector<1x1x1x4x8xbf16> to vector<4x8xbf16>
    %cst_83 = arith.constant dense<0.000000e+00> : vector<256x8xf32>
    %84 = tpu.matmul %33, %83, %cst_83 {dimension_numbers = #tpu.dot_dimension_numbers<[1], [0], [0], [1], [0, 0, 1, 1], [], []>} : vector<256x4xbf16>, vector<4x8xbf16>, vector<256x8xf32> -> vector<256x8xf32>
    %85 = arith.addf %81, %84 : vector<256x8xf32>
    %86 = vector.broadcast %3 : vector<1x8xf32> to vector<256x8xf32>
    %87 = arith.addf %85, %86 : vector<256x8xf32>
    %88 = vector.shape_cast %87 : vector<256x8xf32> to vector<16x16x8xf32>
    %c0_84 = arith.constant 0 : index
    %c0_85 = arith.constant 0 : index
    %c1_86 = arith.constant 1 : index
    %c0_87 = arith.constant 0 : index
    %c0_88 = arith.constant 0 : index
    %89 = vector.load %arg6[%c0_84, %c0_85, %c1_86, %c0_87, %c0_88] : memref<1x16x2x16x8xf32, #tpu.memory_space<vmem>>, vector<1x16x1x16x8xf32>
    %90 = vector.shape_cast %89 : vector<1x16x1x16x8xf32> to vector<16x16x8xf32>
    %91 = vector.shape_cast %88 : vector<16x16x8xf32> to vector<1x16x1x16x8xf32>
    tpu.vector_store %arg6[%c0_84, %c0_85, %c1_86, %c0_87, %c0_88], %91 {strides = array<i32>} : memref<1x16x2x16x8xf32, #tpu.memory_space<vmem>>, vector<1x16x1x16x8xf32>,
    return
  }
  func.func @transform_0(%arg0: i32, %arg1: i32, %arg2: i32) -> (i32, i32, i32, i32) {
    %c0_i32 = arith.constant 0 : i32
    %c0_i32_0 = arith.constant 0 : i32
    %c0_i32_1 = arith.constant 0 : i32
    %c0_i32_2 = arith.constant 0 : i32
    return %arg0, %c0_i32, %c0_i32_0, %c0_i32_1 : i32, i32, i32, i32
  }
  func.func @transform_1(%arg0: i32, %arg1: i32, %arg2: i32) -> (i32, i32, i32, i32, i32) {
    %c0_i32 = arith.constant 0 : i32
    %c0_i32_0 = arith.constant 0 : i32
    %c0_i32_1 = arith.constant 0 : i32
    %c0_i32_2 = arith.constant 0 : i32
    %c0_i32_3 = arith.constant 0 : i32
    return %c0_i32, %c0_i32_0, %c0_i32_1, %c0_i32_2, %arg1 : i32, i32, i32, i32, i32
  }
  func.func @transform_2(%arg0: i32, %arg1: i32, %arg2: i32) -> (i32, i32) {
    %c0_i32 = arith.constant 0 : i32
    %c0_i32_0 = arith.constant 0 : i32
    return %c0_i32, %arg1 : i32, i32
  }
  func.func @transform_3(%arg0: i32, %arg1: i32, %arg2: i32) -> (i32, i32, i32, i32, i32) {
    %c0_i32 = arith.constant 0 : i32
    %c0_i32_0 = arith.constant 0 : i32
    %c0_i32_1 = arith.constant 0 : i32
    return %arg0, %arg2, %c0_i32, %c0_i32_0, %arg1 : i32, i32, i32, i32, i32
  }
}

</mosaic_0001>

<llo_original>
// kernel: upsample_forward.1
$region0: #{upsample_forward.1}
  #allocation0 [shape = 'u32[]', space=smem, size = 0x4, offset = 0x4, fixed_abs, tag = 'smem constant byte address 0x4 - core index']
  #allocation1 [shape = 'u32[144,128]{1,0:T(1,128)}', space=vmem, size = 0x12000, scoped, tag = 'internal scratch']
  %s0 = inlined_call_operand.vmem [shape: bf16[2,18,18,4], index: 0, kind: input, shape index: {}]
  %s1 = inlined_call_operand.vmem [shape: bf16[2,2,3,4,8], index: 1, kind: input, shape index: {}]
  %s2 = inlined_call_operand.vmem [shape: f32[1,8], index: 2, kind: input, shape index: {}]
  %s3 = inlined_call_operand.vmem [shape: f32[2,16,2,16,8], index: 3, kind: output, shape index: {}]
  %s4 = sld [smem:[#allocation0]]
  $region45: #{upsample_forward.1} parent=0
    _
  %s6 = ssub.s32 1, %s4
  %s7 = scalar_select 0, %s6, %s4
  loop: start=0, step=1, limit=4
  $region2: #{upsample_forward.1} parent=0 // loop_pre_header
    _
  $region3: #{upsample_forward.1} parent=0 // loop_header
    %s9 = sphi 0, %s13
    %p10 = scmp.ge.s32.totalorder %s9, 4
    %s16 = sphi 0, %s35
    %s17 = sphi 0, %s31
    %s18 = sphi 0, %s27
    %s19 = sphi 0, %s16
    %s20 = sphi 0, %s17
    %s21 = sphi 0, %s18
    %s22 = sphi 0, %s19
    %s23 = sphi 0, %s20
    %s24 = sphi 0, %s21
    %s38 = sphi 0, %s40
    %s41 = sphi 0, %s38
    %s42 = sphi 0, %s41
    %s58 = sphi 0, %s42
    %s64 = sphi 0, %s66
    %s67 = sphi 0, %s64
    %s68 = sphi 0, %s67
    %s84 = sphi 0, %s68
    %s90 = sphi 0, %s92
    %s93 = sphi 0, %s90
    %s94 = sphi 0, %s93
    %s110 = sphi 0, %s94
    %s120 = sphi 0, %s122
    %s123 = sphi 0, %s120
    %s124 = sphi 0, %s123
    %s140 = sphi 0, %s124
  $region4: #{upsample_forward.1} parent=0 // loop_header_branch
    %12 = sbr.rel (%p10) target = $region8
  $region5: #{upsample_forward.1} parent=0 // loop_body
    %s14 = ssub.s32 %s9, 1
    %s15 = ssub.s32 %s9, 2
    %s25 = sadd.s32 1, %s18
    %p26 = scmp.ge.s32.totalorder %s25, 1
    %s27 = scalar_select %p26, 0, %s25
    %s28 = sadd.s32 1, %s17
    %s29 = scalar_select %p26, %s28, %s17
    %p30 = scmp.ge.s32.totalorder %s29, 1
    %s31 = scalar_select %p30, 0, %s29
    %s32 = sadd.s32 1, %s16
    %s33 = scalar_select %p30, %s32, %s16
    %p34 = scmp.ge.s32.totalorder %s33, 2
    %s35 = scalar_select %p34, 0, %s33
    %s36 = ssub.s32 %s16, %s35
    %p37 = scmp.eq.s32.totalorder %s36, 0
    %s39 = sadd.s32 %s38, 1
    %s40 = scalar_select %p37, %s38, %s39
    %p43 = pneg %p37
    %p44 = scmp.eq.s32.totalorder %s9, 1
    %p45 = por %p43, %p44
    %p46 = scmp.ne.s32.totalorder %s38, %s41
    %p47 = scmp.eq.s32.totalorder %s9, 0
    %p48 = por %p46, %p47
    %p49 = scmp.ne.s32.totalorder %s38, %s41
    %p50 = scmp.eq.s32.totalorder %s14, 1
    %p51 = por %p49, %p50
    %p52 = scmp.ne.s32.totalorder %s41, %s42
    %p53 = scmp.eq.s32.totalorder %s14, 0
    %p54 = por %p52, %p53
    %p55 = scmp.ne.s32.totalorder %s41, %s42
    %p56 = scmp.eq.s32.totalorder %s15, 1
    %p57 = por %p55, %p56
    %p59 = scmp.ne.s32.totalorder %s42, %s58
    %p60 = scmp.eq.s32.totalorder %s15, 0
    %p61 = por %p59, %p60
    %s62 = ssub.s32 %s17, %s31
    %p63 = scmp.eq.s32.totalorder %s62, 0
    %s65 = sadd.s32 %s64, 1
    %s66 = scalar_select %p63, %s64, %s65
    %p69 = pneg %p63
    %p70 = scmp.eq.s32.totalorder %s9, 1
    %p71 = por %p69, %p70
    %p72 = scmp.ne.s32.totalorder %s64, %s67
    %p73 = scmp.eq.s32.totalorder %s9, 0
    %p74 = por %p72, %p73
    %p75 = scmp.ne.s32.totalorder %s64, %s67
    %p76 = scmp.eq.s32.totalorder %s14, 1
    %p77 = por %p75, %p76
    %p78 = scmp.ne.s32.totalorder %s67, %s68
    %p79 = scmp.eq.s32.totalorder %s14, 0
    %p80 = por %p78, %p79
    %p81 = scmp.ne.s32.totalorder %s67, %s68
    %p82 = scmp.eq.s32.totalorder %s15, 1
    %p83 = por %p81, %p82
    %p85 = scmp.ne.s32.totalorder %s68, %s84
    %p86 = scmp.eq.s32.totalorder %s15, 0
    %p87 = por %p85, %p86
    %s88 = ssub.s32 %s17, %s31
    %p89 = scmp.eq.s32.totalorder %s88, 0
    %s91 = sadd.s32 %s90, 1
    %s92 = scalar_select %p89, %s90, %s91
    %p95 = pneg %p89
    %p96 = scmp.eq.s32.totalorder %s9, 1
    %p97 = por %p95, %p96
    %p98 = scmp.ne.s32.totalorder %s90, %s93
    %p99 = scmp.eq.s32.totalorder %s9, 0
    %p100 = por %p98, %p99
    %p101 = scmp.ne.s32.totalorder %s90, %s93
    %p102 = scmp.eq.s32.totalorder %s14, 1
    %p103 = por %p101, %p102
    %p104 = scmp.ne.s32.totalorder %s93, %s94
    %p105 = scmp.eq.s32.totalorder %s14, 0
    %p106 = por %p104, %p105
    %p107 = scmp.ne.s32.totalorder %s93, %s94
    %p108 = scmp.eq.s32.totalorder %s15, 1
    %p109 = por %p107, %p108
    %p111 = scmp.ne.s32.totalorder %s94, %s110
    %p112 = scmp.eq.s32.totalorder %s15, 0
    %p113 = por %p111, %p112
    %s114 = ssub.s32 %s16, %s35
    %s115 = ssub.s32 %s18, %s27
    %s116 = sor.u32 %s114, %s115
    %s117 = ssub.s32 %s17, %s31
    %s118 = sor.u32 %s116, %s117
    %p119 = scmp.eq.s32.totalorder %s118, 0
    %s121 = sadd.s32 %s120, 1
    %s122 = scalar_select %p119, %s120, %s121
    %p125 = pneg %p119
    %p126 = scmp.eq.s32.totalorder %s9, 1
    %p127 = por %p125, %p126
    %p128 = scmp.ne.s32.totalorder %s120, %s123
    %p129 = scmp.eq.s32.totalorder %s9, 0
    %p130 = por %p128, %p129
    %p131 = scmp.ne.s32.totalorder %s120, %s123
    %p132 = scmp.eq.s32.totalorder %s14, 1
    %p133 = por %p131, %p132
    %p134 = scmp.ne.s32.totalorder %s123, %s124
    %p135 = scmp.eq.s32.totalorder %s14, 0
    %p136 = por %p134, %p135
    %p137 = scmp.ne.s32.totalorder %s123, %s124
    %p138 = scmp.eq.s32.totalorder %s15, 1
    %p139 = por %p137, %p138
    %p141 = scmp.ne.s32.totalorder %s124, %s140
    %p142 = scmp.eq.s32.totalorder %s15, 0
    %p143 = por %p141, %p142
    %p144 = scmp.le.s32.totalorder 1, %s9
    %p145 = scmp.lt.s32.totalorder %s9, 3
    %p146 = pnand %p144, %p145
    %p147 = pneg %p146
    // Predicated region
    $region9: #{upsample_forward.1} parent=5 // pred_check
      _
    $region10: #{upsample_forward.1} parent=5 // pred_check_branch
      %149 = sbr.rel (%p146) target = $region12
    $region11: #{upsample_forward.1} parent=5 // pred_region
      %s150 = ssub.s32 %s9, 1
      // Predicated region
      $region13: #{upsample_forward.1} parent=11 // pred_check
        %p151 = pneg %p80
      $region14: #{upsample_forward.1} parent=11 // pred_check_branch
        %153 = sbr.rel (%p151) target = $region16
      $region15: #{upsample_forward.1} parent=11 // pred_region
        %p154 = scmp.lt.s32.totalorder %s20, 0
        %s155 = scalar_select %p154, %s20, 0
        %s156 = smul.addr %s155, 2
        %s157 = scalar_lea.vmem %s1, %s156
      $region16: #{upsample_forward.1} parent=11 // pred_fallthru
        _
      // Predicated region
      $region17: #{upsample_forward.1} parent=11 // pred_check
        %p158 = pneg %p106
      $region18: #{upsample_forward.1} parent=11 // pred_check_branch
        %160 = sbr.rel (%p158) target = $region20
      $region19: #{upsample_forward.1} parent=11 // pred_region
        %p161 = scmp.lt.s32.totalorder %s20, 0
        %s162 = scalar_select %p161, %s20, 0
        %s163 = scalar_lea.vmem %s2, %s162
      $region20: #{upsample_forward.1} parent=11 // pred_fallthru
        _
    $region12: #{upsample_forward.1} parent=5 // pred_fallthru
      _
    %p164 = scmp.lt.s32.totalorder %s9, 2
    // Predicated region
    $region21: #{upsample_forward.1} parent=5 // pred_check
      %p165 = pneg %p164
    $region22: #{upsample_forward.1} parent=5 // pred_check_branch
      %167 = sbr.rel (%p165) target = $region24
    $region23: #{upsample_forward.1} parent=5 // pred_region
      // Predicated region
      $region25: #{upsample_forward.1} parent=23 // pred_check
        %p168 = pneg %p48
      $region26: #{upsample_forward.1} parent=23 // pred_check_branch
        %170 = sbr.rel (%p168) target = $region28
      $region27: #{upsample_forward.1} parent=23 // pred_region
        %p171 = scmp.lt.s32.totalorder %s16, 1
        %s172 = scalar_select %p171, %s16, 1
        %s173 = smul.addr %s172, 54
        %s174 = smul.addr %s173, 4
        %s175 = scalar_lea.vmem %s0, %s174
      $region28: #{upsample_forward.1} parent=23 // pred_fallthru
        _
    $region24: #{upsample_forward.1} parent=5 // pred_fallthru
      _
    %p176 = scmp.le.s32.totalorder 1, %s9
    %p177 = scmp.lt.s32.totalorder %s9, 3
    %p178 = pnand %p176, %p177
    %p179 = pneg %p178
    // Predicated region
    $region29: #{upsample_forward.1} parent=5 // pred_check
      _
    $region30: #{upsample_forward.1} parent=5 // pred_check_branch
      %181 = sbr.rel (%p178) target = $region32
    $region31: #{upsample_forward.1} parent=5 // pred_region
      %s182 = ssub.s32 %s9, 1
      %p183 = scmp.lt.s32.totalorder %s19, 1
      %s184 = scalar_select %p183, %s19, 1
      %s185 = smul.addr %s184, 54
      %s186 = smul.addr %s185, 4
      %s187 = scalar_lea.vmem %s0, %s186
      %p188 = pneg %p54
      %p189 = pneg %p51
      %p190 = scmp.lt.s32.totalorder %s20, 0
      %s191 = scalar_select %p190, %s20, 0
      %s192 = smul.addr %s191, 2
      %s193 = scalar_lea.vmem %s1, %s192
      %p194 = pneg %p80
      %p195 = pneg %p77
      %p196 = scmp.lt.s32.totalorder %s20, 0
      %s197 = scalar_select %p196, %s20, 0
      %s198 = scalar_lea.vmem %s2, %s197
      %p199 = pneg %p106
      %p200 = pneg %p103
      %p201 = pneg %p136
      %p202 = pneg %p133
      %s203 = smul.u32 16, %s21
      %p204 = scmp.lt.s32.totalorder %s19, 1
      %s205 = scalar_select %p204, %s19, 1
      %p206 = scmp.lt.s32.totalorder %s203, 15
      %s207 = scalar_select %p206, %s203, 15
      %p208 = scmp.lt.s32.totalorder %s20, 0
      %s209 = scalar_select %p208, %s20, 0
      %s210 = smul.addr %s207, 4
      %s211 = sadd.s32 %s209, %s210
      %s212 = smul.addr %s205, 64
      %s213 = sadd.s32 %s211, %s212
      %s214 = smul.addr %s213, 8
      %s215 = scalar_lea.vmem %s3, %s214
      %p216 = scmp.lt.s32.totalorder %s19, 1
      %s217 = scalar_select %p216, %s19, 1
      %s218 = smul.addr %s217, 54
      %s219 = smul.addr %s218, 4
      %s220 = scalar_lea.vmem %s0, %s219
      %p221 = scmp.lt.s32.totalorder %s20, 0
      %s222 = scalar_select %p221, %s20, 0
      %s223 = smul.addr %s222, 2
      %s224 = scalar_lea.vmem %s1, %s223
      %p225 = scmp.lt.s32.totalorder %s20, 0
      %s226 = scalar_select %p225, %s20, 0
      %s227 = scalar_lea.vmem %s2, %s226
      %s228 = smul.u32 16, %s21
      %p229 = scmp.lt.s32.totalorder %s19, 1
      %s230 = scalar_select %p229, %s19, 1
      %p231 = scmp.lt.s32.totalorder %s228, 15
      %s232 = scalar_select %p231, %s228, 15
      %p233 = scmp.lt.s32.totalorder %s20, 0
      %s234 = scalar_select %p233, %s20, 0
      %s235 = smul.addr %s232, 4
      %s236 = sadd.s32 %s234, %s235
      %s237 = smul.addr %s230, 64
      %s238 = sadd.s32 %s236, %s237
      %s239 = smul.addr %s238, 8
      %s240 = scalar_lea.vmem %s3, %s239
      %s241 = smul.u32 16, %s21
      %s243 = smul.u32 %s21, 16
      %v244 = vld [vmem:[%s227] sm:$0x1]
      %s245 = smul.u32 %s243, 3
      %s246 = smul.addr %s245, 4
      %s247 = scalar_lea.vmem %s220, %s246
      %v248 = vld [vmem:[%s247] sm:$0xf]
      %v249 = vld [vmem:[%s247 + $0x4] sm:$0xf]
      %v250 = vld [vmem:[%s247 + $0x8] sm:$0x1]
      %v251 = vld [vmem:[%s247 + $0xc] sm:$0xf]
      %v252 = vld [vmem:[%s247 + $0x10] sm:$0xf]
      %v253 = vld [vmem:[%s247 + $0x14] sm:$0x1]
      %v254 = vld [vmem:[%s247 + $0x18] sm:$0xf]
      %v255 = vld [vmem:[%s247 + $0x1c] sm:$0xf]
      %v256 = vld [vmem:[%s247 + $0x20] sm:$0x1]
      %v257 = vld [vmem:[%s247 + $0x24] sm:$0xf]
      %v258 = vld [vmem:[%s247 + $0x28] sm:$0xf]
      %v259 = vld [vmem:[%s247 + $0x2c] sm:$0x1]
      %v260 = vld [vmem:[%s247 + $0x30] sm:$0xf]
      %v261 = vld [vmem:[%s247 + $0x34] sm:$0xf]
      %v262 = vld [vmem:[%s247 + $0x38] sm:$0x1]
      %v263 = vld [vmem:[%s247 + $0x3c] sm:$0xf]
      %v264 = vld [vmem:[%s247 + $0x40] sm:$0xf]
      %v265 = vld [vmem:[%s247 + $0x44] sm:$0x1]
      %v266 = vld [vmem:[%s247 + $0x48] sm:$0xf]
      %v267 = vld [vmem:[%s247 + $0x4c] sm:$0xf]
      %v268 = vld [vmem:[%s247 + $0x50] sm:$0x1]
      %v269 = vld [vmem:[%s247 + $0x54] sm:$0xf]
      %v270 = vld [vmem:[%s247 + $0x58] sm:$0xf]
      %v271 = vld [vmem:[%s247 + $0x5c] sm:$0x1]
      %v272 = vld [vmem:[%s247 + $0x60] sm:$0xf]
      %v273 = vld [vmem:[%s247 + $0x64] sm:$0xf]
      %v274 = vld [vmem:[%s247 + $0x68] sm:$0x1]
      %v275 = vld [vmem:[%s247 + $0x6c] sm:$0xf]
      %v276 = vld [vmem:[%s247 + $0x70] sm:$0xf]
      %v277 = vld [vmem:[%s247 + $0x74] sm:$0x1]
      %v278 = vld [vmem:[%s247 + $0x78] sm:$0xf]
      %v279 = vld [vmem:[%s247 + $0x7c] sm:$0xf]
      %v280 = vld [vmem:[%s247 + $0x80] sm:$0x1]
      %v281 = vld [vmem:[%s247 + $0x84] sm:$0xf]
      %v282 = vld [vmem:[%s247 + $0x88] sm:$0xf]
      %v283 = vld [vmem:[%s247 + $0x8c] sm:$0x1]
      %v284 = vld [vmem:[%s247 + $0x90] sm:$0xf]
      %v285 = vld [vmem:[%s247 + $0x94] sm:$0xf]
      %v286 = vld [vmem:[%s247 + $0x98] sm:$0x1]
      %v287 = vld [vmem:[%s247 + $0x9c] sm:$0xf]
      %v288 = vld [vmem:[%s247 + $0xa0] sm:$0xf]
      %v289 = vld [vmem:[%s247 + $0xa4] sm:$0x1]
      %v290 = vld [vmem:[%s247 + $0xa8] sm:$0xf]
      %v291 = vld [vmem:[%s247 + $0xac] sm:$0xf]
      %v292 = vld [vmem:[%s247 + $0xb0] sm:$0x1]
      %v293 = vld [vmem:[%s247 + $0xb4] sm:$0xf]
      %v294 = vld [vmem:[%s247 + $0xb8] sm:$0xf]
      %v295 = vld [vmem:[%s247 + $0xbc] sm:$0x1]
      %s296 = sadd.s32 %s243, 1
      %s297 = smul.u32 %s296, 3
      %s298 = smul.addr %s297, 4
      %s299 = scalar_lea.vmem %s220, %s298
      %v300 = vld [vmem:[%s299] sm:$0xf]
      %v301 = vld [vmem:[%s299 + $0x4] sm:$0xf]
      %v302 = vld [vmem:[%s299 + $0x8] sm:$0x1]
      %v303 = vld [vmem:[%s299 + $0xc] sm:$0xf]
      %v304 = vld [vmem:[%s299 + $0x10] sm:$0xf]
      %v305 = vld [vmem:[%s299 + $0x14] sm:$0x1]
      %v306 = vld [vmem:[%s299 + $0x18] sm:$0xf]
      %v307 = vld [vmem:[%s299 + $0x1c] sm:$0xf]
      %v308 = vld [vmem:[%s299 + $0x20] sm:$0x1]
      %v309 = vld [vmem:[%s299 + $0x24] sm:$0xf]
      %v310 = vld [vmem:[%s299 + $0x28] sm:$0xf]
      %v311 = vld [vmem:[%s299 + $0x2c] sm:$0x1]
      %v312 = vld [vmem:[%s299 + $0x30] sm:$0xf]
      %v313 = vld [vmem:[%s299 + $0x34] sm:$0xf]
      %v314 = vld [vmem:[%s299 + $0x38] sm:$0x1]
      %v315 = vld [vmem:[%s299 + $0x3c] sm:$0xf]
      %v316 = vld [vmem:[%s299 + $0x40] sm:$0xf]
      %v317 = vld [vmem:[%s299 + $0x44] sm:$0x1]
      %v318 = vld [vmem:[%s299 + $0x48] sm:$0xf]
      %v319 = vld [vmem:[%s299 + $0x4c] sm:$0xf]
      %v320 = vld [vmem:[%s299 + $0x50] sm:$0x1]
      %v321 = vld [vmem:[%s299 + $0x54] sm:$0xf]
      %v322 = vld [vmem:[%s299 + $0x58] sm:$0xf]
      %v323 = vld [vmem:[%s299 + $0x5c] sm:$0x1]
      %v324 = vld [vmem:[%s299 + $0x60] sm:$0xf]
      %v325 = vld [vmem:[%s299 + $0x64] sm:$0xf]
      %v326 = vld [vmem:[%s299 + $0x68] sm:$0x1]
      %v327 = vld [vmem:[%s299 + $0x6c] sm:$0xf]
      %v328 = vld [vmem:[%s299 + $0x70] sm:$0xf]
      %v329 = vld [vmem:[%s299 + $0x74] sm:$0x1]
      %v330 = vld [vmem:[%s299 + $0x78] sm:$0xf]
      %v331 = vld [vmem:[%s299 + $0x7c] sm:$0xf]
      %v332 = vld [vmem:[%s299 + $0x80] sm:$0x1]
      %v333 = vld [vmem:[%s299 + $0x84] sm:$0xf]
      %v334 = vld [vmem:[%s299 + $0x88] sm:$0xf]
      %v335 = vld [vmem:[%s299 + $0x8c] sm:$0x1]
      %v336 = vld [vmem:[%s299 + $0x90] sm:$0xf]
      %v337 = vld [vmem:[%s299 + $0x94] sm:$0xf]
      %v338 = vld [vmem:[%s299 + $0x98] sm:$0x1]
      %v339 = vld [vmem:[%s299 + $0x9c] sm:$0xf]
      %v340 = vld [vmem:[%s299 + $0xa0] sm:$0xf]
      %v341 = vld [vmem:[%s299 + $0xa4] sm:$0x1]
      %v342 = vld [vmem:[%s299 + $0xa8] sm:$0xf]
      %v343 = vld [vmem:[%s299 + $0xac] sm:$0xf]
      %v344 = vld [vmem:[%s299 + $0xb0] sm:$0x1]
      %v345 = vld [vmem:[%s299 + $0xb4] sm:$0xf]
      %v346 = vld [vmem:[%s299 + $0xb8] sm:$0xf]
      %v347 = vld [vmem:[%s299 + $0xbc] sm:$0x1]
      %s348 = sadd.s32 %s243, 2
      %s349 = smul.u32 %s348, 3
      %s350 = smul.addr %s349, 4
      %s351 = scalar_lea.vmem %s220, %s350
      %v352 = vld [vmem:[%s351] sm:$0xf]
      %v353 = vld [vmem:[%s351 + $0x4] sm:$0xf]
      %v354 = vld [vmem:[%s351 + $0x8] sm:$0x1]
      %v355 = vld [vmem:[%s351 + $0xc] sm:$0xf]
      %v356 = vld [vmem:[%s351 + $0x10] sm:$0xf]
      %v357 = vld [vmem:[%s351 + $0x14] sm:$0x1]
      %v358 = vld [vmem:[%s351 + $0x18] sm:$0xf]
      %v359 = vld [vmem:[%s351 + $0x1c] sm:$0xf]
      %v360 = vld [vmem:[%s351 + $0x20] sm:$0x1]
      %v361 = vld [vmem:[%s351 + $0x24] sm:$0xf]
      %v362 = vld [vmem:[%s351 + $0x28] sm:$0xf]
      %v363 = vld [vmem:[%s351 + $0x2c] sm:$0x1]
      %v364 = vld [vmem:[%s351 + $0x30] sm:$0xf]
      %v365 = vld [vmem:[%s351 + $0x34] sm:$0xf]
      %v366 = vld [vmem:[%s351 + $0x38] sm:$0x1]
      %v367 = vld [vmem:[%s351 + $0x3c] sm:$0xf]
      %v368 = vld [vmem:[%s351 + $0x40] sm:$0xf]
      %v369 = vld [vmem:[%s351 + $0x44] sm:$0x1]
      %v370 = vld [vmem:[%s351 + $0x48] sm:$0xf]
      %v371 = vld [vmem:[%s351 + $0x4c] sm:$0xf]
      %v372 = vld [vmem:[%s351 + $0x50] sm:$0x1]
      %v373 = vld [vmem:[%s351 + $0x54] sm:$0xf]
      %v374 = vld [vmem:[%s351 + $0x58] sm:$0xf]
      %v375 = vld [vmem:[%s351 + $0x5c] sm:$0x1]
      %v376 = vld [vmem:[%s351 + $0x60] sm:$0xf]
      %v377 = vld [vmem:[%s351 + $0x64] sm:$0xf]
      %v378 = vld [vmem:[%s351 + $0x68] sm:$0x1]
      %v379 = vld [vmem:[%s351 + $0x6c] sm:$0xf]
      %v380 = vld [vmem:[%s351 + $0x70] sm:$0xf]
      %v381 = vld [vmem:[%s351 + $0x74] sm:$0x1]
      %v382 = vld [vmem:[%s351 + $0x78] sm:$0xf]
      %v383 = vld [vmem:[%s351 + $0x7c] sm:$0xf]
      %v384 = vld [vmem:[%s351 + $0x80] sm:$0x1]
      %v385 = vld [vmem:[%s351 + $0x84] sm:$0xf]
      %v386 = vld [vmem:[%s351 + $0x88] sm:$0xf]
      %v387 = vld [vmem:[%s351 + $0x8c] sm:$0x1]
      %v388 = vld [vmem:[%s351 + $0x90] sm:$0xf]
      %v389 = vld [vmem:[%s351 + $0x94] sm:$0xf]
      %v390 = vld [vmem:[%s351 + $0x98] sm:$0x1]
      %v391 = vld [vmem:[%s351 + $0x9c] sm:$0xf]
      %v392 = vld [vmem:[%s351 + $0xa0] sm:$0xf]
      %v393 = vld [vmem:[%s351 + $0xa4] sm:$0x1]
      %v394 = vld [vmem:[%s351 + $0xa8] sm:$0xf]
      %v395 = vld [vmem:[%s351 + $0xac] sm:$0xf]
      %v396 = vld [vmem:[%s351 + $0xb0] sm:$0x1]
      %v397 = vld [vmem:[%s351 + $0xb4] sm:$0xf]
      %v398 = vld [vmem:[%s351 + $0xb8] sm:$0xf]
      %v399 = vld [vmem:[%s351 + $0xbc] sm:$0x1]
      %vm400 = vsmask.f32 3328
      %vm401 = vsmask.f32 7440
      %vm402 = vmor %vm400, %vm401
      %v404 = vshrl.u32 %v248, 16
      %v406 = vrot.slane %v404, 4
      %v407 = vshll.u32 %v248, 16
      %v409 = vrot.slane %v407, 5
      %v410 = vor.u32 %v406, %v409
      %v411 = vrot.slane %v410, 4
      %v413 = vshll.u32 %v249, 16
      %v415 = vrot.slane %v413, 5
      %v416 = vsel %vm402, %v411, %v415
      %v417 = vshrl.u32 %v249, 16
      %v419 = vrot.slane %v417, 4
      %v420 = vor.u32 %v419, %v415
      %v421 = vrot.slane %v420, 4
      %v423 = vshll.u32 %v250, 16
      %v425 = vrot.slane %v423, 5
      %v426 = vsel %vm402, %v421, %v425
      %v428 = vshrl.u32 %v251, 16
      %v430 = vrot.slane %v428, 4
      %v431 = vshll.u32 %v251, 16
      %v433 = vrot.slane %v431, 5
      %v434 = vor.u32 %v430, %v433
      %v435 = vrot.slane %v434, 4
      %v437 = vshll.u32 %v252, 16
      %v439 = vrot.slane %v437, 5
      %v440 = vsel %vm402, %v435, %v439
      %v441 = vshrl.u32 %v252, 16
      %v443 = vrot.slane %v441, 4
      %v444 = vor.u32 %v443, %v439
      %v445 = vrot.slane %v444, 4
      %v447 = vshll.u32 %v253, 16
      %v449 = vrot.slane %v447, 5
      %v450 = vsel %vm402, %v445, %v449
      %v452 = vshrl.u32 %v254, 16
      %v454 = vrot.slane %v452, 4
      %v455 = vshll.u32 %v254, 16
      %v457 = vrot.slane %v455, 5
      %v458 = vor.u32 %v454, %v457
      %v459 = vrot.slane %v458, 4
      %v461 = vshll.u32 %v255, 16
      %v463 = vrot.slane %v461, 5
      %v464 = vsel %vm402, %v459, %v463
      %v465 = vshrl.u32 %v255, 16
      %v467 = vrot.slane %v465, 4
      %v468 = vor.u32 %v467, %v463
      %v469 = vrot.slane %v468, 4
      %v471 = vshll.u32 %v256, 16
      %v473 = vrot.slane %v471, 5
      %v474 = vsel %vm402, %v469, %v473
      %v476 = vshrl.u32 %v257, 16
      %v478 = vrot.slane %v476, 4
      %v479 = vshll.u32 %v257, 16
      %v481 = vrot.slane %v479, 5
      %v482 = vor.u32 %v478, %v481
      %v483 = vrot.slane %v482, 4
      %v485 = vshll.u32 %v258, 16
      %v487 = vrot.slane %v485, 5
      %v488 = vsel %vm402, %v483, %v487
      %v489 = vshrl.u32 %v258, 16
      %v491 = vrot.slane %v489, 4
      %v492 = vor.u32 %v491, %v487
      %v493 = vrot.slane %v492, 4
      %v495 = vshll.u32 %v259, 16
      %v497 = vrot.slane %v495, 5
      %v498 = vsel %vm402, %v493, %v497
      %v500 = vshrl.u32 %v260, 16
      %v502 = vrot.slane %v500, 4
      %v503 = vshll.u32 %v260, 16
      %v505 = vrot.slane %v503, 5
      %v506 = vor.u32 %v502, %v505
      %v507 = vrot.slane %v506, 4
      %v509 = vshll.u32 %v261, 16
      %v511 = vrot.slane %v509, 5
      %v512 = vsel %vm402, %v507, %v511
      %v513 = vshrl.u32 %v261, 16
      %v515 = vrot.slane %v513, 4
      %v516 = vor.u32 %v515, %v511
      %v517 = vrot.slane %v516, 4
      %v519 = vshll.u32 %v262, 16
      %v521 = vrot.slane %v519, 5
      %v522 = vsel %vm402, %v517, %v521
      %v524 = vshrl.u32 %v263, 16
      %v526 = vrot.slane %v524, 4
      %v527 = vshll.u32 %v263, 16
      %v529 = vrot.slane %v527, 5
      %v530 = vor.u32 %v526, %v529
      %v531 = vrot.slane %v530, 4
      %v533 = vshll.u32 %v264, 16
      %v535 = vrot.slane %v533, 5
      %v536 = vsel %vm402, %v531, %v535
      %v537 = vshrl.u32 %v264, 16
      %v539 = vrot.slane %v537, 4
      %v540 = vor.u32 %v539, %v535
      %v541 = vrot.slane %v540, 4
      %v543 = vshll.u32 %v265, 16
      %v545 = vrot.slane %v543, 5
      %v546 = vsel %vm402, %v541, %v545
      %v548 = vshrl.u32 %v266, 16
      %v550 = vrot.slane %v548, 4
      %v551 = vshll.u32 %v266, 16
      %v553 = vrot.slane %v551, 5
      %v554 = vor.u32 %v550, %v553
      %v555 = vrot.slane %v554, 4
      %v557 = vshll.u32 %v267, 16
      %v559 = vrot.slane %v557, 5
      %v560 = vsel %vm402, %v555, %v559
      %v561 = vshrl.u32 %v267, 16
      %v563 = vrot.slane %v561, 4
      %v564 = vor.u32 %v563, %v559
      %v565 = vrot.slane %v564, 4
      %v567 = vshll.u32 %v268, 16
      %v569 = vrot.slane %v567, 5
      %v570 = vsel %vm402, %v565, %v569
      %v572 = vshrl.u32 %v269, 16
      %v574 = vrot.slane %v572, 4
      %v575 = vshll.u32 %v269, 16
      %v577 = vrot.slane %v575, 5
      %v578 = vor.u32 %v574, %v577
      %v579 = vrot.slane %v578, 4
      %v581 = vshll.u32 %v270, 16
      %v583 = vrot.slane %v581, 5
      %v584 = vsel %vm402, %v579, %v583
      %v585 = vshrl.u32 %v270, 16
      %v587 = vrot.slane %v585, 4
      %v588 = vor.u32 %v587, %v583
      %v589 = vrot.slane %v588, 4
      %v591 = vshll.u32 %v271, 16
      %v593 = vrot.slane %v591, 5
      %v594 = vsel %vm402, %v589, %v593
      %v596 = vshrl.u32 %v272, 16
      %v598 = vrot.slane %v596, 4
      %v599 = vshll.u32 %v272, 16
      %v601 = vrot.slane %v599, 5
      %v602 = vor.u32 %v598, %v601
      %v603 = vrot.slane %v602, 4
      %v605 = vshll.u32 %v273, 16
      %v607 = vrot.slane %v605, 5
      %v608 = vsel %vm402, %v603, %v607
      %v609 = vshrl.u32 %v273, 16
      %v611 = vrot.slane %v609, 4
      %v612 = vor.u32 %v611, %v607
      %v613 = vrot.slane %v612, 4
      %v615 = vshll.u32 %v274, 16
      %v617 = vrot.slane %v615, 5
      %v618 = vsel %vm402, %v613, %v617
      %v620 = vshrl.u32 %v275, 16
      %v622 = vrot.slane %v620, 4
      %v623 = vshll.u32 %v275, 16
      %v625 = vrot.slane %v623, 5
      %v626 = vor.u32 %v622, %v625
      %v627 = vrot.slane %v626, 4
      %v629 = vshll.u32 %v276, 16
      %v631 = vrot.slane %v629, 5
      %v632 = vsel %vm402, %v627, %v631
      %v633 = vshrl.u32 %v276, 16
      %v635 = vrot.slane %v633, 4
      %v636 = vor.u32 %v635, %v631
      %v637 = vrot.slane %v636, 4
      %v639 = vshll.u32 %v277, 16
      %v641 = vrot.slane %v639, 5
      %v642 = vsel %vm402, %v637, %v641
      %v644 = vshrl.u32 %v278, 16
      %v646 = vrot.slane %v644, 4
      %v647 = vshll.u32 %v278, 16
      %v649 = vrot.slane %v647, 5
      %v650 = vor.u32 %v646, %v649
      %v651 = vrot.slane %v650, 4
      %v653 = vshll.u32 %v279, 16
      %v655 = vrot.slane %v653, 5
      %v656 = vsel %vm402, %v651, %v655
      %v657 = vshrl.u32 %v279, 16
      %v659 = vrot.slane %v657, 4
      %v660 = vor.u32 %v659, %v655
      %v661 = vrot.slane %v660, 4
      %v663 = vshll.u32 %v280, 16
      %v665 = vrot.slane %v663, 5
      %v666 = vsel %vm402, %v661, %v665
      %v668 = vshrl.u32 %v281, 16
      %v670 = vrot.slane %v668, 4
      %v671 = vshll.u32 %v281, 16
      %v673 = vrot.slane %v671, 5
      %v674 = vor.u32 %v670, %v673
      %v675 = vrot.slane %v674, 4
      %v677 = vshll.u32 %v282, 16
      %v679 = vrot.slane %v677, 5
      %v680 = vsel %vm402, %v675, %v679
      %v681 = vshrl.u32 %v282, 16
      %v683 = vrot.slane %v681, 4
      %v684 = vor.u32 %v683, %v679
      %v685 = vrot.slane %v684, 4
      %v687 = vshll.u32 %v283, 16
      %v689 = vrot.slane %v687, 5
      %v690 = vsel %vm402, %v685, %v689
      %v692 = vshrl.u32 %v284, 16
      %v694 = vrot.slane %v692, 4
      %v695 = vshll.u32 %v284, 16
      %v697 = vrot.slane %v695, 5
      %v698 = vor.u32 %v694, %v697
      %v699 = vrot.slane %v698, 4
      %v701 = vshll.u32 %v285, 16
      %v703 = vrot.slane %v701, 5
      %v704 = vsel %vm402, %v699, %v703
      %v705 = vshrl.u32 %v285, 16
      %v707 = vrot.slane %v705, 4
      %v708 = vor.u32 %v707, %v703
      %v709 = vrot.slane %v708, 4
      %v711 = vshll.u32 %v286, 16
      %v713 = vrot.slane %v711, 5
      %v714 = vsel %vm402, %v709, %v713
      %v716 = vshrl.u32 %v287, 16
      %v718 = vrot.slane %v716, 4
      %v719 = vshll.u32 %v287, 16
      %v721 = vrot.slane %v719, 5
      %v722 = vor.u32 %v718, %v721
      %v723 = vrot.slane %v722, 4
      %v725 = vshll.u32 %v288, 16
      %v727 = vrot.slane %v725, 5
      %v728 = vsel %vm402, %v723, %v727
      %v729 = vshrl.u32 %v288, 16
      %v731 = vrot.slane %v729, 4
      %v732 = vor.u32 %v731, %v727
      %v733 = vrot.slane %v732, 4
      %v735 = vshll.u32 %v289, 16
      %v737 = vrot.slane %v735, 5
      %v738 = vsel %vm402, %v733, %v737
      %v740 = vshrl.u32 %v290, 16
      %v742 = vrot.slane %v740, 4
      %v743 = vshll.u32 %v290, 16
      %v745 = vrot.slane %v743, 5
      %v746 = vor.u32 %v742, %v745
      %v747 = vrot.slane %v746, 4
      %v749 = vshll.u32 %v291, 16
      %v751 = vrot.slane %v749, 5
      %v752 = vsel %vm402, %v747, %v751
      %v753 = vshrl.u32 %v291, 16
      %v755 = vrot.slane %v753, 4
      %v756 = vor.u32 %v755, %v751
      %v757 = vrot.slane %v756, 4
      %v759 = vshll.u32 %v292, 16
      %v761 = vrot.slane %v759, 5
      %v762 = vsel %vm402, %v757, %v761
      %v764 = vshrl.u32 %v293, 16
      %v766 = vrot.slane %v764, 4
      %v767 = vshll.u32 %v293, 16
      %v769 = vrot.slane %v767, 5
      %v770 = vor.u32 %v766, %v769
      %v771 = vrot.slane %v770, 4
      %v773 = vshll.u32 %v294, 16
      %v775 = vrot.slane %v773, 5
      %v776 = vsel %vm402, %v771, %v775
      %v777 = vshrl.u32 %v294, 16
      %v779 = vrot.slane %v777, 4
      %v780 = vor.u32 %v779, %v775
      %v781 = vrot.slane %v780, 4
      %v783 = vshll.u32 %v295, 16
      %v785 = vrot.slane %v783, 5
      %v786 = vsel %vm402, %v781, %v785
      %vm835 = vcmask 1042432
      %vm836 = vcmask 1046532
      %vm837 = vmor %vm835, %vm836
      %v838 = vrot.slane %v248, 5
      %v839 = vrot.slane %v838, 4
      %v840 = vrot.slane %v249, 5
      %v841 = vsel %vm837, %v839, %v840
      %v842 = vrot.slane %v840, 4
      %v843 = vrot.slane %v250, 5
      %v844 = vsel %vm837, %v842, %v843
      %v845 = vrot.slane %v251, 5
      %v846 = vrot.slane %v845, 4
      %v847 = vrot.slane %v252, 5
      %v848 = vsel %vm837, %v846, %v847
      %v849 = vrot.slane %v847, 4
      %v850 = vrot.slane %v253, 5
      %v851 = vsel %vm837, %v849, %v850
      %v852 = vrot.slane %v254, 5
      %v853 = vrot.slane %v852, 4
      %v854 = vrot.slane %v255, 5
      %v855 = vsel %vm837, %v853, %v854
      %v856 = vrot.slane %v854, 4
      %v857 = vrot.slane %v256, 5
      %v858 = vsel %vm837, %v856, %v857
      %v859 = vrot.slane %v257, 5
      %v860 = vrot.slane %v859, 4
      %v861 = vrot.slane %v258, 5
      %v862 = vsel %vm837, %v860, %v861
      %v863 = vrot.slane %v861, 4
      %v864 = vrot.slane %v259, 5
      %v865 = vsel %vm837, %v863, %v864
      %v866 = vrot.slane %v260, 5
      %v867 = vrot.slane %v866, 4
      %v868 = vrot.slane %v261, 5
      %v869 = vsel %vm837, %v867, %v868
      %v870 = vrot.slane %v868, 4
      %v871 = vrot.slane %v262, 5
      %v872 = vsel %vm837, %v870, %v871
      %v873 = vrot.slane %v263, 5
      %v874 = vrot.slane %v873, 4
      %v875 = vrot.slane %v264, 5
      %v876 = vsel %vm837, %v874, %v875
      %v877 = vrot.slane %v875, 4
      %v878 = vrot.slane %v265, 5
      %v879 = vsel %vm837, %v877, %v878
      %v880 = vrot.slane %v266, 5
      %v881 = vrot.slane %v880, 4
      %v882 = vrot.slane %v267, 5
      %v883 = vsel %vm837, %v881, %v882
      %v884 = vrot.slane %v882, 4
      %v885 = vrot.slane %v268, 5
      %v886 = vsel %vm837, %v884, %v885
      %v887 = vrot.slane %v269, 5
      %v888 = vrot.slane %v887, 4
      %v889 = vrot.slane %v270, 5
      %v890 = vsel %vm837, %v888, %v889
      %v891 = vrot.slane %v889, 4
      %v892 = vrot.slane %v271, 5
      %v893 = vsel %vm837, %v891, %v892
      %v894 = vrot.slane %v272, 5
      %v895 = vrot.slane %v894, 4
      %v896 = vrot.slane %v273, 5
      %v897 = vsel %vm837, %v895, %v896
      %v898 = vrot.slane %v896, 4
      %v899 = vrot.slane %v274, 5
      %v900 = vsel %vm837, %v898, %v899
      %v901 = vrot.slane %v275, 5
      %v902 = vrot.slane %v901, 4
      %v903 = vrot.slane %v276, 5
      %v904 = vsel %vm837, %v902, %v903
      %v905 = vrot.slane %v903, 4
      %v906 = vrot.slane %v277, 5
      %v907 = vsel %vm837, %v905, %v906
      %v908 = vrot.slane %v278, 5
      %v909 = vrot.slane %v908, 4
      %v910 = vrot.slane %v279, 5
      %v911 = vsel %vm837, %v909, %v910
      %v912 = vrot.slane %v910, 4
      %v913 = vrot.slane %v280, 5
      %v914 = vsel %vm837, %v912, %v913
      %v915 = vrot.slane %v281, 5
      %v916 = vrot.slane %v915, 4
      %v917 = vrot.slane %v282, 5
      %v918 = vsel %vm837, %v916, %v917
      %v919 = vrot.slane %v917, 4
      %v920 = vrot.slane %v283, 5
      %v921 = vsel %vm837, %v919, %v920
      %v922 = vrot.slane %v284, 5
      %v923 = vrot.slane %v922, 4
      %v924 = vrot.slane %v285, 5
      %v925 = vsel %vm837, %v923, %v924
      %v926 = vrot.slane %v924, 4
      %v927 = vrot.slane %v286, 5
      %v928 = vsel %vm837, %v926, %v927
      %v929 = vrot.slane %v287, 5
      %v930 = vrot.slane %v929, 4
      %v931 = vrot.slane %v288, 5
      %v932 = vsel %vm837, %v930, %v931
      %v933 = vrot.slane %v931, 4
      %v934 = vrot.slane %v289, 5
      %v935 = vsel %vm837, %v933, %v934
      %v936 = vrot.slane %v290, 5
      %v937 = vrot.slane %v936, 4
      %v938 = vrot.slane %v291, 5
      %v939 = vsel %vm837, %v937, %v938
      %v940 = vrot.slane %v938, 4
      %v941 = vrot.slane %v292, 5
      %v942 = vsel %vm837, %v940, %v941
      %v943 = vrot.slane %v293, 5
      %v944 = vrot.slane %v943, 4
      %v945 = vrot.slane %v294, 5
      %v946 = vsel %vm837, %v944, %v945
      %v947 = vrot.slane %v945, 4
      %v948 = vrot.slane %v295, 5
      %v949 = vsel %vm837, %v947, %v948
      %v951 = vshrl.u32 %v300, 16
      %v953 = vrot.slane %v951, 4
      %v954 = vshll.u32 %v300, 16
      %v956 = vrot.slane %v954, 5
      %v957 = vor.u32 %v953, %v956
      %v958 = vrot.slane %v957, 4
      %v960 = vshll.u32 %v301, 16
      %v962 = vrot.slane %v960, 5
      %v963 = vsel %vm402, %v958, %v962
      %v964 = vshrl.u32 %v301, 16
      %v966 = vrot.slane %v964, 4
      %v967 = vor.u32 %v966, %v962
      %v968 = vrot.slane %v967, 4
      %v970 = vshll.u32 %v302, 16
      %v972 = vrot.slane %v970, 5
      %v973 = vsel %vm402, %v968, %v972
      %v975 = vshrl.u32 %v303, 16
      %v977 = vrot.slane %v975, 4
      %v978 = vshll.u32 %v303, 16
      %v980 = vrot.slane %v978, 5
      %v981 = vor.u32 %v977, %v980
      %v982 = vrot.slane %v981, 4
      %v984 = vshll.u32 %v304, 16
      %v986 = vrot.slane %v984, 5
      %v987 = vsel %vm402, %v982, %v986
      %v988 = vshrl.u32 %v304, 16
      %v990 = vrot.slane %v988, 4
      %v991 = vor.u32 %v990, %v986
      %v992 = vrot.slane %v991, 4
      %v994 = vshll.u32 %v305, 16
      %v996 = vrot.slane %v994, 5
      %v997 = vsel %vm402, %v992, %v996
      %v999 = vshrl.u32 %v306, 16
      %v1001 = vrot.slane %v999, 4
      %v1002 = vshll.u32 %v306, 16
      %v1004 = vrot.slane %v1002, 5
      %v1005 = vor.u32 %v1001, %v1004
      %v1006 = vrot.slane %v1005, 4
      %v1008 = vshll.u32 %v307, 16
      %v1010 = vrot.slane %v1008, 5
      %v1011 = vsel %vm402, %v1006, %v1010
      %v1012 = vshrl.u32 %v307, 16
      %v1014 = vrot.slane %v1012, 4
      %v1015 = vor.u32 %v1014, %v1010
      %v1016 = vrot.slane %v1015, 4
      %v1018 = vshll.u32 %v308, 16
      %v1020 = vrot.slane %v1018, 5
      %v1021 = vsel %vm402, %v1016, %v1020
      %v1023 = vshrl.u32 %v309, 16
      %v1025 = vrot.slane %v1023, 4
      %v1026 = vshll.u32 %v309, 16
      %v1028 = vrot.slane %v1026, 5
      %v1029 = vor.u32 %v1025, %v1028
      %v1030 = vrot.slane %v1029, 4
      %v1032 = vshll.u32 %v310, 16
      %v1034 = vrot.slane %v1032, 5
      %v1035 = vsel %vm402, %v1030, %v1034
      %v1036 = vshrl.u32 %v310, 16
      %v1038 = vrot.slane %v1036, 4
      %v1039 = vor.u32 %v1038, %v1034
      %v1040 = vrot.slane %v1039, 4
      %v1042 = vshll.u32 %v311, 16
      %v1044 = vrot.slane %v1042, 5
      %v1045 = vsel %vm402, %v1040, %v1044
      %v1047 = vshrl.u32 %v312, 16
      %v1049 = vrot.slane %v1047, 4
      %v1050 = vshll.u32 %v312, 16
      %v1052 = vrot.slane %v1050, 5
      %v1053 = vor.u32 %v1049, %v1052
      %v1054 = vrot.slane %v1053, 4
      %v1056 = vshll.u32 %v313, 16
      %v1058 = vrot.slane %v1056, 5
      %v1059 = vsel %vm402, %v1054, %v1058
      %v1060 = vshrl.u32 %v313, 16
      %v1062 = vrot.slane %v1060, 4
      %v1063 = vor.u32 %v1062, %v1058
      %v1064 = vrot.slane %v1063, 4
      %v1066 = vshll.u32 %v314, 16
      %v1068 = vrot.slane %v1066, 5
      %v1069 = vsel %vm402, %v1064, %v1068
      %v1071 = vshrl.u32 %v315, 16
      %v1073 = vrot.slane %v1071, 4
      %v1074 = vshll.u32 %v315, 16
      %v1076 = vrot.slane %v1074, 5
      %v1077 = vor.u32 %v1073, %v1076
      %v1078 = vrot.slane %v1077, 4
      %v1080 = vshll.u32 %v316, 16
      %v1082 = vrot.slane %v1080, 5
      %v1083 = vsel %vm402, %v1078, %v1082
      %v1084 = vshrl.u32 %v316, 16
      %v1086 = vrot.slane %v1084, 4
      %v1087 = vor.u32 %v1086, %v1082
      %v1088 = vrot.slane %v1087, 4
      %v1090 = vshll.u32 %v317, 16
      %v1092 = vrot.slane %v1090, 5
      %v1093 = vsel %vm402, %v1088, %v1092
      %v1095 = vshrl.u32 %v318, 16
      %v1097 = vrot.slane %v1095, 4
      %v1098 = vshll.u32 %v318, 16
      %v1100 = vrot.slane %v1098, 5
      %v1101 = vor.u32 %v1097, %v1100
      %v1102 = vrot.slane %v1101, 4
      %v1104 = vshll.u32 %v319, 16
      %v1106 = vrot.slane %v1104, 5
      %v1107 = vsel %vm402, %v1102, %v1106
      %v1108 = vshrl.u32 %v319, 16
      %v1110 = vrot.slane %v1108, 4
      %v1111 = vor.u32 %v1110, %v1106
      %v1112 = vrot.slane %v1111, 4
      %v1114 = vshll.u32 %v320, 16
      %v1116 = vrot.slane %v1114, 5
      %v1117 = vsel %vm402, %v1112, %v1116
      %v1119 = vshrl.u32 %v321, 16
      %v1121 = vrot.slane %v1119, 4
      %v1122 = vshll.u32 %v321, 16
      %v1124 = vrot.slane %v1122, 5
      %v1125 = vor.u32 %v1121, %v1124
      %v1126 = vrot.slane %v1125, 4
      %v1128 = vshll.u32 %v322, 16
      %v1130 = vrot.slane %v1128, 5
      %v1131 = vsel %vm402, %v1126, %v1130
      %v1132 = vshrl.u32 %v322, 16
      %v1134 = vrot.slane %v1132, 4
      %v1135 = vor.u32 %v1134, %v1130
      %v1136 = vrot.slane %v1135, 4
      %v1138 = vshll.u32 %v323, 16
      %v1140 = vrot.slane %v1138, 5
      %v1141 = vsel %vm402, %v1136, %v1140
      %v1143 = vshrl.u32 %v324, 16
      %v1145 = vrot.slane %v1143, 4
      %v1146 = vshll.u32 %v324, 16
      %v1148 = vrot.slane %v1146, 5
      %v1149 = vor.u32 %v1145, %v1148
      %v1150 = vrot.slane %v1149, 4
      %v1152 = vshll.u32 %v325, 16
      %v1154 = vrot.slane %v1152, 5
      %v1155 = vsel %vm402, %v1150, %v1154
      %v1156 = vshrl.u32 %v325, 16
      %v1158 = vrot.slane %v1156, 4
      %v1159 = vor.u32 %v1158, %v1154
      %v1160 = vrot.slane %v1159, 4
      %v1162 = vshll.u32 %v326, 16
      %v1164 = vrot.slane %v1162, 5
      %v1165 = vsel %vm402, %v1160, %v1164
      %v1167 = vshrl.u32 %v327, 16
      %v1169 = vrot.slane %v1167, 4
      %v1170 = vshll.u32 %v327, 16
      %v1172 = vrot.slane %v1170, 5
      %v1173 = vor.u32 %v1169, %v1172
      %v1174 = vrot.slane %v1173, 4
      %v1176 = vshll.u32 %v328, 16
      %v1178 = vrot.slane %v1176, 5
      %v1179 = vsel %vm402, %v1174, %v1178
      %v1180 = vshrl.u32 %v328, 16
      %v1182 = vrot.slane %v1180, 4
      %v1183 = vor.u32 %v1182, %v1178
      %v1184 = vrot.slane %v1183, 4
      %v1186 = vshll.u32 %v329, 16
      %v1188 = vrot.slane %v1186, 5
      %v1189 = vsel %vm402, %v1184, %v1188
      %v1191 = vshrl.u32 %v330, 16
      %v1193 = vrot.slane %v1191, 4
      %v1194 = vshll.u32 %v330, 16
      %v1196 = vrot.slane %v1194, 5
      %v1197 = vor.u32 %v1193, %v1196
      %v1198 = vrot.slane %v1197, 4
      %v1200 = vshll.u32 %v331, 16
      %v1202 = vrot.slane %v1200, 5
      %v1203 = vsel %vm402, %v1198, %v1202
      %v1204 = vshrl.u32 %v331, 16
      %v1206 = vrot.slane %v1204, 4
      %v1207 = vor.u32 %v1206, %v1202
      %v1208 = vrot.slane %v1207, 4
      %v1210 = vshll.u32 %v332, 16
      %v1212 = vrot.slane %v1210, 5
      %v1213 = vsel %vm402, %v1208, %v1212
      %v1215 = vshrl.u32 %v333, 16
      %v1217 = vrot.slane %v1215, 4
      %v1218 = vshll.u32 %v333, 16
      %v1220 = vrot.slane %v1218, 5
      %v1221 = vor.u32 %v1217, %v1220
      %v1222 = vrot.slane %v1221, 4
      %v1224 = vshll.u32 %v334, 16
      %v1226 = vrot.slane %v1224, 5
      %v1227 = vsel %vm402, %v1222, %v1226
      %v1228 = vshrl.u32 %v334, 16
      %v1230 = vrot.slane %v1228, 4
      %v1231 = vor.u32 %v1230, %v1226
      %v1232 = vrot.slane %v1231, 4
      %v1234 = vshll.u32 %v335, 16
      %v1236 = vrot.slane %v1234, 5
      %v1237 = vsel %vm402, %v1232, %v1236
      %v1239 = vshrl.u32 %v336, 16
      %v1241 = vrot.slane %v1239, 4
      %v1242 = vshll.u32 %v336, 16
      %v1244 = vrot.slane %v1242, 5
      %v1245 = vor.u32 %v1241, %v1244
      %v1246 = vrot.slane %v1245, 4
      %v1248 = vshll.u32 %v337, 16
      %v1250 = vrot.slane %v1248, 5
      %v1251 = vsel %vm402, %v1246, %v1250
      %v1252 = vshrl.u32 %v337, 16
      %v1254 = vrot.slane %v1252, 4
      %v1255 = vor.u32 %v1254, %v1250
      %v1256 = vrot.slane %v1255, 4
      %v1258 = vshll.u32 %v338, 16
      %v1260 = vrot.slane %v1258, 5
      %v1261 = vsel %vm402, %v1256, %v1260
      %v1263 = vshrl.u32 %v339, 16
      %v1265 = vrot.slane %v1263, 4
      %v1266 = vshll.u32 %v339, 16
      %v1268 = vrot.slane %v1266, 5
      %v1269 = vor.u32 %v1265, %v1268
      %v1270 = vrot.slane %v1269, 4
      %v1272 = vshll.u32 %v340, 16
      %v1274 = vrot.slane %v1272, 5
      %v1275 = vsel %vm402, %v1270, %v1274
      %v1276 = vshrl.u32 %v340, 16
      %v1278 = vrot.slane %v1276, 4
      %v1279 = vor.u32 %v1278, %v1274
      %v1280 = vrot.slane %v1279, 4
      %v1282 = vshll.u32 %v341, 16
      %v1284 = vrot.slane %v1282, 5
      %v1285 = vsel %vm402, %v1280, %v1284
      %v1287 = vshrl.u32 %v342, 16
      %v1289 = vrot.slane %v1287, 4
      %v1290 = vshll.u32 %v342, 16
      %v1292 = vrot.slane %v1290, 5
      %v1293 = vor.u32 %v1289, %v1292
      %v1294 = vrot.slane %v1293, 4
      %v1296 = vshll.u32 %v343, 16
      %v1298 = vrot.slane %v1296, 5
      %v1299 = vsel %vm402, %v1294, %v1298
      %v1300 = vshrl.u32 %v343, 16
      %v1302 = vrot.slane %v1300, 4
      %v1303 = vor.u32 %v1302, %v1298
      %v1304 = vrot.slane %v1303, 4
      %v1306 = vshll.u32 %v344, 16
      %v1308 = vrot.slane %v1306, 5
      %v1309 = vsel %vm402, %v1304, %v1308
      %v1311 = vshrl.u32 %v345, 16
      %v1313 = vrot.slane %v1311, 4
      %v1314 = vshll.u32 %v345, 16
      %v1316 = vrot.slane %v1314, 5
      %v1317 = vor.u32 %v1313, %v1316
      %v1318 = vrot.slane %v1317, 4
      %v1320 = vshll.u32 %v346, 16
      %v1322 = vrot.slane %v1320, 5
      %v1323 = vsel %vm402, %v1318, %v1322
      %v1324 = vshrl.u32 %v346, 16
      %v1326 = vrot.slane %v1324, 4
      %v1327 = vor.u32 %v1326, %v1322
      %v1328 = vrot.slane %v1327, 4
      %v1330 = vshll.u32 %v347, 16
      %v1332 = vrot.slane %v1330, 5
      %v1333 = vsel %vm402, %v1328, %v1332
      %v1382 = vrot.slane %v300, 5
      %v1383 = vrot.slane %v1382, 4
      %v1384 = vrot.slane %v301, 5
      %v1385 = vsel %vm837, %v1383, %v1384
      %v1386 = vrot.slane %v1384, 4
      %v1387 = vrot.slane %v302, 5
      %v1388 = vsel %vm837, %v1386, %v1387
      %v1389 = vrot.slane %v303, 5
      %v1390 = vrot.slane %v1389, 4
      %v1391 = vrot.slane %v304, 5
      %v1392 = vsel %vm837, %v1390, %v1391
      %v1393 = vrot.slane %v1391, 4
      %v1394 = vrot.slane %v305, 5
      %v1395 = vsel %vm837, %v1393, %v1394
      %v1396 = vrot.slane %v306, 5
      %v1397 = vrot.slane %v1396, 4
      %v1398 = vrot.slane %v307, 5
      %v1399 = vsel %vm837, %v1397, %v1398
      %v1400 = vrot.slane %v1398, 4
      %v1401 = vrot.slane %v308, 5
      %v1402 = vsel %vm837, %v1400, %v1401
      %v1403 = vrot.slane %v309, 5
      %v1404 = vrot.slane %v1403, 4
      %v1405 = vrot.slane %v310, 5
      %v1406 = vsel %vm837, %v1404, %v1405
      %v1407 = vrot.slane %v1405, 4
      %v1408 = vrot.slane %v311, 5
      %v1409 = vsel %vm837, %v1407, %v1408
      %v1410 = vrot.slane %v312, 5
      %v1411 = vrot.slane %v1410, 4
      %v1412 = vrot.slane %v313, 5
      %v1413 = vsel %vm837, %v1411, %v1412
      %v1414 = vrot.slane %v1412, 4
      %v1415 = vrot.slane %v314, 5
      %v1416 = vsel %vm837, %v1414, %v1415
      %v1417 = vrot.slane %v315, 5
      %v1418 = vrot.slane %v1417, 4
      %v1419 = vrot.slane %v316, 5
      %v1420 = vsel %vm837, %v1418, %v1419
      %v1421 = vrot.slane %v1419, 4
      %v1422 = vrot.slane %v317, 5
      %v1423 = vsel %vm837, %v1421, %v1422
      %v1424 = vrot.slane %v318, 5
      %v1425 = vrot.slane %v1424, 4
      %v1426 = vrot.slane %v319, 5
      %v1427 = vsel %vm837, %v1425, %v1426
      %v1428 = vrot.slane %v1426, 4
      %v1429 = vrot.slane %v320, 5
      %v1430 = vsel %vm837, %v1428, %v1429
      %v1431 = vrot.slane %v321, 5
      %v1432 = vrot.slane %v1431, 4
      %v1433 = vrot.slane %v322, 5
      %v1434 = vsel %vm837, %v1432, %v1433
      %v1435 = vrot.slane %v1433, 4
      %v1436 = vrot.slane %v323, 5
      %v1437 = vsel %vm837, %v1435, %v1436
      %v1438 = vrot.slane %v324, 5
      %v1439 = vrot.slane %v1438, 4
      %v1440 = vrot.slane %v325, 5
      %v1441 = vsel %vm837, %v1439, %v1440
      %v1442 = vrot.slane %v1440, 4
      %v1443 = vrot.slane %v326, 5
      %v1444 = vsel %vm837, %v1442, %v1443
      %v1445 = vrot.slane %v327, 5
      %v1446 = vrot.slane %v1445, 4
      %v1447 = vrot.slane %v328, 5
      %v1448 = vsel %vm837, %v1446, %v1447
      %v1449 = vrot.slane %v1447, 4
      %v1450 = vrot.slane %v329, 5
      %v1451 = vsel %vm837, %v1449, %v1450
      %v1452 = vrot.slane %v330, 5
      %v1453 = vrot.slane %v1452, 4
      %v1454 = vrot.slane %v331, 5
      %v1455 = vsel %vm837, %v1453, %v1454
      %v1456 = vrot.slane %v1454, 4
      %v1457 = vrot.slane %v332, 5
      %v1458 = vsel %vm837, %v1456, %v1457
      %v1459 = vrot.slane %v333, 5
      %v1460 = vrot.slane %v1459, 4
      %v1461 = vrot.slane %v334, 5
      %v1462 = vsel %vm837, %v1460, %v1461
      %v1463 = vrot.slane %v1461, 4
      %v1464 = vrot.slane %v335, 5
      %v1465 = vsel %vm837, %v1463, %v1464
      %v1466 = vrot.slane %v336, 5
      %v1467 = vrot.slane %v1466, 4
      %v1468 = vrot.slane %v337, 5
      %v1469 = vsel %vm837, %v1467, %v1468
      %v1470 = vrot.slane %v1468, 4
      %v1471 = vrot.slane %v338, 5
      %v1472 = vsel %vm837, %v1470, %v1471
      %v1473 = vrot.slane %v339, 5
      %v1474 = vrot.slane %v1473, 4
      %v1475 = vrot.slane %v340, 5
      %v1476 = vsel %vm837, %v1474, %v1475
      %v1477 = vrot.slane %v1475, 4
      %v1478 = vrot.slane %v341, 5
      %v1479 = vsel %vm837, %v1477, %v1478
      %v1480 = vrot.slane %v342, 5
      %v1481 = vrot.slane %v1480, 4
      %v1482 = vrot.slane %v343, 5
      %v1483 = vsel %vm837, %v1481, %v1482
      %v1484 = vrot.slane %v1482, 4
      %v1485 = vrot.slane %v344, 5
      %v1486 = vsel %vm837, %v1484, %v1485
      %v1487 = vrot.slane %v345, 5
      %v1488 = vrot.slane %v1487, 4
      %v1489 = vrot.slane %v346, 5
      %v1490 = vsel %vm837, %v1488, %v1489
      %v1491 = vrot.slane %v1489, 4
      %v1492 = vrot.slane %v347, 5
      %v1493 = vsel %vm837, %v1491, %v1492
      %v1495 = vshrl.u32 %v352, 16
      %v1497 = vrot.slane %v1495, 4
      %v1498 = vshll.u32 %v352, 16
      %v1500 = vrot.slane %v1498, 5
      %v1501 = vor.u32 %v1497, %v1500
      %v1502 = vrot.slane %v1501, 4
      %v1504 = vshll.u32 %v353, 16
      %v1506 = vrot.slane %v1504, 5
      %v1507 = vsel %vm402, %v1502, %v1506
      %v1508 = vshrl.u32 %v353, 16
      %v1510 = vrot.slane %v1508, 4
      %v1511 = vor.u32 %v1510, %v1506
      %v1512 = vrot.slane %v1511, 4
      %v1514 = vshll.u32 %v354, 16
      %v1516 = vrot.slane %v1514, 5
      %v1517 = vsel %vm402, %v1512, %v1516
      %v1519 = vshrl.u32 %v355, 16
      %v1521 = vrot.slane %v1519, 4
      %v1522 = vshll.u32 %v355, 16
      %v1524 = vrot.slane %v1522, 5
      %v1525 = vor.u32 %v1521, %v1524
      %v1526 = vrot.slane %v1525, 4
      %v1528 = vshll.u32 %v356, 16
      %v1530 = vrot.slane %v1528, 5
      %v1531 = vsel %vm402, %v1526, %v1530
      %v1532 = vshrl.u32 %v356, 16
      %v1534 = vrot.slane %v1532, 4
      %v1535 = vor.u32 %v1534, %v1530
      %v1536 = vrot.slane %v1535, 4
      %v1538 = vshll.u32 %v357, 16
      %v1540 = vrot.slane %v1538, 5
      %v1541 = vsel %vm402, %v1536, %v1540
      %v1543 = vshrl.u32 %v358, 16
      %v1545 = vrot.slane %v1543, 4
      %v1546 = vshll.u32 %v358, 16
      %v1548 = vrot.slane %v1546, 5
      %v1549 = vor.u32 %v1545, %v1548
      %v1550 = vrot.slane %v1549, 4
      %v1552 = vshll.u32 %v359, 16
      %v1554 = vrot.slane %v1552, 5
      %v1555 = vsel %vm402, %v1550, %v1554
      %v1556 = vshrl.u32 %v359, 16
      %v1558 = vrot.slane %v1556, 4
      %v1559 = vor.u32 %v1558, %v1554
      %v1560 = vrot.slane %v1559, 4
      %v1562 = vshll.u32 %v360, 16
      %v1564 = vrot.slane %v1562, 5
      %v1565 = vsel %vm402, %v1560, %v1564
      %v1567 = vshrl.u32 %v361, 16
      %v1569 = vrot.slane %v1567, 4
      %v1570 = vshll.u32 %v361, 16
      %v1572 = vrot.slane %v1570, 5
      %v1573 = vor.u32 %v1569, %v1572
      %v1574 = vrot.slane %v1573, 4
      %v1576 = vshll.u32 %v362, 16
      %v1578 = vrot.slane %v1576, 5
      %v1579 = vsel %vm402, %v1574, %v1578
      %v1580 = vshrl.u32 %v362, 16
      %v1582 = vrot.slane %v1580, 4
      %v1583 = vor.u32 %v1582, %v1578
      %v1584 = vrot.slane %v1583, 4
      %v1586 = vshll.u32 %v363, 16
      %v1588 = vrot.slane %v1586, 5
      %v1589 = vsel %vm402, %v1584, %v1588
      %v1591 = vshrl.u32 %v364, 16
      %v1593 = vrot.slane %v1591, 4
      %v1594 = vshll.u32 %v364, 16
      %v1596 = vrot.slane %v1594, 5
      %v1597 = vor.u32 %v1593, %v1596
      %v1598 = vrot.slane %v1597, 4
      %v1600 = vshll.u32 %v365, 16
      %v1602 = vrot.slane %v1600, 5
      %v1603 = vsel %vm402, %v1598, %v1602
      %v1604 = vshrl.u32 %v365, 16
      %v1606 = vrot.slane %v1604, 4
      %v1607 = vor.u32 %v1606, %v1602
      %v1608 = vrot.slane %v1607, 4
      %v1610 = vshll.u32 %v366, 16
      %v1612 = vrot.slane %v1610, 5
      %v1613 = vsel %vm402, %v1608, %v1612
      %v1615 = vshrl.u32 %v367, 16
      %v1617 = vrot.slane %v1615, 4
      %v1618 = vshll.u32 %v367, 16
      %v1620 = vrot.slane %v1618, 5
      %v1621 = vor.u32 %v1617, %v1620
      %v1622 = vrot.slane %v1621, 4
      %v1624 = vshll.u32 %v368, 16
      %v1626 = vrot.slane %v1624, 5
      %v1627 = vsel %vm402, %v1622, %v1626
      %v1628 = vshrl.u32 %v368, 16
      %v1630 = vrot.slane %v1628, 4
      %v1631 = vor.u32 %v1630, %v1626
      %v1632 = vrot.slane %v1631, 4
      %v1634 = vshll.u32 %v369, 16
      %v1636 = vrot.slane %v1634, 5
      %v1637 = vsel %vm402, %v1632, %v1636
      %v1639 = vshrl.u32 %v370, 16
      %v1641 = vrot.slane %v1639, 4
      %v1642 = vshll.u32 %v370, 16
      %v1644 = vrot.slane %v1642, 5
      %v1645 = vor.u32 %v1641, %v1644
      %v1646 = vrot.slane %v1645, 4
      %v1648 = vshll.u32 %v371, 16
      %v1650 = vrot.slane %v1648, 5
      %v1651 = vsel %vm402, %v1646, %v1650
      %v1652 = vshrl.u32 %v371, 16
      %v1654 = vrot.slane %v1652, 4
      %v1655 = vor.u32 %v1654, %v1650
      %v1656 = vrot.slane %v1655, 4
      %v1658 = vshll.u32 %v372, 16
      %v1660 = vrot.slane %v1658, 5
      %v1661 = vsel %vm402, %v1656, %v1660
      %v1663 = vshrl.u32 %v373, 16
      %v1665 = vrot.slane %v1663, 4
      %v1666 = vshll.u32 %v373, 16
      %v1668 = vrot.slane %v1666, 5
      %v1669 = vor.u32 %v1665, %v1668
      %v1670 = vrot.slane %v1669, 4
      %v1672 = vshll.u32 %v374, 16
      %v1674 = vrot.slane %v1672, 5
      %v1675 = vsel %vm402, %v1670, %v1674
      %v1676 = vshrl.u32 %v374, 16
      %v1678 = vrot.slane %v1676, 4
      %v1679 = vor.u32 %v1678, %v1674
      %v1680 = vrot.slane %v1679, 4
      %v1682 = vshll.u32 %v375, 16
      %v1684 = vrot.slane %v1682, 5
      %v1685 = vsel %vm402, %v1680, %v1684
      %v1687 = vshrl.u32 %v376, 16
      %v1689 = vrot.slane %v1687, 4
      %v1690 = vshll.u32 %v376, 16
      %v1692 = vrot.slane %v1690, 5
      %v1693 = vor.u32 %v1689, %v1692
      %v1694 = vrot.slane %v1693, 4
      %v1696 = vshll.u32 %v377, 16
      %v1698 = vrot.slane %v1696, 5
      %v1699 = vsel %vm402, %v1694, %v1698
      %v1700 = vshrl.u32 %v377, 16
      %v1702 = vrot.slane %v1700, 4
      %v1703 = vor.u32 %v1702, %v1698
      %v1704 = vrot.slane %v1703, 4
      %v1706 = vshll.u32 %v378, 16
      %v1708 = vrot.slane %v1706, 5
      %v1709 = vsel %vm402, %v1704, %v1708
      %v1711 = vshrl.u32 %v379, 16
      %v1713 = vrot.slane %v1711, 4
      %v1714 = vshll.u32 %v379, 16
      %v1716 = vrot.slane %v1714, 5
      %v1717 = vor.u32 %v1713, %v1716
      %v1718 = vrot.slane %v1717, 4
      %v1720 = vshll.u32 %v380, 16
      %v1722 = vrot.slane %v1720, 5
      %v1723 = vsel %vm402, %v1718, %v1722
      %v1724 = vshrl.u32 %v380, 16
      %v1726 = vrot.slane %v1724, 4
      %v1727 = vor.u32 %v1726, %v1722
      %v1728 = vrot.slane %v1727, 4
      %v1730 = vshll.u32 %v381, 16
      %v1732 = vrot.slane %v1730, 5
      %v1733 = vsel %vm402, %v1728, %v1732
      %v1735 = vshrl.u32 %v382, 16
      %v1737 = vrot.slane %v1735, 4
      %v1738 = vshll.u32 %v382, 16
      %v1740 = vrot.slane %v1738, 5
      %v1741 = vor.u32 %v1737, %v1740
      %v1742 = vrot.slane %v1741, 4
      %v1744 = vshll.u32 %v383, 16
      %v1746 = vrot.slane %v1744, 5
      %v1747 = vsel %vm402, %v1742, %v1746
      %v1748 = vshrl.u32 %v383, 16
      %v1750 = vrot.slane %v1748, 4
      %v1751 = vor.u32 %v1750, %v1746
      %v1752 = vrot.slane %v1751, 4
      %v1754 = vshll.u32 %v384, 16
      %v1756 = vrot.slane %v1754, 5
      %v1757 = vsel %vm402, %v1752, %v1756
      %v1759 = vshrl.u32 %v385, 16
      %v1761 = vrot.slane %v1759, 4
      %v1762 = vshll.u32 %v385, 16
      %v1764 = vrot.slane %v1762, 5
      %v1765 = vor.u32 %v1761, %v1764
      %v1766 = vrot.slane %v1765, 4
      %v1768 = vshll.u32 %v386, 16
      %v1770 = vrot.slane %v1768, 5
      %v1771 = vsel %vm402, %v1766, %v1770
      %v1772 = vshrl.u32 %v386, 16
      %v1774 = vrot.slane %v1772, 4
      %v1775 = vor.u32 %v1774, %v1770
      %v1776 = vrot.slane %v1775, 4
      %v1778 = vshll.u32 %v387, 16
      %v1780 = vrot.slane %v1778, 5
      %v1781 = vsel %vm402, %v1776, %v1780
      %v1783 = vshrl.u32 %v388, 16
      %v1785 = vrot.slane %v1783, 4
      %v1786 = vshll.u32 %v388, 16
      %v1788 = vrot.slane %v1786, 5
      %v1789 = vor.u32 %v1785, %v1788
      %v1790 = vrot.slane %v1789, 4
      %v1792 = vshll.u32 %v389, 16
      %v1794 = vrot.slane %v1792, 5
      %v1795 = vsel %vm402, %v1790, %v1794
      %v1796 = vshrl.u32 %v389, 16
      %v1798 = vrot.slane %v1796, 4
      %v1799 = vor.u32 %v1798, %v1794
      %v1800 = vrot.slane %v1799, 4
      %v1802 = vshll.u32 %v390, 16
      %v1804 = vrot.slane %v1802, 5
      %v1805 = vsel %vm402, %v1800, %v1804
      %v1807 = vshrl.u32 %v391, 16
      %v1809 = vrot.slane %v1807, 4
      %v1810 = vshll.u32 %v391, 16
      %v1812 = vrot.slane %v1810, 5
      %v1813 = vor.u32 %v1809, %v1812
      %v1814 = vrot.slane %v1813, 4
      %v1816 = vshll.u32 %v392, 16
      %v1818 = vrot.slane %v1816, 5
      %v1819 = vsel %vm402, %v1814, %v1818
      %v1820 = vshrl.u32 %v392, 16
      %v1822 = vrot.slane %v1820, 4
      %v1823 = vor.u32 %v1822, %v1818
      %v1824 = vrot.slane %v1823, 4
      %v1826 = vshll.u32 %v393, 16
      %v1828 = vrot.slane %v1826, 5
      %v1829 = vsel %vm402, %v1824, %v1828
      %v1831 = vshrl.u32 %v394, 16
      %v1833 = vrot.slane %v1831, 4
      %v1834 = vshll.u32 %v394, 16
      %v1836 = vrot.slane %v1834, 5
      %v1837 = vor.u32 %v1833, %v1836
      %v1838 = vrot.slane %v1837, 4
      %v1840 = vshll.u32 %v395, 16
      %v1842 = vrot.slane %v1840, 5
      %v1843 = vsel %vm402, %v1838, %v1842
      %v1844 = vshrl.u32 %v395, 16
      %v1846 = vrot.slane %v1844, 4
      %v1847 = vor.u32 %v1846, %v1842
      %v1848 = vrot.slane %v1847, 4
      %v1850 = vshll.u32 %v396, 16
      %v1852 = vrot.slane %v1850, 5
      %v1853 = vsel %vm402, %v1848, %v1852
      %v1855 = vshrl.u32 %v397, 16
      %v1857 = vrot.slane %v1855, 4
      %v1858 = vshll.u32 %v397, 16
      %v1860 = vrot.slane %v1858, 5
      %v1861 = vor.u32 %v1857, %v1860
      %v1862 = vrot.slane %v1861, 4
      %v1864 = vshll.u32 %v398, 16
      %v1866 = vrot.slane %v1864, 5
      %v1867 = vsel %vm402, %v1862, %v1866
      %v1868 = vshrl.u32 %v398, 16
      %v1870 = vrot.slane %v1868, 4
      %v1871 = vor.u32 %v1870, %v1866
      %v1872 = vrot.slane %v1871, 4
      %v1874 = vshll.u32 %v399, 16
      %v1876 = vrot.slane %v1874, 5
      %v1877 = vsel %vm402, %v1872, %v1876
      %v1926 = vrot.slane %v352, 5
      %v1927 = vrot.slane %v1926, 4
      %v1928 = vrot.slane %v353, 5
      %v1929 = vsel %vm837, %v1927, %v1928
      %v1930 = vrot.slane %v1928, 4
      %v1931 = vrot.slane %v354, 5
      %v1932 = vsel %vm837, %v1930, %v1931
      %v1933 = vrot.slane %v355, 5
      %v1934 = vrot.slane %v1933, 4
      %v1935 = vrot.slane %v356, 5
      %v1936 = vsel %vm837, %v1934, %v1935
      %v1937 = vrot.slane %v1935, 4
      %v1938 = vrot.slane %v357, 5
      %v1939 = vsel %vm837, %v1937, %v1938
      %v1940 = vrot.slane %v358, 5
      %v1941 = vrot.slane %v1940, 4
      %v1942 = vrot.slane %v359, 5
      %v1943 = vsel %vm837, %v1941, %v1942
      %v1944 = vrot.slane %v1942, 4
      %v1945 = vrot.slane %v360, 5
      %v1946 = vsel %vm837, %v1944, %v1945
      %v1947 = vrot.slane %v361, 5
      %v1948 = vrot.slane %v1947, 4
      %v1949 = vrot.slane %v362, 5
      %v1950 = vsel %vm837, %v1948, %v1949
      %v1951 = vrot.slane %v1949, 4
      %v1952 = vrot.slane %v363, 5
      %v1953 = vsel %vm837, %v1951, %v1952
      %v1954 = vrot.slane %v364, 5
      %v1955 = vrot.slane %v1954, 4
      %v1956 = vrot.slane %v365, 5
      %v1957 = vsel %vm837, %v1955, %v1956
      %v1958 = vrot.slane %v1956, 4
      %v1959 = vrot.slane %v366, 5
      %v1960 = vsel %vm837, %v1958, %v1959
      %v1961 = vrot.slane %v367, 5
      %v1962 = vrot.slane %v1961, 4
      %v1963 = vrot.slane %v368, 5
      %v1964 = vsel %vm837, %v1962, %v1963
      %v1965 = vrot.slane %v1963, 4
      %v1966 = vrot.slane %v369, 5
      %v1967 = vsel %vm837, %v1965, %v1966
      %v1968 = vrot.slane %v370, 5
      %v1969 = vrot.slane %v1968, 4
      %v1970 = vrot.slane %v371, 5
      %v1971 = vsel %vm837, %v1969, %v1970
      %v1972 = vrot.slane %v1970, 4
      %v1973 = vrot.slane %v372, 5
      %v1974 = vsel %vm837, %v1972, %v1973
      %v1975 = vrot.slane %v373, 5
      %v1976 = vrot.slane %v1975, 4
      %v1977 = vrot.slane %v374, 5
      %v1978 = vsel %vm837, %v1976, %v1977
      %v1979 = vrot.slane %v1977, 4
      %v1980 = vrot.slane %v375, 5
      %v1981 = vsel %vm837, %v1979, %v1980
      %v1982 = vrot.slane %v376, 5
      %v1983 = vrot.slane %v1982, 4
      %v1984 = vrot.slane %v377, 5
      %v1985 = vsel %vm837, %v1983, %v1984
      %v1986 = vrot.slane %v1984, 4
      %v1987 = vrot.slane %v378, 5
      %v1988 = vsel %vm837, %v1986, %v1987
      %v1989 = vrot.slane %v379, 5
      %v1990 = vrot.slane %v1989, 4
      %v1991 = vrot.slane %v380, 5
      %v1992 = vsel %vm837, %v1990, %v1991
      %v1993 = vrot.slane %v1991, 4
      %v1994 = vrot.slane %v381, 5
      %v1995 = vsel %vm837, %v1993, %v1994
      %v1996 = vrot.slane %v382, 5
      %v1997 = vrot.slane %v1996, 4
      %v1998 = vrot.slane %v383, 5
      %v1999 = vsel %vm837, %v1997, %v1998
      %v2000 = vrot.slane %v1998, 4
      %v2001 = vrot.slane %v384, 5
      %v2002 = vsel %vm837, %v2000, %v2001
      %v2003 = vrot.slane %v385, 5
      %v2004 = vrot.slane %v2003, 4
      %v2005 = vrot.slane %v386, 5
      %v2006 = vsel %vm837, %v2004, %v2005
      %v2007 = vrot.slane %v2005, 4
      %v2008 = vrot.slane %v387, 5
      %v2009 = vsel %vm837, %v2007, %v2008
      %v2010 = vrot.slane %v388, 5
      %v2011 = vrot.slane %v2010, 4
      %v2012 = vrot.slane %v389, 5
      %v2013 = vsel %vm837, %v2011, %v2012
      %v2014 = vrot.slane %v2012, 4
      %v2015 = vrot.slane %v390, 5
      %v2016 = vsel %vm837, %v2014, %v2015
      %v2017 = vrot.slane %v391, 5
      %v2018 = vrot.slane %v2017, 4
      %v2019 = vrot.slane %v392, 5
      %v2020 = vsel %vm837, %v2018, %v2019
      %v2021 = vrot.slane %v2019, 4
      %v2022 = vrot.slane %v393, 5
      %v2023 = vsel %vm837, %v2021, %v2022
      %v2024 = vrot.slane %v394, 5
      %v2025 = vrot.slane %v2024, 4
      %v2026 = vrot.slane %v395, 5
      %v2027 = vsel %vm837, %v2025, %v2026
      %v2028 = vrot.slane %v2026, 4
      %v2029 = vrot.slane %v396, 5
      %v2030 = vsel %vm837, %v2028, %v2029
      %v2031 = vrot.slane %v397, 5
      %v2032 = vrot.slane %v2031, 4
      %v2033 = vrot.slane %v398, 5
      %v2034 = vsel %vm837, %v2032, %v2033
      %v2035 = vrot.slane %v2033, 4
      %v2036 = vrot.slane %v399, 5
      %v2037 = vsel %vm837, %v2035, %v2036
      %v2038 = vld [vmem:[%s224] sm:$0x3]
      %s2039 = scalar_lea.vmem %s224, 2
      %v2040 = vld [vmem:[%s2039] sm:$0x3]
      %v2041 = vunpack.c.l.b16 %v416
      %v2042 = vunpack.c.l.b16 %v426
      %v2043 = vunpack.c.l.b16 %v440
      %v2044 = vunpack.c.l.b16 %v450
      %v2045 = vunpack.c.l.b16 %v464
      %v2046 = vunpack.c.l.b16 %v474
      %v2047 = vunpack.c.l.b16 %v488
      %v2048 = vunpack.c.l.b16 %v498
      %v2049 = vunpack.c.l.b16 %v512
      %v2050 = vunpack.c.l.b16 %v522
      %v2051 = vunpack.c.l.b16 %v536
      %v2052 = vunpack.c.l.b16 %v546
      %v2053 = vunpack.c.l.b16 %v560
      %v2054 = vunpack.c.l.b16 %v570
      %v2055 = vunpack.c.l.b16 %v584
      %v2056 = vunpack.c.l.b16 %v594
      %v2057 = vunpack.c.l.b16 %v608
      %v2058 = vunpack.c.l.b16 %v618
      %v2059 = vunpack.c.l.b16 %v632
      %v2060 = vunpack.c.l.b16 %v642
      %v2061 = vunpack.c.l.b16 %v656
      %v2062 = vunpack.c.l.b16 %v666
      %v2063 = vunpack.c.l.b16 %v680
      %v2064 = vunpack.c.l.b16 %v690
      %v2065 = vunpack.c.l.b16 %v704
      %v2066 = vunpack.c.l.b16 %v714
      %v2067 = vunpack.c.l.b16 %v728
      %v2068 = vunpack.c.l.b16 %v738
      %v2069 = vunpack.c.l.b16 %v752
      %v2070 = vunpack.c.l.b16 %v762
      %v2071 = vunpack.c.l.b16 %v776
      %v2072 = vunpack.c.l.b16 %v786
      %v2073 = vpack.c.b16 %v2042, %v2041
      %v2074 = vpack.c.b16 %v2044, %v2043
      %v2075 = vpack.c.b16 %v2046, %v2045
      %v2076 = vpack.c.b16 %v2048, %v2047
      %v2077 = vpack.c.b16 %v2050, %v2049
      %v2078 = vpack.c.b16 %v2052, %v2051
      %v2079 = vpack.c.b16 %v2054, %v2053
      %v2080 = vpack.c.b16 %v2056, %v2055
      %v2081 = vpack.c.b16 %v2058, %v2057
      %v2082 = vpack.c.b16 %v2060, %v2059
      %v2083 = vpack.c.b16 %v2062, %v2061
      %v2084 = vpack.c.b16 %v2064, %v2063
      %v2085 = vpack.c.b16 %v2066, %v2065
      %v2086 = vpack.c.b16 %v2068, %v2067
      %v2087 = vpack.c.b16 %v2070, %v2069
      %v2088 = vpack.c.b16 %v2072, %v2071
      %vm2089 = vcmask 31744
      %v2091 = vsel %vm2089, %v2073, 0
      %v2094 = vsel %vm2089, %v2074, 0
      %v2097 = vsel %vm2089, %v2075, 0
      %v2100 = vsel %vm2089, %v2076, 0
      %v2103 = vsel %vm2089, %v2077, 0
      %v2106 = vsel %vm2089, %v2078, 0
      %v2109 = vsel %vm2089, %v2079, 0
      %v2112 = vsel %vm2089, %v2080, 0
      %v2115 = vsel %vm2089, %v2081, 0
      %v2118 = vsel %vm2089, %v2082, 0
      %v2121 = vsel %vm2089, %v2083, 0
      %v2124 = vsel %vm2089, %v2084, 0
      %v2127 = vsel %vm2089, %v2085, 0
      %v2130 = vsel %vm2089, %v2086, 0
      %v2133 = vsel %vm2089, %v2087, 0
      %v2136 = vsel %vm2089, %v2088, 0
      %vm2138 = vcmask 1041408
      %v2140 = vsel %vm2138, %v2040, 0
      %2142 = vmatprep.subr.bf16.mxu0 0
      %2143 = vmatpush1.bf16.msra.mxu0 %v2140
      %2144 = vmatprep.subr.bf16.mxu0 0
      %2145 = vmatpush1.bf16.msra.mxu0 0
      %2146 = vmatprep.subr.bf16.mxu0 0
      %2147 = vmatpush1.bf16.msra.mxu0 0
      %2148 = vmatprep.subr.bf16.mxu0 0
      %2149 = vmatpush1.bf16.msra.mxu0 0
      %2150 = vmatprep.subr.bf16.mxu0 0
      %2151 = vmatpush1.bf16.msra.mxu0 0
      %2152 = vmatprep.subr.bf16.mxu0 0
      %2153 = vmatpush1.bf16.msra.mxu0 0
      %2154 = vmatprep.subr.bf16.mxu0 0
      %2155 = vmatpush1.bf16.msra.mxu0 0
      %2156 = vmatprep.subr.bf16.mxu0 0
      %2157 = vmatpush1.bf16.msra.mxu0 0
      %2158 = vmatprep.subr.bf16.mxu0 0
      %2159 = vmatpush1.bf16.msra.mxu0 0
      %2160 = vmatprep.subr.bf16.mxu0 0
      %2161 = vmatpush1.bf16.msra.mxu0 0
      %2162 = vmatprep.subr.bf16.mxu0 0
      %2163 = vmatpush1.bf16.msra.mxu0 0
      %2164 = vmatprep.subr.bf16.mxu0 0
      %2165 = vmatpush1.bf16.msra.mxu0 0
      %2166 = vmatprep.subr.bf16.mxu0 0
      %2167 = vmatpush1.bf16.msra.mxu0 0
      %2168 = vmatprep.subr.bf16.mxu0 0
      %2169 = vmatpush1.bf16.msra.mxu0 0
      %2170 = vmatprep.subr.bf16.mxu0 0
      %2171 = vmatpush1.bf16.msra.mxu0 0
      %2172 = vmatprep.subr.bf16.mxu0 0
      %2173 = vmatpush1.bf16.msra.mxu0 0
      %2174 = vmatprep.mubr.bf16.mxu0 0
      %2175 = vmatmul.mubr.bf16.gmra.mrb[0].mxu0 %v2091
      %v2176 = vpop.f32.mrb[0].mxu0
      %v2177 = vadd.f32 0.0, %v2176
      %v2178 = vpop.f32.mrb[0].mxu0
      %v2179 = vpop.f32.mrb[0].mxu0
      %v2180 = vadd.f32 0.0, %v2179
      %v2181 = vpop.f32.mrb[0].mxu0
      %2182 = vmatprep.mubr.bf16.mxu0 0
      %2183 = vmatmul.mubr.bf16.gmra.mrb[0].mxu0 %v2094
      %v2184 = vpop.f32.mrb[0].mxu0
      %v2185 = vadd.f32 0.0, %v2184
      %v2186 = vpop.f32.mrb[0].mxu0
      %v2187 = vpop.f32.mrb[0].mxu0
      %v2188 = vadd.f32 0.0, %v2187
      %v2189 = vpop.f32.mrb[0].mxu0
      %2190 = vmatprep.mubr.bf16.mxu0 0
      %2191 = vmatmul.mubr.bf16.gmra.mrb[0].mxu0 %v2097
      %v2192 = vpop.f32.mrb[0].mxu0
      %v2193 = vadd.f32 0.0, %v2192
      %v2194 = vpop.f32.mrb[0].mxu0
      %v2195 = vpop.f32.mrb[0].mxu0
      %v2196 = vadd.f32 0.0, %v2195
      %v2197 = vpop.f32.mrb[0].mxu0
      %2198 = vmatprep.mubr.bf16.mxu0 0
      %2199 = vmatmul.mubr.bf16.gmra.mrb[0].mxu0 %v2100
      %v2200 = vpop.f32.mrb[0].mxu0
      %v2201 = vadd.f32 0.0, %v2200
      %v2202 = vpop.f32.mrb[0].mxu0
      %v2203 = vpop.f32.mrb[0].mxu0
      %v2204 = vadd.f32 0.0, %v2203
      %v2205 = vpop.f32.mrb[0].mxu0
      %2206 = vmatprep.mubr.bf16.mxu0 0
      %2207 = vmatmul.mubr.bf16.gmra.mrb[0].mxu0 %v2103
      %v2208 = vpop.f32.mrb[0].mxu0
      %v2209 = vadd.f32 0.0, %v2208
      %v2210 = vpop.f32.mrb[0].mxu0
      %v2211 = vpop.f32.mrb[0].mxu0
      %v2212 = vadd.f32 0.0, %v2211
      %v2213 = vpop.f32.mrb[0].mxu0
      %2214 = vmatprep.mubr.bf16.mxu0 0
      %2215 = vmatmul.mubr.bf16.gmra.mrb[0].mxu0 %v2106
      %v2216 = vpop.f32.mrb[0].mxu0
      %v2217 = vadd.f32 0.0, %v2216
      %v2218 = vpop.f32.mrb[0].mxu0
      %v2219 = vpop.f32.mrb[0].mxu0
      %v2220 = vadd.f32 0.0, %v2219
      %v2221 = vpop.f32.mrb[0].mxu0
      %2222 = vmatprep.mubr.bf16.mxu0 0
      %2223 = vmatmul.mubr.bf16.gmra.mrb[0].mxu0 %v2109
      %v2224 = vpop.f32.mrb[0].mxu0
      %v2225 = vadd.f32 0.0, %v2224
      %v2226 = vpop.f32.mrb[0].mxu0
      %v2227 = vpop.f32.mrb[0].mxu0
      %v2228 = vadd.f32 0.0, %v2227
      %v2229 = vpop.f32.mrb[0].mxu0
      %2230 = vmatprep.mubr.bf16.mxu0 0
      %2231 = vmatmul.mubr.bf16.gmra.mrb[0].mxu0 %v2112
      %v2232 = vpop.f32.mrb[0].mxu0
      %v2233 = vadd.f32 0.0, %v2232
      %v2234 = vpop.f32.mrb[0].mxu0
      %v2235 = vpop.f32.mrb[0].mxu0
      %v2236 = vadd.f32 0.0, %v2235
      %v2237 = vpop.f32.mrb[0].mxu0
      %2238 = vmatprep.mubr.bf16.mxu0 0
      %2239 = vmatmul.mubr.bf16.gmra.mrb[0].mxu0 %v2115
      %v2240 = vpop.f32.mrb[0].mxu0
      %v2241 = vadd.f32 0.0, %v2240
      %v2242 = vpop.f32.mrb[0].mxu0
      %v2243 = vpop.f32.mrb[0].mxu0
      %v2244 = vadd.f32 0.0, %v2243
      %v2245 = vpop.f32.mrb[0].mxu0
      %2246 = vmatprep.mubr.bf16.mxu0 0
      %2247 = vmatmul.mubr.bf16.gmra.mrb[0].mxu0 %v2118
      %v2248 = vpop.f32.mrb[0].mxu0
      %v2249 = vadd.f32 0.0, %v2248
      %v2250 = vpop.f32.mrb[0].mxu0
      %v2251 = vpop.f32.mrb[0].mxu0
      %v2252 = vadd.f32 0.0, %v2251
      %v2253 = vpop.f32.mrb[0].mxu0
      %2254 = vmatprep.mubr.bf16.mxu0 0
      %2255 = vmatmul.mubr.bf16.gmra.mrb[0].mxu0 %v2121
      %v2256 = vpop.f32.mrb[0].mxu0
      %v2257 = vadd.f32 0.0, %v2256
      %v2258 = vpop.f32.mrb[0].mxu0
      %v2259 = vpop.f32.mrb[0].mxu0
      %v2260 = vadd.f32 0.0, %v2259
      %v2261 = vpop.f32.mrb[0].mxu0
      %2262 = vmatprep.mubr.bf16.mxu0 0
      %2263 = vmatmul.mubr.bf16.gmra.mrb[0].mxu0 %v2124
      %v2264 = vpop.f32.mrb[0].mxu0
      %v2265 = vadd.f32 0.0, %v2264
      %v2266 = vpop.f32.mrb[0].mxu0
      %v2267 = vpop.f32.mrb[0].mxu0
      %v2268 = vadd.f32 0.0, %v2267
      %v2269 = vpop.f32.mrb[0].mxu0
      %2270 = vmatprep.mubr.bf16.mxu0 0
      %2271 = vmatmul.mubr.bf16.gmra.mrb[0].mxu0 %v2127
      %v2272 = vpop.f32.mrb[0].mxu0
      %v2273 = vadd.f32 0.0, %v2272
      %v2274 = vpop.f32.mrb[0].mxu0
      %v2275 = vpop.f32.mrb[0].mxu0
      %v2276 = vadd.f32 0.0, %v2275
      %v2277 = vpop.f32.mrb[0].mxu0
      %2278 = vmatprep.mubr.bf16.mxu0 0
      %2279 = vmatmul.mubr.bf16.gmra.mrb[0].mxu0 %v2130
      %v2280 = vpop.f32.mrb[0].mxu0
      %v2281 = vadd.f32 0.0, %v2280
      %v2282 = vpop.f32.mrb[0].mxu0
      %v2283 = vpop.f32.mrb[0].mxu0
      %v2284 = vadd.f32 0.0, %v2283
      %v2285 = vpop.f32.mrb[0].mxu0
      %2286 = vmatprep.mubr.bf16.mxu0 0
      %2287 = vmatmul.mubr.bf16.gmra.mrb[0].mxu0 %v2133
      %v2288 = vpop.f32.mrb[0].mxu0
      %v2289 = vadd.f32 0.0, %v2288
      %v2290 = vpop.f32.mrb[0].mxu0
      %v2291 = vpop.f32.mrb[0].mxu0
      %v2292 = vadd.f32 0.0, %v2291
      %v2293 = vpop.f32.mrb[0].mxu0
      %2294 = vmatprep.mubr.bf16.mxu0 0
      %2295 = vmatmul.mubr.bf16.gmra.mrb[0].mxu0 %v2136
      %v2296 = vpop.f32.mrb[0].mxu0
      %v2297 = vadd.f32 0.0, %v2296
      %v2298 = vpop.f32.mrb[0].mxu0
      %v2299 = vpop.f32.mrb[0].mxu0
      %v2300 = vadd.f32 0.0, %v2299
      %v2301 = vpop.f32.mrb[0].mxu0
      %2302 = vdwg.mxu0
      %v2303 = vunpack.c.l.b16 %v248
      %v2304 = vunpack.c.l.b16 %v249
      %v2305 = vunpack.c.l.b16 %v251
      %v2306 = vunpack.c.l.b16 %v252
      %v2307 = vunpack.c.l.b16 %v254
      %v2308 = vunpack.c.l.b16 %v255
      %v2309 = vunpack.c.l.b16 %v257
      %v2310 = vunpack.c.l.b16 %v258
      %v2311 = vunpack.c.l.b16 %v260
      %v2312 = vunpack.c.l.b16 %v261
      %v2313 = vunpack.c.l.b16 %v263
      %v2314 = vunpack.c.l.b16 %v264
      %v2315 = vunpack.c.l.b16 %v266
      %v2316 = vunpack.c.l.b16 %v267
      %v2317 = vunpack.c.l.b16 %v269
      %v2318 = vunpack.c.l.b16 %v270
      %v2319 = vunpack.c.l.b16 %v272
      %v2320 = vunpack.c.l.b16 %v273
      %v2321 = vunpack.c.l.b16 %v275
      %v2322 = vunpack.c.l.b16 %v276
      %v2323 = vunpack.c.l.b16 %v278
      %v2324 = vunpack.c.l.b16 %v279
      %v2325 = vunpack.c.l.b16 %v281
      %v2326 = vunpack.c.l.b16 %v282
      %v2327 = vunpack.c.l.b16 %v284
      %v2328 = vunpack.c.l.b16 %v285
      %v2329 = vunpack.c.l.b16 %v287
      %v2330 = vunpack.c.l.b16 %v288
      %v2331 = vunpack.c.l.b16 %v290
      %v2332 = vunpack.c.l.b16 %v291
      %v2333 = vunpack.c.l.b16 %v293
      %v2334 = vunpack.c.l.b16 %v294
      %v2335 = vpack.c.b16 %v2304, %v2303
      %v2336 = vpack.c.b16 %v2306, %v2305
      %v2337 = vpack.c.b16 %v2308, %v2307
      %v2338 = vpack.c.b16 %v2310, %v2309
      %v2339 = vpack.c.b16 %v2312, %v2311
      %v2340 = vpack.c.b16 %v2314, %v2313
      %v2341 = vpack.c.b16 %v2316, %v2315
      %v2342 = vpack.c.b16 %v2318, %v2317
      %v2343 = vpack.c.b16 %v2320, %v2319
      %v2344 = vpack.c.b16 %v2322, %v2321
      %v2345 = vpack.c.b16 %v2324, %v2323
      %v2346 = vpack.c.b16 %v2326, %v2325
      %v2347 = vpack.c.b16 %v2328, %v2327
      %v2348 = vpack.c.b16 %v2330, %v2329
      %v2349 = vpack.c.b16 %v2332, %v2331
      %v2350 = vpack.c.b16 %v2334, %v2333
      %v2352 = vsel %vm2089, %v2335, 0
      %v2355 = vsel %vm2089, %v2336, 0
      %v2358 = vsel %vm2089, %v2337, 0
      %v2361 = vsel %vm2089, %v2338, 0
      %v2364 = vsel %vm2089, %v2339, 0
      %v2367 = vsel %vm2089, %v2340, 0
      %v2370 = vsel %vm2089, %v2341, 0
      %v2373 = vsel %vm2089, %v2342, 0
      %v2376 = vsel %vm2089, %v2343, 0
      %v2379 = vsel %vm2089, %v2344, 0
      %v2382 = vsel %vm2089, %v2345, 0
      %v2385 = vsel %vm2089, %v2346, 0
      %v2388 = vsel %vm2089, %v2347, 0
      %v2391 = vsel %vm2089, %v2348, 0
      %v2394 = vsel %vm2089, %v2349, 0
      %v2397 = vsel %vm2089, %v2350, 0
      %v2400 = vsel %vm2138, %v2038, 0
      %2402 = vmatprep.subr.bf16.mxu0 0
      %2403 = vmatpush1.bf16.msra.mxu0 %v2400
      %2404 = vmatprep.subr.bf16.mxu0 0
      %2405 = vmatpush1.bf16.msra.mxu0 0
      %2406 = vmatprep.subr.bf16.mxu0 0
      %2407 = vmatpush1.bf16.msra.mxu0 0
      %2408 = vmatprep.subr.bf16.mxu0 0
      %2409 = vmatpush1.bf16.msra.mxu0 0
      %2410 = vmatprep.subr.bf16.mxu0 0
      %2411 = vmatpush1.bf16.msra.mxu0 0
      %2412 = vmatprep.subr.bf16.mxu0 0
      %2413 = vmatpush1.bf16.msra.mxu0 0
      %2414 = vmatprep.subr.bf16.mxu0 0
      %2415 = vmatpush1.bf16.msra.mxu0 0
      %2416 = vmatprep.subr.bf16.mxu0 0
      %2417 = vmatpush1.bf16.msra.mxu0 0
      %2418 = vmatprep.subr.bf16.mxu0 0
      %2419 = vmatpush1.bf16.msra.mxu0 0
      %2420 = vmatprep.subr.bf16.mxu0 0
      %2421 = vmatpush1.bf16.msra.mxu0 0
      %2422 = vmatprep.subr.bf16.mxu0 0
      %2423 = vmatpush1.bf16.msra.mxu0 0
      %2424 = vmatprep.subr.bf16.mxu0 0
      %2425 = vmatpush1.bf16.msra.mxu0 0
      %2426 = vmatprep.subr.bf16.mxu0 0
      %2427 = vmatpush1.bf16.msra.mxu0 0
      %2428 = vmatprep.subr.bf16.mxu0 0
      %2429 = vmatpush1.bf16.msra.mxu0 0
      %2430 = vmatprep.subr.bf16.mxu0 0
      %2431 = vmatpush1.bf16.msra.mxu0 0
      %2432 = vmatprep.subr.bf16.mxu0 0
      %2433 = vmatpush1.bf16.msra.mxu0 0
      %2434 = vmatprep.mubr.bf16.mxu0 0
      %2435 = vmatmul.mubr.bf16.gmra.mrb[0].mxu0 %v2352
      %v2436 = vpop.f32.mrb[0].mxu0
      %v2437 = vadd.f32 %v2177, %v2436
      %v2438 = vpop.f32.mrb[0].mxu0
      %v2439 = vpop.f32.mrb[0].mxu0
      %v2440 = vadd.f32 %v2180, %v2439
      %v2441 = vpop.f32.mrb[0].mxu0
      %2442 = vmatprep.mubr.bf16.mxu0 0
      %2443 = vmatmul.mubr.bf16.gmra.mrb[0].mxu0 %v2355
      %v2444 = vpop.f32.mrb[0].mxu0
      %v2445 = vadd.f32 %v2185, %v2444
      %v2446 = vpop.f32.mrb[0].mxu0
      %v2447 = vpop.f32.mrb[0].mxu0
      %v2448 = vadd.f32 %v2188, %v2447
      %v2449 = vpop.f32.mrb[0].mxu0
      %2450 = vmatprep.mubr.bf16.mxu0 0
      %2451 = vmatmul.mubr.bf16.gmra.mrb[0].mxu0 %v2358
      %v2452 = vpop.f32.mrb[0].mxu0
      %v2453 = vadd.f32 %v2193, %v2452
      %v2454 = vpop.f32.mrb[0].mxu0
      %v2455 = vpop.f32.mrb[0].mxu0
      %v2456 = vadd.f32 %v2196, %v2455
      %v2457 = vpop.f32.mrb[0].mxu0
      %2458 = vmatprep.mubr.bf16.mxu0 0
      %2459 = vmatmul.mubr.bf16.gmra.mrb[0].mxu0 %v2361
      %v2460 = vpop.f32.mrb[0].mxu0
      %v2461 = vadd.f32 %v2201, %v2460
      %v2462 = vpop.f32.mrb[0].mxu0
      %v2463 = vpop.f32.mrb[0].mxu0
      %v2464 = vadd.f32 %v2204, %v2463
      %v2465 = vpop.f32.mrb[0].mxu0
      %2466 = vmatprep.mubr.bf16.mxu0 0
      %2467 = vmatmul.mubr.bf16.gmra.mrb[0].mxu0 %v2364
      %v2468 = vpop.f32.mrb[0].mxu0
      %v2469 = vadd.f32 %v2209, %v2468
      %v2470 = vpop.f32.mrb[0].mxu0
      %v2471 = vpop.f32.mrb[0].mxu0
      %v2472 = vadd.f32 %v2212, %v2471
      %v2473 = vpop.f32.mrb[0].mxu0
      %2474 = vmatprep.mubr.bf16.mxu0 0
      %2475 = vmatmul.mubr.bf16.gmra.mrb[0].mxu0 %v2367
      %v2476 = vpop.f32.mrb[0].mxu0
      %v2477 = vadd.f32 %v2217, %v2476
      %v2478 = vpop.f32.mrb[0].mxu0
      %v2479 = vpop.f32.mrb[0].mxu0
      %v2480 = vadd.f32 %v2220, %v2479
      %v2481 = vpop.f32.mrb[0].mxu0
      %2482 = vmatprep.mubr.bf16.mxu0 0
      %2483 = vmatmul.mubr.bf16.gmra.mrb[0].mxu0 %v2370
      %v2484 = vpop.f32.mrb[0].mxu0
      %v2485 = vadd.f32 %v2225, %v2484
      %v2486 = vpop.f32.mrb[0].mxu0
      %v2487 = vpop.f32.mrb[0].mxu0
      %v2488 = vadd.f32 %v2228, %v2487
      %v2489 = vpop.f32.mrb[0].mxu0
      %2490 = vmatprep.mubr.bf16.mxu0 0
      %2491 = vmatmul.mubr.bf16.gmra.mrb[0].mxu0 %v2373
      %v2492 = vpop.f32.mrb[0].mxu0
      %v2493 = vadd.f32 %v2233, %v2492
      %v2494 = vpop.f32.mrb[0].mxu0
      %v2495 = vpop.f32.mrb[0].mxu0
      %v2496 = vadd.f32 %v2236, %v2495
      %v2497 = vpop.f32.mrb[0].mxu0
      %2498 = vmatprep.mubr.bf16.mxu0 0
      %2499 = vmatmul.mubr.bf16.gmra.mrb[0].mxu0 %v2376
      %v2500 = vpop.f32.mrb[0].mxu0
      %v2501 = vadd.f32 %v2241, %v2500
      %v2502 = vpop.f32.mrb[0].mxu0
      %v2503 = vpop.f32.mrb[0].mxu0
      %v2504 = vadd.f32 %v2244, %v2503
      %v2505 = vpop.f32.mrb[0].mxu0
      %2506 = vmatprep.mubr.bf16.mxu0 0
      %2507 = vmatmul.mubr.bf16.gmra.mrb[0].mxu0 %v2379
      %v2508 = vpop.f32.mrb[0].mxu0
      %v2509 = vadd.f32 %v2249, %v2508
      %v2510 = vpop.f32.mrb[0].mxu0
      %v2511 = vpop.f32.mrb[0].mxu0
      %v2512 = vadd.f32 %v2252, %v2511
      %v2513 = vpop.f32.mrb[0].mxu0
      %2514 = vmatprep.mubr.bf16.mxu0 0
      %2515 = vmatmul.mubr.bf16.gmra.mrb[0].mxu0 %v2382
      %v2516 = vpop.f32.mrb[0].mxu0
      %v2517 = vadd.f32 %v2257, %v2516
      %v2518 = vpop.f32.mrb[0].mxu0
      %v2519 = vpop.f32.mrb[0].mxu0
      %v2520 = vadd.f32 %v2260, %v2519
      %v2521 = vpop.f32.mrb[0].mxu0
      %2522 = vmatprep.mubr.bf16.mxu0 0
      %2523 = vmatmul.mubr.bf16.gmra.mrb[0].mxu0 %v2385
      %v2524 = vpop.f32.mrb[0].mxu0
      %v2525 = vadd.f32 %v2265, %v2524
      %v2526 = vpop.f32.mrb[0].mxu0
      %v2527 = vpop.f32.mrb[0].mxu0
      %v2528 = vadd.f32 %v2268, %v2527
      %v2529 = vpop.f32.mrb[0].mxu0
      %2530 = vmatprep.mubr.bf16.mxu0 0
      %2531 = vmatmul.mubr.bf16.gmra.mrb[0].mxu0 %v2388
      %v2532 = vpop.f32.mrb[0].mxu0
      %v2533 = vadd.f32 %v2273, %v2532
      %v2534 = vpop.f32.mrb[0].mxu0
      %v2535 = vpop.f32.mrb[0].mxu0
      %v2536 = vadd.f32 %v2276, %v2535
      %v2537 = vpop.f32.mrb[0].mxu0
      %2538 = vmatprep.mubr.bf16.mxu0 0
      %2539 = vmatmul.mubr.bf16.gmra.mrb[0].mxu0 %v2391
      %v2540 = vpop.f32.mrb[0].mxu0
      %v2541 = vadd.f32 %v2281, %v2540
      %v2542 = vpop.f32.mrb[0].mxu0
      %v2543 = vpop.f32.mrb[0].mxu0
      %v2544 = vadd.f32 %v2284, %v2543
      %v2545 = vpop.f32.mrb[0].mxu0
      %2546 = vmatprep.mubr.bf16.mxu0 0
      %2547 = vmatmul.mubr.bf16.gmra.mrb[0].mxu0 %v2394
      %v2548 = vpop.f32.mrb[0].mxu0
      %v2549 = vadd.f32 %v2289, %v2548
      %v2550 = vpop.f32.mrb[0].mxu0
      %v2551 = vpop.f32.mrb[0].mxu0
      %v2552 = vadd.f32 %v2292, %v2551
      %v2553 = vpop.f32.mrb[0].mxu0
      %2554 = vmatprep.mubr.bf16.mxu0 0
      %2555 = vmatmul.mubr.bf16.gmra.mrb[0].mxu0 %v2397
      %v2556 = vpop.f32.mrb[0].mxu0
      %v2557 = vadd.f32 %v2297, %v2556
      %v2558 = vpop.f32.mrb[0].mxu0
      %v2559 = vpop.f32.mrb[0].mxu0
      %v2560 = vadd.f32 %v2300, %v2559
      %v2561 = vpop.f32.mrb[0].mxu0
      %2562 = vdwg.mxu0
      %s2563 = scalar_lea.vmem %s224, 4
      %v2564 = vld [vmem:[%s2563] sm:$0x3]
      %v2565 = vunpack.c.l.b16 %v841
      %v2566 = vunpack.c.l.b16 %v844
      %v2567 = vunpack.c.l.b16 %v848
      %v2568 = vunpack.c.l.b16 %v851
      %v2569 = vunpack.c.l.b16 %v855
      %v2570 = vunpack.c.l.b16 %v858
      %v2571 = vunpack.c.l.b16 %v862
      %v2572 = vunpack.c.l.b16 %v865
      %v2573 = vunpack.c.l.b16 %v869
      %v2574 = vunpack.c.l.b16 %v872
      %v2575 = vunpack.c.l.b16 %v876
      %v2576 = vunpack.c.l.b16 %v879
      %v2577 = vunpack.c.l.b16 %v883
      %v2578 = vunpack.c.l.b16 %v886
      %v2579 = vunpack.c.l.b16 %v890
      %v2580 = vunpack.c.l.b16 %v893
      %v2581 = vunpack.c.l.b16 %v897
      %v2582 = vunpack.c.l.b16 %v900
      %v2583 = vunpack.c.l.b16 %v904
      %v2584 = vunpack.c.l.b16 %v907
      %v2585 = vunpack.c.l.b16 %v911
      %v2586 = vunpack.c.l.b16 %v914
      %v2587 = vunpack.c.l.b16 %v918
      %v2588 = vunpack.c.l.b16 %v921
      %v2589 = vunpack.c.l.b16 %v925
      %v2590 = vunpack.c.l.b16 %v928
      %v2591 = vunpack.c.l.b16 %v932
      %v2592 = vunpack.c.l.b16 %v935
      %v2593 = vunpack.c.l.b16 %v939
      %v2594 = vunpack.c.l.b16 %v942
      %v2595 = vunpack.c.l.b16 %v946
      %v2596 = vunpack.c.l.b16 %v949
      %v2597 = vpack.c.b16 %v2566, %v2565
      %v2598 = vpack.c.b16 %v2568, %v2567
      %v2599 = vpack.c.b16 %v2570, %v2569
      %v2600 = vpack.c.b16 %v2572, %v2571
      %v2601 = vpack.c.b16 %v2574, %v2573
      %v2602 = vpack.c.b16 %v2576, %v2575
      %v2603 = vpack.c.b16 %v2578, %v2577
      %v2604 = vpack.c.b16 %v2580, %v2579
      %v2605 = vpack.c.b16 %v2582, %v2581
      %v2606 = vpack.c.b16 %v2584, %v2583
      %v2607 = vpack.c.b16 %v2586, %v2585
      %v2608 = vpack.c.b16 %v2588, %v2587
      %v2609 = vpack.c.b16 %v2590, %v2589
      %v2610 = vpack.c.b16 %v2592, %v2591
      %v2611 = vpack.c.b16 %v2594, %v2593
      %v2612 = vpack.c.b16 %v2596, %v2595
      %v2614 = vsel %vm2089, %v2597, 0
      %v2617 = vsel %vm2089, %v2598, 0
      %v2620 = vsel %vm2089, %v2599, 0
      %v2623 = vsel %vm2089, %v2600, 0
      %v2626 = vsel %vm2089, %v2601, 0
      %v2629 = vsel %vm2089, %v2602, 0
      %v2632 = vsel %vm2089, %v2603, 0
      %v2635 = vsel %vm2089, %v2604, 0
      %v2638 = vsel %vm2089, %v2605, 0
      %v2641 = vsel %vm2089, %v2606, 0
      %v2644 = vsel %vm2089, %v2607, 0
      %v2647 = vsel %vm2089, %v2608, 0
      %v2650 = vsel %vm2089, %v2609, 0
      %v2653 = vsel %vm2089, %v2610, 0
      %v2656 = vsel %vm2089, %v2611, 0
      %v2659 = vsel %vm2089, %v2612, 0
      %v2662 = vsel %vm2138, %v2564, 0
      %2664 = vmatprep.subr.bf16.mxu0 0
      %2665 = vmatpush1.bf16.msra.mxu0 %v2662
      %2666 = vmatprep.subr.bf16.mxu0 0
      %2667 = vmatpush1.bf16.msra.mxu0 0
      %2668 = vmatprep.subr.bf16.mxu0 0
      %2669 = vmatpush1.bf16.msra.mxu0 0
      %2670 = vmatprep.subr.bf16.mxu0 0
      %2671 = vmatpush1.bf16.msra.mxu0 0
      %2672 = vmatprep.subr.bf16.mxu0 0
      %2673 = vmatpush1.bf16.msra.mxu0 0
      %2674 = vmatprep.subr.bf16.mxu0 0
      %2675 = vmatpush1.bf16.msra.mxu0 0
      %2676 = vmatprep.subr.bf16.mxu0 0
      %2677 = vmatpush1.bf16.msra.mxu0 0
      %2678 = vmatprep.subr.bf16.mxu0 0
      %2679 = vmatpush1.bf16.msra.mxu0 0
      %2680 = vmatprep.subr.bf16.mxu0 0
      %2681 = vmatpush1.bf16.msra.mxu0 0
      %2682 = vmatprep.subr.bf16.mxu0 0
      %2683 = vmatpush1.bf16.msra.mxu0 0
      %2684 = vmatprep.subr.bf16.mxu0 0
      %2685 = vmatpush1.bf16.msra.mxu0 0
      %2686 = vmatprep.subr.bf16.mxu0 0
      %2687 = vmatpush1.bf16.msra.mxu0 0
      %2688 = vmatprep.subr.bf16.mxu0 0
      %2689 = vmatpush1.bf16.msra.mxu0 0
      %2690 = vmatprep.subr.bf16.mxu0 0
      %2691 = vmatpush1.bf16.msra.mxu0 0
      %2692 = vmatprep.subr.bf16.mxu0 0
      %2693 = vmatpush1.bf16.msra.mxu0 0
      %2694 = vmatprep.subr.bf16.mxu0 0
      %2695 = vmatpush1.bf16.msra.mxu0 0
      %2696 = vmatprep.mubr.bf16.mxu0 0
      %2697 = vmatmul.mubr.bf16.gmra.mrb[0].mxu0 %v2614
      %v2698 = vpop.f32.mrb[0].mxu0
      %v2699 = vadd.f32 0.0, %v2698
      %v2700 = vpop.f32.mrb[0].mxu0
      %v2701 = vpop.f32.mrb[0].mxu0
      %v2702 = vadd.f32 0.0, %v2701
      %v2703 = vpop.f32.mrb[0].mxu0
      %2704 = vmatprep.mubr.bf16.mxu0 0
      %2705 = vmatmul.mubr.bf16.gmra.mrb[0].mxu0 %v2617
      %v2706 = vpop.f32.mrb[0].mxu0
      %v2707 = vadd.f32 0.0, %v2706
      %v2708 = vpop.f32.mrb[0].mxu0
      %v2709 = vpop.f32.mrb[0].mxu0
      %v2710 = vadd.f32 0.0, %v2709
      %v2711 = vpop.f32.mrb[0].mxu0
      %2712 = vmatprep.mubr.bf16.mxu0 0
      %2713 = vmatmul.mubr.bf16.gmra.mrb[0].mxu0 %v2620
      %v2714 = vpop.f32.mrb[0].mxu0
      %v2715 = vadd.f32 0.0, %v2714
      %v2716 = vpop.f32.mrb[0].mxu0
      %v2717 = vpop.f32.mrb[0].mxu0
      %v2718 = vadd.f32 0.0, %v2717
      %v2719 = vpop.f32.mrb[0].mxu0
      %2720 = vmatprep.mubr.bf16.mxu0 0
      %2721 = vmatmul.mubr.bf16.gmra.mrb[0].mxu0 %v2623
      %v2722 = vpop.f32.mrb[0].mxu0
      %v2723 = vadd.f32 0.0, %v2722
      %v2724 = vpop.f32.mrb[0].mxu0
      %v2725 = vpop.f32.mrb[0].mxu0
      %v2726 = vadd.f32 0.0, %v2725
      %v2727 = vpop.f32.mrb[0].mxu0
      %2728 = vmatprep.mubr.bf16.mxu0 0
      %2729 = vmatmul.mubr.bf16.gmra.mrb[0].mxu0 %v2626
      %v2730 = vpop.f32.mrb[0].mxu0
      %v2731 = vadd.f32 0.0, %v2730
      %v2732 = vpop.f32.mrb[0].mxu0
      %v2733 = vpop.f32.mrb[0].mxu0
      %v2734 = vadd.f32 0.0, %v2733
      %v2735 = vpop.f32.mrb[0].mxu0
      %2736 = vmatprep.mubr.bf16.mxu0 0
      %2737 = vmatmul.mubr.bf16.gmra.mrb[0].mxu0 %v2629
      %v2738 = vpop.f32.mrb[0].mxu0
      %v2739 = vadd.f32 0.0, %v2738
      %v2740 = vpop.f32.mrb[0].mxu0
      %v2741 = vpop.f32.mrb[0].mxu0
      %v2742 = vadd.f32 0.0, %v2741
      %v2743 = vpop.f32.mrb[0].mxu0
      %2744 = vmatprep.mubr.bf16.mxu0 0
      %2745 = vmatmul.mubr.bf16.gmra.mrb[0].mxu0 %v2632
      %v2746 = vpop.f32.mrb[0].mxu0
      %v2747 = vadd.f32 0.0, %v2746
      %v2748 = vpop.f32.mrb[0].mxu0
      %v2749 = vpop.f32.mrb[0].mxu0
      %v2750 = vadd.f32 0.0, %v2749
      %v2751 = vpop.f32.mrb[0].mxu0
      %2752 = vmatprep.mubr.bf16.mxu0 0
      %2753 = vmatmul.mubr.bf16.gmra.mrb[0].mxu0 %v2635
      %v2754 = vpop.f32.mrb[0].mxu0
      %v2755 = vadd.f32 0.0, %v2754
      %v2756 = vpop.f32.mrb[0].mxu0
      %v2757 = vpop.f32.mrb[0].mxu0
      %v2758 = vadd.f32 0.0, %v2757
      %v2759 = vpop.f32.mrb[0].mxu0
      %2760 = vmatprep.mubr.bf16.mxu0 0
      %2761 = vmatmul.mubr.bf16.gmra.mrb[0].mxu0 %v2638
      %v2762 = vpop.f32.mrb[0].mxu0
      %v2763 = vadd.f32 0.0, %v2762
      %v2764 = vpop.f32.mrb[0].mxu0
      %v2765 = vpop.f32.mrb[0].mxu0
      %v2766 = vadd.f32 0.0, %v2765
      %v2767 = vpop.f32.mrb[0].mxu0
      %2768 = vmatprep.mubr.bf16.mxu0 0
      %2769 = vmatmul.mubr.bf16.gmra.mrb[0].mxu0 %v2641
      %v2770 = vpop.f32.mrb[0].mxu0
      %v2771 = vadd.f32 0.0, %v2770
      %v2772 = vpop.f32.mrb[0].mxu0
      %v2773 = vpop.f32.mrb[0].mxu0
      %v2774 = vadd.f32 0.0, %v2773
      %v2775 = vpop.f32.mrb[0].mxu0
      %2776 = vmatprep.mubr.bf16.mxu0 0
      %2777 = vmatmul.mubr.bf16.gmra.mrb[0].mxu0 %v2644
      %v2778 = vpop.f32.mrb[0].mxu0
      %v2779 = vadd.f32 0.0, %v2778
      %v2780 = vpop.f32.mrb[0].mxu0
      %v2781 = vpop.f32.mrb[0].mxu0
      %v2782 = vadd.f32 0.0, %v2781
      %v2783 = vpop.f32.mrb[0].mxu0
      %2784 = vmatprep.mubr.bf16.mxu0 0
      %2785 = vmatmul.mubr.bf16.gmra.mrb[0].mxu0 %v2647
      %v2786 = vpop.f32.mrb[0].mxu0
      %v2787 = vadd.f32 0.0, %v2786
      %v2788 = vpop.f32.mrb[0].mxu0
      %v2789 = vpop.f32.mrb[0].mxu0
      %v2790 = vadd.f32 0.0, %v2789
      %v2791 = vpop.f32.mrb[0].mxu0
      %2792 = vmatprep.mubr.bf16.mxu0 0
      %2793 = vmatmul.mubr.bf16.gmra.mrb[0].mxu0 %v2650
      %v2794 = vpop.f32.mrb[0].mxu0
      %v2795 = vadd.f32 0.0, %v2794
      %v2796 = vpop.f32.mrb[0].mxu0
      %v2797 = vpop.f32.mrb[0].mxu0
      %v2798 = vadd.f32 0.0, %v2797
      %v2799 = vpop.f32.mrb[0].mxu0
      %2800 = vmatprep.mubr.bf16.mxu0 0
      %2801 = vmatmul.mubr.bf16.gmra.mrb[0].mxu0 %v2653
      %v2802 = vpop.f32.mrb[0].mxu0
      %v2803 = vadd.f32 0.0, %v2802
      %v2804 = vpop.f32.mrb[0].mxu0
      %v2805 = vpop.f32.mrb[0].mxu0
      %v2806 = vadd.f32 0.0, %v2805
      %v2807 = vpop.f32.mrb[0].mxu0
      %2808 = vmatprep.mubr.bf16.mxu0 0
      %2809 = vmatmul.mubr.bf16.gmra.mrb[0].mxu0 %v2656
      %v2810 = vpop.f32.mrb[0].mxu0
      %v2811 = vadd.f32 0.0, %v2810
      %v2812 = vpop.f32.mrb[0].mxu0
      %v2813 = vpop.f32.mrb[0].mxu0
      %v2814 = vadd.f32 0.0, %v2813
      %v2815 = vpop.f32.mrb[0].mxu0
      %2816 = vmatprep.mubr.bf16.mxu0 0
      %2817 = vmatmul.mubr.bf16.gmra.mrb[0].mxu0 %v2659
      %v2818 = vpop.f32.mrb[0].mxu0
      %v2819 = vadd.f32 0.0, %v2818
      %v2820 = vpop.f32.mrb[0].mxu0
      %v2821 = vpop.f32.mrb[0].mxu0
      %v2822 = vadd.f32 0.0, %v2821
      %v2823 = vpop.f32.mrb[0].mxu0
      %2824 = vdwg.mxu0
      %v2825 = vadd.f32 %v2437, %v2699
      %v2826 = vadd.f32 %v2440, %v2702
      %v2827 = vadd.f32 %v2445, %v2707
      %v2828 = vadd.f32 %v2448, %v2710
      %v2829 = vadd.f32 %v2453, %v2715
      %v2830 = vadd.f32 %v2456, %v2718
      %v2831 = vadd.f32 %v2461, %v2723
      %v2832 = vadd.f32 %v2464, %v2726
      %v2833 = vadd.f32 %v2469, %v2731
      %v2834 = vadd.f32 %v2472, %v2734
      %v2835 = vadd.f32 %v2477, %v2739
      %v2836 = vadd.f32 %v2480, %v2742
      %v2837 = vadd.f32 %v2485, %v2747
      %v2838 = vadd.f32 %v2488, %v2750
      %v2839 = vadd.f32 %v2493, %v2755
      %v2840 = vadd.f32 %v2496, %v2758
      %v2841 = vadd.f32 %v2501, %v2763
      %v2842 = vadd.f32 %v2504, %v2766
      %v2843 = vadd.f32 %v2509, %v2771
      %v2844 = vadd.f32 %v2512, %v2774
      %v2845 = vadd.f32 %v2517, %v2779
      %v2846 = vadd.f32 %v2520, %v2782
      %v2847 = vadd.f32 %v2525, %v2787
      %v2848 = vadd.f32 %v2528, %v2790
      %v2849 = vadd.f32 %v2533, %v2795
      %v2850 = vadd.f32 %v2536, %v2798
      %v2851 = vadd.f32 %v2541, %v2803
      %v2852 = vadd.f32 %v2544, %v2806
      %v2853 = vadd.f32 %v2549, %v2811
      %v2854 = vadd.f32 %v2552, %v2814
      %v2855 = vadd.f32 %v2557, %v2819
      %v2856 = vadd.f32 %v2560, %v2822
      %s2857 = scalar_lea.vmem %s224, 6
      %v2858 = vld [vmem:[%s2857] sm:$0x3]
      %v2859 = vunpack.c.l.b16 %v300
      %v2860 = vunpack.c.l.b16 %v301
      %v2861 = vunpack.c.l.b16 %v303
      %v2862 = vunpack.c.l.b16 %v304
      %v2863 = vunpack.c.l.b16 %v306
      %v2864 = vunpack.c.l.b16 %v307
      %v2865 = vunpack.c.l.b16 %v309
      %v2866 = vunpack.c.l.b16 %v310
      %v2867 = vunpack.c.l.b16 %v312
      %v2868 = vunpack.c.l.b16 %v313
      %v2869 = vunpack.c.l.b16 %v315
      %v2870 = vunpack.c.l.b16 %v316
      %v2871 = vunpack.c.l.b16 %v318
      %v2872 = vunpack.c.l.b16 %v319
      %v2873 = vunpack.c.l.b16 %v321
      %v2874 = vunpack.c.l.b16 %v322
      %v2875 = vunpack.c.l.b16 %v324
      %v2876 = vunpack.c.l.b16 %v325
      %v2877 = vunpack.c.l.b16 %v327
      %v2878 = vunpack.c.l.b16 %v328
      %v2879 = vunpack.c.l.b16 %v330
      %v2880 = vunpack.c.l.b16 %v331
      %v2881 = vunpack.c.l.b16 %v333
      %v2882 = vunpack.c.l.b16 %v334
      %v2883 = vunpack.c.l.b16 %v336
      %v2884 = vunpack.c.l.b16 %v337
      %v2885 = vunpack.c.l.b16 %v339
      %v2886 = vunpack.c.l.b16 %v340
      %v2887 = vunpack.c.l.b16 %v342
      %v2888 = vunpack.c.l.b16 %v343
      %v2889 = vunpack.c.l.b16 %v345
      %v2890 = vunpack.c.l.b16 %v346
      %v2891 = vpack.c.b16 %v2860, %v2859
      %v2892 = vpack.c.b16 %v2862, %v2861
      %v2893 = vpack.c.b16 %v2864, %v2863
      %v2894 = vpack.c.b16 %v2866, %v2865
      %v2895 = vpack.c.b16 %v2868, %v2867
      %v2896 = vpack.c.b16 %v2870, %v2869
      %v2897 = vpack.c.b16 %v2872, %v2871
      %v2898 = vpack.c.b16 %v2874, %v2873
      %v2899 = vpack.c.b16 %v2876, %v2875
      %v2900 = vpack.c.b16 %v2878, %v2877
      %v2901 = vpack.c.b16 %v2880, %v2879
      %v2902 = vpack.c.b16 %v2882, %v2881
      %v2903 = vpack.c.b16 %v2884, %v2883
      %v2904 = vpack.c.b16 %v2886, %v2885
      %v2905 = vpack.c.b16 %v2888, %v2887
      %v2906 = vpack.c.b16 %v2890, %v2889
      %v2908 = vsel %vm2089, %v2891, 0
      %v2911 = vsel %vm2089, %v2892, 0
      %v2914 = vsel %vm2089, %v2893, 0
      %v2917 = vsel %vm2089, %v2894, 0
      %v2920 = vsel %vm2089, %v2895, 0
      %v2923 = vsel %vm2089, %v2896, 0
      %v2926 = vsel %vm2089, %v2897, 0
      %v2929 = vsel %vm2089, %v2898, 0
      %v2932 = vsel %vm2089, %v2899, 0
      %v2935 = vsel %vm2089, %v2900, 0
      %v2938 = vsel %vm2089, %v2901, 0
      %v2941 = vsel %vm2089, %v2902, 0
      %v2944 = vsel %vm2089, %v2903, 0
      %v2947 = vsel %vm2089, %v2904, 0
      %v2950 = vsel %vm2089, %v2905, 0
      %v2953 = vsel %vm2089, %v2906, 0
      %v2956 = vsel %vm2138, %v2858, 0
      %2958 = vmatprep.subr.bf16.mxu0 0
      %2959 = vmatpush1.bf16.msra.mxu0 %v2956
      %2960 = vmatprep.subr.bf16.mxu0 0
      %2961 = vmatpush1.bf16.msra.mxu0 0
      %2962 = vmatprep.subr.bf16.mxu0 0
      %2963 = vmatpush1.bf16.msra.mxu0 0
      %2964 = vmatprep.subr.bf16.mxu0 0
      %2965 = vmatpush1.bf16.msra.mxu0 0
      %2966 = vmatprep.subr.bf16.mxu0 0
      %2967 = vmatpush1.bf16.msra.mxu0 0
      %2968 = vmatprep.subr.bf16.mxu0 0
      %2969 = vmatpush1.bf16.msra.mxu0 0
      %2970 = vmatprep.subr.bf16.mxu0 0
      %2971 = vmatpush1.bf16.msra.mxu0 0
      %2972 = vmatprep.subr.bf16.mxu0 0
      %2973 = vmatpush1.bf16.msra.mxu0 0
      %2974 = vmatprep.subr.bf16.mxu0 0
      %2975 = vmatpush1.bf16.msra.mxu0 0
      %2976 = vmatprep.subr.bf16.mxu0 0
      %2977 = vmatpush1.bf16.msra.mxu0 0
      %2978 = vmatprep.subr.bf16.mxu0 0
      %2979 = vmatpush1.bf16.msra.mxu0 0
      %2980 = vmatprep.subr.bf16.mxu0 0
      %2981 = vmatpush1.bf16.msra.mxu0 0
      %2982 = vmatprep.subr.bf16.mxu0 0
      %2983 = vmatpush1.bf16.msra.mxu0 0
      %2984 = vmatprep.subr.bf16.mxu0 0
      %2985 = vmatpush1.bf16.msra.mxu0 0
      %2986 = vmatprep.subr.bf16.mxu0 0
      %2987 = vmatpush1.bf16.msra.mxu0 0
      %2988 = vmatprep.subr.bf16.mxu0 0
      %2989 = vmatpush1.bf16.msra.mxu0 0
      %2990 = vmatprep.mubr.bf16.mxu0 0
      %2991 = vmatmul.mubr.bf16.gmra.mrb[0].mxu0 %v2908
      %v2992 = vpop.f32.mrb[0].mxu0
      %v2993 = vadd.f32 0.0, %v2992
      %v2994 = vpop.f32.mrb[0].mxu0
      %v2995 = vpop.f32.mrb[0].mxu0
      %v2996 = vadd.f32 0.0, %v2995
      %v2997 = vpop.f32.mrb[0].mxu0
      %2998 = vmatprep.mubr.bf16.mxu0 0
      %2999 = vmatmul.mubr.bf16.gmra.mrb[0].mxu0 %v2911
      %v3000 = vpop.f32.mrb[0].mxu0
      %v3001 = vadd.f32 0.0, %v3000
      %v3002 = vpop.f32.mrb[0].mxu0
      %v3003 = vpop.f32.mrb[0].mxu0
      %v3004 = vadd.f32 0.0, %v3003
      %v3005 = vpop.f32.mrb[0].mxu0
      %3006 = vmatprep.mubr.bf16.mxu0 0
      %3007 = vmatmul.mubr.bf16.gmra.mrb[0].mxu0 %v2914
      %v3008 = vpop.f32.mrb[0].mxu0
      %v3009 = vadd.f32 0.0, %v3008
      %v3010 = vpop.f32.mrb[0].mxu0
      %v3011 = vpop.f32.mrb[0].mxu0
      %v3012 = vadd.f32 0.0, %v3011
      %v3013 = vpop.f32.mrb[0].mxu0
      %3014 = vmatprep.mubr.bf16.mxu0 0
      %3015 = vmatmul.mubr.bf16.gmra.mrb[0].mxu0 %v2917
      %v3016 = vpop.f32.mrb[0].mxu0
      %v3017 = vadd.f32 0.0, %v3016
      %v3018 = vpop.f32.mrb[0].mxu0
      %v3019 = vpop.f32.mrb[0].mxu0
      %v3020 = vadd.f32 0.0, %v3019
      %v3021 = vpop.f32.mrb[0].mxu0
      %3022 = vmatprep.mubr.bf16.mxu0 0
      %3023 = vmatmul.mubr.bf16.gmra.mrb[0].mxu0 %v2920
      %v3024 = vpop.f32.mrb[0].mxu0
      %v3025 = vadd.f32 0.0, %v3024
      %v3026 = vpop.f32.mrb[0].mxu0
      %v3027 = vpop.f32.mrb[0].mxu0
      %v3028 = vadd.f32 0.0, %v3027
      %v3029 = vpop.f32.mrb[0].mxu0
      %3030 = vmatprep.mubr.bf16.mxu0 0
      %3031 = vmatmul.mubr.bf16.gmra.mrb[0].mxu0 %v2923
      %v3032 = vpop.f32.mrb[0].mxu0
      %v3033 = vadd.f32 0.0, %v3032
      %v3034 = vpop.f32.mrb[0].mxu0
      %v3035 = vpop.f32.mrb[0].mxu0
      %v3036 = vadd.f32 0.0, %v3035
      %v3037 = vpop.f32.mrb[0].mxu0
      %3038 = vmatprep.mubr.bf16.mxu0 0
      %3039 = vmatmul.mubr.bf16.gmra.mrb[0].mxu0 %v2926
      %v3040 = vpop.f32.mrb[0].mxu0
      %v3041 = vadd.f32 0.0, %v3040
      %v3042 = vpop.f32.mrb[0].mxu0
      %v3043 = vpop.f32.mrb[0].mxu0
      %v3044 = vadd.f32 0.0, %v3043
      %v3045 = vpop.f32.mrb[0].mxu0
      %3046 = vmatprep.mubr.bf16.mxu0 0
      %3047 = vmatmul.mubr.bf16.gmra.mrb[0].mxu0 %v2929
      %v3048 = vpop.f32.mrb[0].mxu0
      %v3049 = vadd.f32 0.0, %v3048
      %v3050 = vpop.f32.mrb[0].mxu0
      %v3051 = vpop.f32.mrb[0].mxu0
      %v3052 = vadd.f32 0.0, %v3051
      %v3053 = vpop.f32.mrb[0].mxu0
      %3054 = vmatprep.mubr.bf16.mxu0 0
      %3055 = vmatmul.mubr.bf16.gmra.mrb[0].mxu0 %v2932
      %v3056 = vpop.f32.mrb[0].mxu0
      %v3057 = vadd.f32 0.0, %v3056
      %v3058 = vpop.f32.mrb[0].mxu0
      %v3059 = vpop.f32.mrb[0].mxu0
      %v3060 = vadd.f32 0.0, %v3059
      %v3061 = vpop.f32.mrb[0].mxu0
      %3062 = vmatprep.mubr.bf16.mxu0 0
      %3063 = vmatmul.mubr.bf16.gmra.mrb[0].mxu0 %v2935
      %v3064 = vpop.f32.mrb[0].mxu0
      %v3065 = vadd.f32 0.0, %v3064
      %v3066 = vpop.f32.mrb[0].mxu0
      %v3067 = vpop.f32.mrb[0].mxu0
      %v3068 = vadd.f32 0.0, %v3067
      %v3069 = vpop.f32.mrb[0].mxu0
      %3070 = vmatprep.mubr.bf16.mxu0 0
      %3071 = vmatmul.mubr.bf16.gmra.mrb[0].mxu0 %v2938
      %v3072 = vpop.f32.mrb[0].mxu0
      %v3073 = vadd.f32 0.0, %v3072
      %v3074 = vpop.f32.mrb[0].mxu0
      %v3075 = vpop.f32.mrb[0].mxu0
      %v3076 = vadd.f32 0.0, %v3075
      %v3077 = vpop.f32.mrb[0].mxu0
      %3078 = vmatprep.mubr.bf16.mxu0 0
      %3079 = vmatmul.mubr.bf16.gmra.mrb[0].mxu0 %v2941
      %v3080 = vpop.f32.mrb[0].mxu0
      %v3081 = vadd.f32 0.0, %v3080
      %v3082 = vpop.f32.mrb[0].mxu0
      %v3083 = vpop.f32.mrb[0].mxu0
      %v3084 = vadd.f32 0.0, %v3083
      %v3085 = vpop.f32.mrb[0].mxu0
      %3086 = vmatprep.mubr.bf16.mxu0 0
      %3087 = vmatmul.mubr.bf16.gmra.mrb[0].mxu0 %v2944
      %v3088 = vpop.f32.mrb[0].mxu0
      %v3089 = vadd.f32 0.0, %v3088
      %v3090 = vpop.f32.mrb[0].mxu0
      %v3091 = vpop.f32.mrb[0].mxu0
      %v3092 = vadd.f32 0.0, %v3091
      %v3093 = vpop.f32.mrb[0].mxu0
      %3094 = vmatprep.mubr.bf16.mxu0 0
      %3095 = vmatmul.mubr.bf16.gmra.mrb[0].mxu0 %v2947
      %v3096 = vpop.f32.mrb[0].mxu0
      %v3097 = vadd.f32 0.0, %v3096
      %v3098 = vpop.f32.mrb[0].mxu0
      %v3099 = vpop.f32.mrb[0].mxu0
      %v3100 = vadd.f32 0.0, %v3099
      %v3101 = vpop.f32.mrb[0].mxu0
      %3102 = vmatprep.mubr.bf16.mxu0 0
      %3103 = vmatmul.mubr.bf16.gmra.mrb[0].mxu0 %v2950
      %v3104 = vpop.f32.mrb[0].mxu0
      %v3105 = vadd.f32 0.0, %v3104
      %v3106 = vpop.f32.mrb[0].mxu0
      %v3107 = vpop.f32.mrb[0].mxu0
      %v3108 = vadd.f32 0.0, %v3107
      %v3109 = vpop.f32.mrb[0].mxu0
      %3110 = vmatprep.mubr.bf16.mxu0 0
      %3111 = vmatmul.mubr.bf16.gmra.mrb[0].mxu0 %v2953
      %v3112 = vpop.f32.mrb[0].mxu0
      %v3113 = vadd.f32 0.0, %v3112
      %v3114 = vpop.f32.mrb[0].mxu0
      %v3115 = vpop.f32.mrb[0].mxu0
      %v3116 = vadd.f32 0.0, %v3115
      %v3117 = vpop.f32.mrb[0].mxu0
      %3118 = vdwg.mxu0
      %v3119 = vadd.f32 %v2825, %v2993
      %v3120 = vadd.f32 %v2826, %v2996
      %v3121 = vadd.f32 %v2827, %v3001
      %v3122 = vadd.f32 %v2828, %v3004
      %v3123 = vadd.f32 %v2829, %v3009
      %v3124 = vadd.f32 %v2830, %v3012
      %v3125 = vadd.f32 %v2831, %v3017
      %v3126 = vadd.f32 %v2832, %v3020
      %v3127 = vadd.f32 %v2833, %v3025
      %v3128 = vadd.f32 %v2834, %v3028
      %v3129 = vadd.f32 %v2835, %v3033
      %v3130 = vadd.f32 %v2836, %v3036
      %v3131 = vadd.f32 %v2837, %v3041
      %v3132 = vadd.f32 %v2838, %v3044
      %v3133 = vadd.f32 %v2839, %v3049
      %v3134 = vadd.f32 %v2840, %v3052
      %v3135 = vadd.f32 %v2841, %v3057
      %v3136 = vadd.f32 %v2842, %v3060
      %v3137 = vadd.f32 %v2843, %v3065
      %v3138 = vadd.f32 %v2844, %v3068
      %v3139 = vadd.f32 %v2845, %v3073
      %v3140 = vadd.f32 %v2846, %v3076
      %v3141 = vadd.f32 %v2847, %v3081
      %v3142 = vadd.f32 %v2848, %v3084
      %v3143 = vadd.f32 %v2849, %v3089
      %v3144 = vadd.f32 %v2850, %v3092
      %v3145 = vadd.f32 %v2851, %v3097
      %v3146 = vadd.f32 %v2852, %v3100
      %v3147 = vadd.f32 %v2853, %v3105
      %v3148 = vadd.f32 %v2854, %v3108
      %v3149 = vadd.f32 %v2855, %v3113
      %v3150 = vadd.f32 %v2856, %v3116
      %s3151 = scalar_lea.vmem %s224, 8
      %v3152 = vld [vmem:[%s3151] sm:$0x3]
      %v3153 = vunpack.c.l.b16 %v963
      %v3154 = vunpack.c.l.b16 %v973
      %v3155 = vunpack.c.l.b16 %v987
      %v3156 = vunpack.c.l.b16 %v997
      %v3157 = vunpack.c.l.b16 %v1011
      %v3158 = vunpack.c.l.b16 %v1021
      %v3159 = vunpack.c.l.b16 %v1035
      %v3160 = vunpack.c.l.b16 %v1045
      %v3161 = vunpack.c.l.b16 %v1059
      %v3162 = vunpack.c.l.b16 %v1069
      %v3163 = vunpack.c.l.b16 %v1083
      %v3164 = vunpack.c.l.b16 %v1093
      %v3165 = vunpack.c.l.b16 %v1107
      %v3166 = vunpack.c.l.b16 %v1117
      %v3167 = vunpack.c.l.b16 %v1131
      %v3168 = vunpack.c.l.b16 %v1141
      %v3169 = vunpack.c.l.b16 %v1155
      %v3170 = vunpack.c.l.b16 %v1165
      %v3171 = vunpack.c.l.b16 %v1179
      %v3172 = vunpack.c.l.b16 %v1189
      %v3173 = vunpack.c.l.b16 %v1203
      %v3174 = vunpack.c.l.b16 %v1213
      %v3175 = vunpack.c.l.b16 %v1227
      %v3176 = vunpack.c.l.b16 %v1237
      %v3177 = vunpack.c.l.b16 %v1251
      %v3178 = vunpack.c.l.b16 %v1261
      %v3179 = vunpack.c.l.b16 %v1275
      %v3180 = vunpack.c.l.b16 %v1285
      %v3181 = vunpack.c.l.b16 %v1299
      %v3182 = vunpack.c.l.b16 %v1309
      %v3183 = vunpack.c.l.b16 %v1323
      %v3184 = vunpack.c.l.b16 %v1333
      %v3185 = vpack.c.b16 %v3154, %v3153
      %v3186 = vpack.c.b16 %v3156, %v3155
      %v3187 = vpack.c.b16 %v3158, %v3157
      %v3188 = vpack.c.b16 %v3160, %v3159
      %v3189 = vpack.c.b16 %v3162, %v3161
      %v3190 = vpack.c.b16 %v3164, %v3163
      %v3191 = vpack.c.b16 %v3166, %v3165
      %v3192 = vpack.c.b16 %v3168, %v3167
      %v3193 = vpack.c.b16 %v3170, %v3169
      %v3194 = vpack.c.b16 %v3172, %v3171
      %v3195 = vpack.c.b16 %v3174, %v3173
      %v3196 = vpack.c.b16 %v3176, %v3175
      %v3197 = vpack.c.b16 %v3178, %v3177
      %v3198 = vpack.c.b16 %v3180, %v3179
      %v3199 = vpack.c.b16 %v3182, %v3181
      %v3200 = vpack.c.b16 %v3184, %v3183
      %v3202 = vsel %vm2089, %v3185, 0
      %v3205 = vsel %vm2089, %v3186, 0
      %v3208 = vsel %vm2089, %v3187, 0
      %v3211 = vsel %vm2089, %v3188, 0
      %v3214 = vsel %vm2089, %v3189, 0
      %v3217 = vsel %vm2089, %v3190, 0
      %v3220 = vsel %vm2089, %v3191, 0
      %v3223 = vsel %vm2089, %v3192, 0
      %v3226 = vsel %vm2089, %v3193, 0
      %v3229 = vsel %vm2089, %v3194, 0
      %v3232 = vsel %vm2089, %v3195, 0
      %v3235 = vsel %vm2089, %v3196, 0
      %v3238 = vsel %vm2089, %v3197, 0
      %v3241 = vsel %vm2089, %v3198, 0
      %v3244 = vsel %vm2089, %v3199, 0
      %v3247 = vsel %vm2089, %v3200, 0
      %v3250 = vsel %vm2138, %v3152, 0
      %3252 = vmatprep.subr.bf16.mxu0 0
      %3253 = vmatpush1.bf16.msra.mxu0 %v3250
      %3254 = vmatprep.subr.bf16.mxu0 0
      %3255 = vmatpush1.bf16.msra.mxu0 0
      %3256 = vmatprep.subr.bf16.mxu0 0
      %3257 = vmatpush1.bf16.msra.mxu0 0
      %3258 = vmatprep.subr.bf16.mxu0 0
      %3259 = vmatpush1.bf16.msra.mxu0 0
      %3260 = vmatprep.subr.bf16.mxu0 0
      %3261 = vmatpush1.bf16.msra.mxu0 0
      %3262 = vmatprep.subr.bf16.mxu0 0
      %3263 = vmatpush1.bf16.msra.mxu0 0
      %3264 = vmatprep.subr.bf16.mxu0 0
      %3265 = vmatpush1.bf16.msra.mxu0 0
      %3266 = vmatprep.subr.bf16.mxu0 0
      %3267 = vmatpush1.bf16.msra.mxu0 0
      %3268 = vmatprep.subr.bf16.mxu0 0
      %3269 = vmatpush1.bf16.msra.mxu0 0
      %3270 = vmatprep.subr.bf16.mxu0 0
      %3271 = vmatpush1.bf16.msra.mxu0 0
      %3272 = vmatprep.subr.bf16.mxu0 0
      %3273 = vmatpush1.bf16.msra.mxu0 0
      %3274 = vmatprep.subr.bf16.mxu0 0
      %3275 = vmatpush1.bf16.msra.mxu0 0
      %3276 = vmatprep.subr.bf16.mxu0 0
      %3277 = vmatpush1.bf16.msra.mxu0 0
      %3278 = vmatprep.subr.bf16.mxu0 0
      %3279 = vmatpush1.bf16.msra.mxu0 0
      %3280 = vmatprep.subr.bf16.mxu0 0
      %3281 = vmatpush1.bf16.msra.mxu0 0
      %3282 = vmatprep.subr.bf16.mxu0 0
      %3283 = vmatpush1.bf16.msra.mxu0 0
      %3284 = vmatprep.mubr.bf16.mxu0 0
      %3285 = vmatmul.mubr.bf16.gmra.mrb[0].mxu0 %v3202
      %v3286 = vpop.f32.mrb[0].mxu0
      %v3287 = vadd.f32 0.0, %v3286
      %v3288 = vpop.f32.mrb[0].mxu0
      %v3289 = vpop.f32.mrb[0].mxu0
      %v3290 = vadd.f32 0.0, %v3289
      %v3291 = vpop.f32.mrb[0].mxu0
      %3292 = vmatprep.mubr.bf16.mxu0 0
      %3293 = vmatmul.mubr.bf16.gmra.mrb[0].mxu0 %v3205
      %v3294 = vpop.f32.mrb[0].mxu0
      %v3295 = vadd.f32 0.0, %v3294
      %v3296 = vpop.f32.mrb[0].mxu0
      %v3297 = vpop.f32.mrb[0].mxu0
      %v3298 = vadd.f32 0.0, %v3297
      %v3299 = vpop.f32.mrb[0].mxu0
      %3300 = vmatprep.mubr.bf16.mxu0 0
      %3301 = vmatmul.mubr.bf16.gmra.mrb[0].mxu0 %v3208
      %v3302 = vpop.f32.mrb[0].mxu0
      %v3303 = vadd.f32 0.0, %v3302
      %v3304 = vpop.f32.mrb[0].mxu0
      %v3305 = vpop.f32.mrb[0].mxu0
      %v3306 = vadd.f32 0.0, %v3305
      %v3307 = vpop.f32.mrb[0].mxu0
      %3308 = vmatprep.mubr.bf16.mxu0 0
      %3309 = vmatmul.mubr.bf16.gmra.mrb[0].mxu0 %v3211
      %v3310 = vpop.f32.mrb[0].mxu0
      %v3311 = vadd.f32 0.0, %v3310
      %v3312 = vpop.f32.mrb[0].mxu0
      %v3313 = vpop.f32.mrb[0].mxu0
      %v3314 = vadd.f32 0.0, %v3313
      %v3315 = vpop.f32.mrb[0].mxu0
      %3316 = vmatprep.mubr.bf16.mxu0 0
      %3317 = vmatmul.mubr.bf16.gmra.mrb[0].mxu0 %v3214
      %v3318 = vpop.f32.mrb[0].mxu0
      %v3319 = vadd.f32 0.0, %v3318
      %v3320 = vpop.f32.mrb[0].mxu0
      %v3321 = vpop.f32.mrb[0].mxu0
      %v3322 = vadd.f32 0.0, %v3321
      %v3323 = vpop.f32.mrb[0].mxu0
      %3324 = vmatprep.mubr.bf16.mxu0 0
      %3325 = vmatmul.mubr.bf16.gmra.mrb[0].mxu0 %v3217
      %v3326 = vpop.f32.mrb[0].mxu0
      %v3327 = vadd.f32 0.0, %v3326
      %v3328 = vpop.f32.mrb[0].mxu0
      %v3329 = vpop.f32.mrb[0].mxu0
      %v3330 = vadd.f32 0.0, %v3329
      %v3331 = vpop.f32.mrb[0].mxu0
      %3332 = vmatprep.mubr.bf16.mxu0 0
      %3333 = vmatmul.mubr.bf16.gmra.mrb[0].mxu0 %v3220
      %v3334 = vpop.f32.mrb[0].mxu0
      %v3335 = vadd.f32 0.0, %v3334
      %v3336 = vpop.f32.mrb[0].mxu0
      %v3337 = vpop.f32.mrb[0].mxu0
      %v3338 = vadd.f32 0.0, %v3337
      %v3339 = vpop.f32.mrb[0].mxu0
      %3340 = vmatprep.mubr.bf16.mxu0 0
      %3341 = vmatmul.mubr.bf16.gmra.mrb[0].mxu0 %v3223
      %v3342 = vpop.f32.mrb[0].mxu0
      %v3343 = vadd.f32 0.0, %v3342
      %v3344 = vpop.f32.mrb[0].mxu0
      %v3345 = vpop.f32.mrb[0].mxu0
      %v3346 = vadd.f32 0.0, %v3345
      %v3347 = vpop.f32.mrb[0].mxu0
      %3348 = vmatprep.mubr.bf16.mxu0 0
      %3349 = vmatmul.mubr.bf16.gmra.mrb[0].mxu0 %v3226
      %v3350 = vpop.f32.mrb[0].mxu0
      %v3351 = vadd.f32 0.0, %v3350
      %v3352 = vpop.f32.mrb[0].mxu0
      %v3353 = vpop.f32.mrb[0].mxu0
      %v3354 = vadd.f32 0.0, %v3353
      %v3355 = vpop.f32.mrb[0].mxu0
      %3356 = vmatprep.mubr.bf16.mxu0 0
      %3357 = vmatmul.mubr.bf16.gmra.mrb[0].mxu0 %v3229
      %v3358 = vpop.f32.mrb[0].mxu0
      %v3359 = vadd.f32 0.0, %v3358
      %v3360 = vpop.f32.mrb[0].mxu0
      %v3361 = vpop.f32.mrb[0].mxu0
      %v3362 = vadd.f32 0.0, %v3361
      %v3363 = vpop.f32.mrb[0].mxu0
      %3364 = vmatprep.mubr.bf16.mxu0 0
      %3365 = vmatmul.mubr.bf16.gmra.mrb[0].mxu0 %v3232
      %v3366 = vpop.f32.mrb[0].mxu0
      %v3367 = vadd.f32 0.0, %v3366
      %v3368 = vpop.f32.mrb[0].mxu0
      %v3369 = vpop.f32.mrb[0].mxu0
      %v3370 = vadd.f32 0.0, %v3369
      %v3371 = vpop.f32.mrb[0].mxu0
      %3372 = vmatprep.mubr.bf16.mxu0 0
      %3373 = vmatmul.mubr.bf16.gmra.mrb[0].mxu0 %v3235
      %v3374 = vpop.f32.mrb[0].mxu0
      %v3375 = vadd.f32 0.0, %v3374
      %v3376 = vpop.f32.mrb[0].mxu0
      %v3377 = vpop.f32.mrb[0].mxu0
      %v3378 = vadd.f32 0.0, %v3377
      %v3379 = vpop.f32.mrb[0].mxu0
      %3380 = vmatprep.mubr.bf16.mxu0 0
      %3381 = vmatmul.mubr.bf16.gmra.mrb[0].mxu0 %v3238
      %v3382 = vpop.f32.mrb[0].mxu0
      %v3383 = vadd.f32 0.0, %v3382
      %v3384 = vpop.f32.mrb[0].mxu0
      %v3385 = vpop.f32.mrb[0].mxu0
      %v3386 = vadd.f32 0.0, %v3385
      %v3387 = vpop.f32.mrb[0].mxu0
      %3388 = vmatprep.mubr.bf16.mxu0 0
      %3389 = vmatmul.mubr.bf16.gmra.mrb[0].mxu0 %v3241
      %v3390 = vpop.f32.mrb[0].mxu0
      %v3391 = vadd.f32 0.0, %v3390
      %v3392 = vpop.f32.mrb[0].mxu0
      %v3393 = vpop.f32.mrb[0].mxu0
      %v3394 = vadd.f32 0.0, %v3393
      %v3395 = vpop.f32.mrb[0].mxu0
      %3396 = vmatprep.mubr.bf16.mxu0 0
      %3397 = vmatmul.mubr.bf16.gmra.mrb[0].mxu0 %v3244
      %v3398 = vpop.f32.mrb[0].mxu0
      %v3399 = vadd.f32 0.0, %v3398
      %v3400 = vpop.f32.mrb[0].mxu0
      %v3401 = vpop.f32.mrb[0].mxu0
      %v3402 = vadd.f32 0.0, %v3401
      %v3403 = vpop.f32.mrb[0].mxu0
      %3404 = vmatprep.mubr.bf16.mxu0 0
      %3405 = vmatmul.mubr.bf16.gmra.mrb[0].mxu0 %v3247
      %v3406 = vpop.f32.mrb[0].mxu0
      %v3407 = vadd.f32 0.0, %v3406
      %v3408 = vpop.f32.mrb[0].mxu0
      %v3409 = vpop.f32.mrb[0].mxu0
      %v3410 = vadd.f32 0.0, %v3409
      %v3411 = vpop.f32.mrb[0].mxu0
      %3412 = vdwg.mxu0
      %v3413 = vadd.f32 %v3119, %v3287
      %v3414 = vadd.f32 %v3120, %v3290
      %v3415 = vadd.f32 %v3121, %v3295
      %v3416 = vadd.f32 %v3122, %v3298
      %v3417 = vadd.f32 %v3123, %v3303
      %v3418 = vadd.f32 %v3124, %v3306
      %v3419 = vadd.f32 %v3125, %v3311
      %v3420 = vadd.f32 %v3126, %v3314
      %v3421 = vadd.f32 %v3127, %v3319
      %v3422 = vadd.f32 %v3128, %v3322
      %v3423 = vadd.f32 %v3129, %v3327
      %v3424 = vadd.f32 %v3130, %v3330
      %v3425 = vadd.f32 %v3131, %v3335
      %v3426 = vadd.f32 %v3132, %v3338
      %v3427 = vadd.f32 %v3133, %v3343
      %v3428 = vadd.f32 %v3134, %v3346
      %v3429 = vadd.f32 %v3135, %v3351
      %v3430 = vadd.f32 %v3136, %v3354
      %v3431 = vadd.f32 %v3137, %v3359
      %v3432 = vadd.f32 %v3138, %v3362
      %v3433 = vadd.f32 %v3139, %v3367
      %v3434 = vadd.f32 %v3140, %v3370
      %v3435 = vadd.f32 %v3141, %v3375
      %v3436 = vadd.f32 %v3142, %v3378
      %v3437 = vadd.f32 %v3143, %v3383
      %v3438 = vadd.f32 %v3144, %v3386
      %v3439 = vadd.f32 %v3145, %v3391
      %v3440 = vadd.f32 %v3146, %v3394
      %v3441 = vadd.f32 %v3147, %v3399
      %v3442 = vadd.f32 %v3148, %v3402
      %v3443 = vadd.f32 %v3149, %v3407
      %v3444 = vadd.f32 %v3150, %v3410
      %s3445 = scalar_lea.vmem %s224, 10
      %v3446 = vld [vmem:[%s3445] sm:$0x3]
      %v3447 = vunpack.c.l.b16 %v1385
      %v3448 = vunpack.c.l.b16 %v1388
      %v3449 = vunpack.c.l.b16 %v1392
      %v3450 = vunpack.c.l.b16 %v1395
      %v3451 = vunpack.c.l.b16 %v1399
      %v3452 = vunpack.c.l.b16 %v1402
      %v3453 = vunpack.c.l.b16 %v1406
      %v3454 = vunpack.c.l.b16 %v1409
      %v3455 = vunpack.c.l.b16 %v1413
      %v3456 = vunpack.c.l.b16 %v1416
      %v3457 = vunpack.c.l.b16 %v1420
      %v3458 = vunpack.c.l.b16 %v1423
      %v3459 = vunpack.c.l.b16 %v1427
      %v3460 = vunpack.c.l.b16 %v1430
      %v3461 = vunpack.c.l.b16 %v1434
      %v3462 = vunpack.c.l.b16 %v1437
      %v3463 = vunpack.c.l.b16 %v1441
      %v3464 = vunpack.c.l.b16 %v1444
      %v3465 = vunpack.c.l.b16 %v1448
      %v3466 = vunpack.c.l.b16 %v1451
      %v3467 = vunpack.c.l.b16 %v1455
      %v3468 = vunpack.c.l.b16 %v1458
      %v3469 = vunpack.c.l.b16 %v1462
      %v3470 = vunpack.c.l.b16 %v1465
      %v3471 = vunpack.c.l.b16 %v1469
      %v3472 = vunpack.c.l.b16 %v1472
      %v3473 = vunpack.c.l.b16 %v1476
      %v3474 = vunpack.c.l.b16 %v1479
      %v3475 = vunpack.c.l.b16 %v1483
      %v3476 = vunpack.c.l.b16 %v1486
      %v3477 = vunpack.c.l.b16 %v1490
      %v3478 = vunpack.c.l.b16 %v1493
      %v3479 = vpack.c.b16 %v3448, %v3447
      %v3480 = vpack.c.b16 %v3450, %v3449
      %v3481 = vpack.c.b16 %v3452, %v3451
      %v3482 = vpack.c.b16 %v3454, %v3453
      %v3483 = vpack.c.b16 %v3456, %v3455
      %v3484 = vpack.c.b16 %v3458, %v3457
      %v3485 = vpack.c.b16 %v3460, %v3459
      %v3486 = vpack.c.b16 %v3462, %v3461
      %v3487 = vpack.c.b16 %v3464, %v3463
      %v3488 = vpack.c.b16 %v3466, %v3465
      %v3489 = vpack.c.b16 %v3468, %v3467
      %v3490 = vpack.c.b16 %v3470, %v3469
      %v3491 = vpack.c.b16 %v3472, %v3471
      %v3492 = vpack.c.b16 %v3474, %v3473
      %v3493 = vpack.c.b16 %v3476, %v3475
      %v3494 = vpack.c.b16 %v3478, %v3477
      %v3496 = vsel %vm2089, %v3479, 0
      %v3499 = vsel %vm2089, %v3480, 0
      %v3502 = vsel %vm2089, %v3481, 0
      %v3505 = vsel %vm2089, %v3482, 0
      %v3508 = vsel %vm2089, %v3483, 0
      %v3511 = vsel %vm2089, %v3484, 0
      %v3514 = vsel %vm2089, %v3485, 0
      %v3517 = vsel %vm2089, %v3486, 0
      %v3520 = vsel %vm2089, %v3487, 0
      %v3523 = vsel %vm2089, %v3488, 0
      %v3526 = vsel %vm2089, %v3489, 0
      %v3529 = vsel %vm2089, %v3490, 0
      %v3532 = vsel %vm2089, %v3491, 0
      %v3535 = vsel %vm2089, %v3492, 0
      %v3538 = vsel %vm2089, %v3493, 0
      %v3541 = vsel %vm2089, %v3494, 0
      %v3544 = vsel %vm2138, %v3446, 0
      %3546 = vmatprep.subr.bf16.mxu0 0
      %3547 = vmatpush1.bf16.msra.mxu0 %v3544
      %3548 = vmatprep.subr.bf16.mxu0 0
      %3549 = vmatpush1.bf16.msra.mxu0 0
      %3550 = vmatprep.subr.bf16.mxu0 0
      %3551 = vmatpush1.bf16.msra.mxu0 0
      %3552 = vmatprep.subr.bf16.mxu0 0
      %3553 = vmatpush1.bf16.msra.mxu0 0
      %3554 = vmatprep.subr.bf16.mxu0 0
      %3555 = vmatpush1.bf16.msra.mxu0 0
      %3556 = vmatprep.subr.bf16.mxu0 0
      %3557 = vmatpush1.bf16.msra.mxu0 0
      %3558 = vmatprep.subr.bf16.mxu0 0
      %3559 = vmatpush1.bf16.msra.mxu0 0
      %3560 = vmatprep.subr.bf16.mxu0 0
      %3561 = vmatpush1.bf16.msra.mxu0 0
      %3562 = vmatprep.subr.bf16.mxu0 0
      %3563 = vmatpush1.bf16.msra.mxu0 0
      %3564 = vmatprep.subr.bf16.mxu0 0
      %3565 = vmatpush1.bf16.msra.mxu0 0
      %3566 = vmatprep.subr.bf16.mxu0 0
      %3567 = vmatpush1.bf16.msra.mxu0 0
      %3568 = vmatprep.subr.bf16.mxu0 0
      %3569 = vmatpush1.bf16.msra.mxu0 0
      %3570 = vmatprep.subr.bf16.mxu0 0
      %3571 = vmatpush1.bf16.msra.mxu0 0
      %3572 = vmatprep.subr.bf16.mxu0 0
      %3573 = vmatpush1.bf16.msra.mxu0 0
      %3574 = vmatprep.subr.bf16.mxu0 0
      %3575 = vmatpush1.bf16.msra.mxu0 0
      %3576 = vmatprep.subr.bf16.mxu0 0
      %3577 = vmatpush1.bf16.msra.mxu0 0
      %3578 = vmatprep.mubr.bf16.mxu0 0
      %3579 = vmatmul.mubr.bf16.gmra.mrb[0].mxu0 %v3496
      %v3580 = vpop.f32.mrb[0].mxu0
      %v3581 = vadd.f32 0.0, %v3580
      %v3582 = vpop.f32.mrb[0].mxu0
      %v3583 = vpop.f32.mrb[0].mxu0
      %v3584 = vadd.f32 0.0, %v3583
      %v3585 = vpop.f32.mrb[0].mxu0
      %3586 = vmatprep.mubr.bf16.mxu0 0
      %3587 = vmatmul.mubr.bf16.gmra.mrb[0].mxu0 %v3499
      %v3588 = vpop.f32.mrb[0].mxu0
      %v3589 = vadd.f32 0.0, %v3588
      %v3590 = vpop.f32.mrb[0].mxu0
      %v3591 = vpop.f32.mrb[0].mxu0
      %v3592 = vadd.f32 0.0, %v3591
      %v3593 = vpop.f32.mrb[0].mxu0
      %3594 = vmatprep.mubr.bf16.mxu0 0
      %3595 = vmatmul.mubr.bf16.gmra.mrb[0].mxu0 %v3502
      %v3596 = vpop.f32.mrb[0].mxu0
      %v3597 = vadd.f32 0.0, %v3596
      %v3598 = vpop.f32.mrb[0].mxu0
      %v3599 = vpop.f32.mrb[0].mxu0
      %v3600 = vadd.f32 0.0, %v3599
      %v3601 = vpop.f32.mrb[0].mxu0
      %3602 = vmatprep.mubr.bf16.mxu0 0
      %3603 = vmatmul.mubr.bf16.gmra.mrb[0].mxu0 %v3505
      %v3604 = vpop.f32.mrb[0].mxu0
      %v3605 = vadd.f32 0.0, %v3604
      %v3606 = vpop.f32.mrb[0].mxu0
      %v3607 = vpop.f32.mrb[0].mxu0
      %v3608 = vadd.f32 0.0, %v3607
      %v3609 = vpop.f32.mrb[0].mxu0
      %3610 = vmatprep.mubr.bf16.mxu0 0
      %3611 = vmatmul.mubr.bf16.gmra.mrb[0].mxu0 %v3508
      %v3612 = vpop.f32.mrb[0].mxu0
      %v3613 = vadd.f32 0.0, %v3612
      %v3614 = vpop.f32.mrb[0].mxu0
      %v3615 = vpop.f32.mrb[0].mxu0
      %v3616 = vadd.f32 0.0, %v3615
      %v3617 = vpop.f32.mrb[0].mxu0
      %3618 = vmatprep.mubr.bf16.mxu0 0
      %3619 = vmatmul.mubr.bf16.gmra.mrb[0].mxu0 %v3511
      %v3620 = vpop.f32.mrb[0].mxu0
      %v3621 = vadd.f32 0.0, %v3620
      %v3622 = vpop.f32.mrb[0].mxu0
      %v3623 = vpop.f32.mrb[0].mxu0
      %v3624 = vadd.f32 0.0, %v3623
      %v3625 = vpop.f32.mrb[0].mxu0
      %3626 = vmatprep.mubr.bf16.mxu0 0
      %3627 = vmatmul.mubr.bf16.gmra.mrb[0].mxu0 %v3514
      %v3628 = vpop.f32.mrb[0].mxu0
      %v3629 = vadd.f32 0.0, %v3628
      %v3630 = vpop.f32.mrb[0].mxu0
      %v3631 = vpop.f32.mrb[0].mxu0
      %v3632 = vadd.f32 0.0, %v3631
      %v3633 = vpop.f32.mrb[0].mxu0
      %3634 = vmatprep.mubr.bf16.mxu0 0
      %3635 = vmatmul.mubr.bf16.gmra.mrb[0].mxu0 %v3517
      %v3636 = vpop.f32.mrb[0].mxu0
      %v3637 = vadd.f32 0.0, %v3636
      %v3638 = vpop.f32.mrb[0].mxu0
      %v3639 = vpop.f32.mrb[0].mxu0
      %v3640 = vadd.f32 0.0, %v3639
      %v3641 = vpop.f32.mrb[0].mxu0
      %3642 = vmatprep.mubr.bf16.mxu0 0
      %3643 = vmatmul.mubr.bf16.gmra.mrb[0].mxu0 %v3520
      %v3644 = vpop.f32.mrb[0].mxu0
      %v3645 = vadd.f32 0.0, %v3644
      %v3646 = vpop.f32.mrb[0].mxu0
      %v3647 = vpop.f32.mrb[0].mxu0
      %v3648 = vadd.f32 0.0, %v3647
      %v3649 = vpop.f32.mrb[0].mxu0
      %3650 = vmatprep.mubr.bf16.mxu0 0
      %3651 = vmatmul.mubr.bf16.gmra.mrb[0].mxu0 %v3523
      %v3652 = vpop.f32.mrb[0].mxu0
      %v3653 = vadd.f32 0.0, %v3652
      %v3654 = vpop.f32.mrb[0].mxu0
      %v3655 = vpop.f32.mrb[0].mxu0
      %v3656 = vadd.f32 0.0, %v3655
      %v3657 = vpop.f32.mrb[0].mxu0
      %3658 = vmatprep.mubr.bf16.mxu0 0
      %3659 = vmatmul.mubr.bf16.gmra.mrb[0].mxu0 %v3526
      %v3660 = vpop.f32.mrb[0].mxu0
      %v3661 = vadd.f32 0.0, %v3660
      %v3662 = vpop.f32.mrb[0].mxu0
      %v3663 = vpop.f32.mrb[0].mxu0
      %v3664 = vadd.f32 0.0, %v3663
      %v3665 = vpop.f32.mrb[0].mxu0
      %3666 = vmatprep.mubr.bf16.mxu0 0
      %3667 = vmatmul.mubr.bf16.gmra.mrb[0].mxu0 %v3529
      %v3668 = vpop.f32.mrb[0].mxu0
      %v3669 = vadd.f32 0.0, %v3668
      %v3670 = vpop.f32.mrb[0].mxu0
      %v3671 = vpop.f32.mrb[0].mxu0
      %v3672 = vadd.f32 0.0, %v3671
      %v3673 = vpop.f32.mrb[0].mxu0
      %3674 = vmatprep.mubr.bf16.mxu0 0
      %3675 = vmatmul.mubr.bf16.gmra.mrb[0].mxu0 %v3532
      %v3676 = vpop.f32.mrb[0].mxu0
      %v3677 = vadd.f32 0.0, %v3676
      %v3678 = vpop.f32.mrb[0].mxu0
      %v3679 = vpop.f32.mrb[0].mxu0
      %v3680 = vadd.f32 0.0, %v3679
      %v3681 = vpop.f32.mrb[0].mxu0
      %3682 = vmatprep.mubr.bf16.mxu0 0
      %3683 = vmatmul.mubr.bf16.gmra.mrb[0].mxu0 %v3535
      %v3684 = vpop.f32.mrb[0].mxu0
      %v3685 = vadd.f32 0.0, %v3684
      %v3686 = vpop.f32.mrb[0].mxu0
      %v3687 = vpop.f32.mrb[0].mxu0
      %v3688 = vadd.f32 0.0, %v3687
      %v3689 = vpop.f32.mrb[0].mxu0
      %3690 = vmatprep.mubr.bf16.mxu0 0
      %3691 = vmatmul.mubr.bf16.gmra.mrb[0].mxu0 %v3538
      %v3692 = vpop.f32.mrb[0].mxu0
      %v3693 = vadd.f32 0.0, %v3692
      %v3694 = vpop.f32.mrb[0].mxu0
      %v3695 = vpop.f32.mrb[0].mxu0
      %v3696 = vadd.f32 0.0, %v3695
      %v3697 = vpop.f32.mrb[0].mxu0
      %3698 = vmatprep.mubr.bf16.mxu0 0
      %3699 = vmatmul.mubr.bf16.gmra.mrb[0].mxu0 %v3541
      %v3700 = vpop.f32.mrb[0].mxu0
      %v3701 = vadd.f32 0.0, %v3700
      %v3702 = vpop.f32.mrb[0].mxu0
      %v3703 = vpop.f32.mrb[0].mxu0
      %v3704 = vadd.f32 0.0, %v3703
      %v3705 = vpop.f32.mrb[0].mxu0
      %3706 = vdwg.mxu0
      %v3707 = vadd.f32 %v3413, %v3581
      %v3708 = vadd.f32 %v3414, %v3584
      %v3709 = vadd.f32 %v3415, %v3589
      %v3710 = vadd.f32 %v3416, %v3592
      %v3711 = vadd.f32 %v3417, %v3597
      %v3712 = vadd.f32 %v3418, %v3600
      %v3713 = vadd.f32 %v3419, %v3605
      %v3714 = vadd.f32 %v3420, %v3608
      %v3715 = vadd.f32 %v3421, %v3613
      %v3716 = vadd.f32 %v3422, %v3616
      %v3717 = vadd.f32 %v3423, %v3621
      %v3718 = vadd.f32 %v3424, %v3624
      %v3719 = vadd.f32 %v3425, %v3629
      %v3720 = vadd.f32 %v3426, %v3632
      %v3721 = vadd.f32 %v3427, %v3637
      %v3722 = vadd.f32 %v3428, %v3640
      %v3723 = vadd.f32 %v3429, %v3645
      %v3724 = vadd.f32 %v3430, %v3648
      %v3725 = vadd.f32 %v3431, %v3653
      %v3726 = vadd.f32 %v3432, %v3656
      %v3727 = vadd.f32 %v3433, %v3661
      %v3728 = vadd.f32 %v3434, %v3664
      %v3729 = vadd.f32 %v3435, %v3669
      %v3730 = vadd.f32 %v3436, %v3672
      %v3731 = vadd.f32 %v3437, %v3677
      %v3732 = vadd.f32 %v3438, %v3680
      %v3733 = vadd.f32 %v3439, %v3685
      %v3734 = vadd.f32 %v3440, %v3688
      %v3735 = vadd.f32 %v3441, %v3693
      %v3736 = vadd.f32 %v3442, %v3696
      %v3737 = vadd.f32 %v3443, %v3701
      %v3738 = vadd.f32 %v3444, %v3704
      %v3740 = vlaneseq
      %v3741 = vshrl.u32 %v3740, 7
      %v3742 = vsub.s32 0, %v3741
      %v3743 = vrot.slane %v244, %v3742
      %v3745 = vadd.f32 %v3707, %v3743
      %v3746 = vadd.f32 %v3708, %v3743
      %v3747 = vadd.f32 %v3709, %v3743
      %v3748 = vadd.f32 %v3710, %v3743
      %v3749 = vadd.f32 %v3711, %v3743
      %v3750 = vadd.f32 %v3712, %v3743
      %v3751 = vadd.f32 %v3713, %v3743
      %v3752 = vadd.f32 %v3714, %v3743
      %v3753 = vadd.f32 %v3715, %v3743
      %v3754 = vadd.f32 %v3716, %v3743
      %v3755 = vadd.f32 %v3717, %v3743
      %v3756 = vadd.f32 %v3718, %v3743
      %v3757 = vadd.f32 %v3719, %v3743
      %v3758 = vadd.f32 %v3720, %v3743
      %v3759 = vadd.f32 %v3721, %v3743
      %v3760 = vadd.f32 %v3722, %v3743
      %v3761 = vadd.f32 %v3723, %v3743
      %v3762 = vadd.f32 %v3724, %v3743
      %v3763 = vadd.f32 %v3725, %v3743
      %v3764 = vadd.f32 %v3726, %v3743
      %v3765 = vadd.f32 %v3727, %v3743
      %v3766 = vadd.f32 %v3728, %v3743
      %v3767 = vadd.f32 %v3729, %v3743
      %v3768 = vadd.f32 %v3730, %v3743
      %v3769 = vadd.f32 %v3731, %v3743
      %v3770 = vadd.f32 %v3732, %v3743
      %v3771 = vadd.f32 %v3733, %v3743
      %v3772 = vadd.f32 %v3734, %v3743
      %v3773 = vadd.f32 %v3735, %v3743
      %v3774 = vadd.f32 %v3736, %v3743
      %v3775 = vadd.f32 %v3737, %v3743
      %v3776 = vadd.f32 %v3738, %v3743
      %vm3777 = vcmask 64512
      %3778 = vst.msk [vmem:[%s240] sm:$0xff] %vm3777, %v3745
      %3779 = vst.msk [vmem:[%s240 + $0x8] sm:$0xff] %vm3777, %v3746
      %3780 = vst.msk [vmem:[%s240 + $0x20] sm:$0xff] %vm3777, %v3747
      %3781 = vst.msk [vmem:[%s240 + $0x28] sm:$0xff] %vm3777, %v3748
      %3782 = vst.msk [vmem:[%s240 + $0x40] sm:$0xff] %vm3777, %v3749
      %3783 = vst.msk [vmem:[%s240 + $0x48] sm:$0xff] %vm3777, %v3750
      %3784 = vst.msk [vmem:[%s240 + $0x60] sm:$0xff] %vm3777, %v3751
      %3785 = vst.msk [vmem:[%s240 + $0x68] sm:$0xff] %vm3777, %v3752
      %3786 = vst.msk [vmem:[%s240 + $0x80] sm:$0xff] %vm3777, %v3753
      %3787 = vst.msk [vmem:[%s240 + $0x88] sm:$0xff] %vm3777, %v3754
      %3788 = vst.msk [vmem:[%s240 + $0xa0] sm:$0xff] %vm3777, %v3755
      %3789 = vst.msk [vmem:[%s240 + $0xa8] sm:$0xff] %vm3777, %v3756
      %3790 = vst.msk [vmem:[%s240 + $0xc0] sm:$0xff] %vm3777, %v3757
      %3791 = vst.msk [vmem:[%s240 + $0xc8] sm:$0xff] %vm3777, %v3758
      %3792 = vst.msk [vmem:[%s240 + $0xe0] sm:$0xff] %vm3777, %v3759
      %3793 = vst.msk [vmem:[%s240 + $0xe8] sm:$0xff] %vm3777, %v3760
      %3794 = vst.msk [vmem:[%s240 + $0x100] sm:$0xff] %vm3777, %v3761
      %3795 = vst.msk [vmem:[%s240 + $0x108] sm:$0xff] %vm3777, %v3762
      %3796 = vst.msk [vmem:[%s240 + $0x120] sm:$0xff] %vm3777, %v3763
      %3797 = vst.msk [vmem:[%s240 + $0x128] sm:$0xff] %vm3777, %v3764
      %3798 = vst.msk [vmem:[%s240 + $0x140] sm:$0xff] %vm3777, %v3765
      %3799 = vst.msk [vmem:[%s240 + $0x148] sm:$0xff] %vm3777, %v3766
      %3800 = vst.msk [vmem:[%s240 + $0x160] sm:$0xff] %vm3777, %v3767
      %3801 = vst.msk [vmem:[%s240 + $0x168] sm:$0xff] %vm3777, %v3768
      %3802 = vst.msk [vmem:[%s240 + $0x180] sm:$0xff] %vm3777, %v3769
      %3803 = vst.msk [vmem:[%s240 + $0x188] sm:$0xff] %vm3777, %v3770
      %3804 = vst.msk [vmem:[%s240 + $0x1a0] sm:$0xff] %vm3777, %v3771
      %3805 = vst.msk [vmem:[%s240 + $0x1a8] sm:$0xff] %vm3777, %v3772
      %3806 = vst.msk [vmem:[%s240 + $0x1c0] sm:$0xff] %vm3777, %v3773
      %3807 = vst.msk [vmem:[%s240 + $0x1c8] sm:$0xff] %vm3777, %v3774
      %3808 = vst.msk [vmem:[%s240 + $0x1e0] sm:$0xff] %vm3777, %v3775
      %3809 = vst.msk [vmem:[%s240 + $0x1e8] sm:$0xff] %vm3777, %v3776
      %s3810 = scalar_lea.vmem %s224, 12
      %v3811 = vld [vmem:[%s3810] sm:$0x3]
      %s3812 = scalar_lea.vmem %s224, 14
      %v3813 = vld [vmem:[%s3812] sm:$0x3]
      %v3815 = vsel %vm2138, %v3813, 0
      %3817 = vmatprep.subr.bf16.mxu0 0
      %3818 = vmatpush1.bf16.msra.mxu0 %v3815
      %3819 = vmatprep.subr.bf16.mxu0 0
      %3820 = vmatpush1.bf16.msra.mxu0 0
      %3821 = vmatprep.subr.bf16.mxu0 0
      %3822 = vmatpush1.bf16.msra.mxu0 0
      %3823 = vmatprep.subr.bf16.mxu0 0
      %3824 = vmatpush1.bf16.msra.mxu0 0
      %3825 = vmatprep.subr.bf16.mxu0 0
      %3826 = vmatpush1.bf16.msra.mxu0 0
      %3827 = vmatprep.subr.bf16.mxu0 0
      %3828 = vmatpush1.bf16.msra.mxu0 0
      %3829 = vmatprep.subr.bf16.mxu0 0
      %3830 = vmatpush1.bf16.msra.mxu0 0
      %3831 = vmatprep.subr.bf16.mxu0 0
      %3832 = vmatpush1.bf16.msra.mxu0 0
      %3833 = vmatprep.subr.bf16.mxu0 0
      %3834 = vmatpush1.bf16.msra.mxu0 0
      %3835 = vmatprep.subr.bf16.mxu0 0
      %3836 = vmatpush1.bf16.msra.mxu0 0
      %3837 = vmatprep.subr.bf16.mxu0 0
      %3838 = vmatpush1.bf16.msra.mxu0 0
      %3839 = vmatprep.subr.bf16.mxu0 0
      %3840 = vmatpush1.bf16.msra.mxu0 0
      %3841 = vmatprep.subr.bf16.mxu0 0
      %3842 = vmatpush1.bf16.msra.mxu0 0
      %3843 = vmatprep.subr.bf16.mxu0 0
      %3844 = vmatpush1.bf16.msra.mxu0 0
      %3845 = vmatprep.subr.bf16.mxu0 0
      %3846 = vmatpush1.bf16.msra.mxu0 0
      %3847 = vmatprep.subr.bf16.mxu0 0
      %3848 = vmatpush1.bf16.msra.mxu0 0
      %3849 = vmatprep.mubr.bf16.mxu0 0
      %3850 = vmatmul.mubr.bf16.gmra.mrb[0].mxu0 %v3202
      %v3851 = vpop.f32.mrb[0].mxu0
      %v3852 = vadd.f32 0.0, %v3851
      %v3853 = vpop.f32.mrb[0].mxu0
      %v3854 = vpop.f32.mrb[0].mxu0
      %v3855 = vadd.f32 0.0, %v3854
      %v3856 = vpop.f32.mrb[0].mxu0
      %3857 = vmatprep.mubr.bf16.mxu0 0
      %3858 = vmatmul.mubr.bf16.gmra.mrb[0].mxu0 %v3205
      %v3859 = vpop.f32.mrb[0].mxu0
      %v3860 = vadd.f32 0.0, %v3859
      %v3861 = vpop.f32.mrb[0].mxu0
      %v3862 = vpop.f32.mrb[0].mxu0
      %v3863 = vadd.f32 0.0, %v3862
      %v3864 = vpop.f32.mrb[0].mxu0
      %3865 = vmatprep.mubr.bf16.mxu0 0
      %3866 = vmatmul.mubr.bf16.gmra.mrb[0].mxu0 %v3208
      %v3867 = vpop.f32.mrb[0].mxu0
      %v3868 = vadd.f32 0.0, %v3867
      %v3869 = vpop.f32.mrb[0].mxu0
      %v3870 = vpop.f32.mrb[0].mxu0
      %v3871 = vadd.f32 0.0, %v3870
      %v3872 = vpop.f32.mrb[0].mxu0
      %3873 = vmatprep.mubr.bf16.mxu0 0
      %3874 = vmatmul.mubr.bf16.gmra.mrb[0].mxu0 %v3211
      %v3875 = vpop.f32.mrb[0].mxu0
      %v3876 = vadd.f32 0.0, %v3875
      %v3877 = vpop.f32.mrb[0].mxu0
      %v3878 = vpop.f32.mrb[0].mxu0
      %v3879 = vadd.f32 0.0, %v3878
      %v3880 = vpop.f32.mrb[0].mxu0
      %3881 = vmatprep.mubr.bf16.mxu0 0
      %3882 = vmatmul.mubr.bf16.gmra.mrb[0].mxu0 %v3214
      %v3883 = vpop.f32.mrb[0].mxu0
      %v3884 = vadd.f32 0.0, %v3883
      %v3885 = vpop.f32.mrb[0].mxu0
      %v3886 = vpop.f32.mrb[0].mxu0
      %v3887 = vadd.f32 0.0, %v3886
      %v3888 = vpop.f32.mrb[0].mxu0
      %3889 = vmatprep.mubr.bf16.mxu0 0
      %3890 = vmatmul.mubr.bf16.gmra.mrb[0].mxu0 %v3217
      %v3891 = vpop.f32.mrb[0].mxu0
      %v3892 = vadd.f32 0.0, %v3891
      %v3893 = vpop.f32.mrb[0].mxu0
      %v3894 = vpop.f32.mrb[0].mxu0
      %v3895 = vadd.f32 0.0, %v3894
      %v3896 = vpop.f32.mrb[0].mxu0
      %3897 = vmatprep.mubr.bf16.mxu0 0
      %3898 = vmatmul.mubr.bf16.gmra.mrb[0].mxu0 %v3220
      %v3899 = vpop.f32.mrb[0].mxu0
      %v3900 = vadd.f32 0.0, %v3899
      %v3901 = vpop.f32.mrb[0].mxu0
      %v3902 = vpop.f32.mrb[0].mxu0
      %v3903 = vadd.f32 0.0, %v3902
      %v3904 = vpop.f32.mrb[0].mxu0
      %3905 = vmatprep.mubr.bf16.mxu0 0
      %3906 = vmatmul.mubr.bf16.gmra.mrb[0].mxu0 %v3223
      %v3907 = vpop.f32.mrb[0].mxu0
      %v3908 = vadd.f32 0.0, %v3907
      %v3909 = vpop.f32.mrb[0].mxu0
      %v3910 = vpop.f32.mrb[0].mxu0
      %v3911 = vadd.f32 0.0, %v3910
      %v3912 = vpop.f32.mrb[0].mxu0
      %3913 = vmatprep.mubr.bf16.mxu0 0
      %3914 = vmatmul.mubr.bf16.gmra.mrb[0].mxu0 %v3226
      %v3915 = vpop.f32.mrb[0].mxu0
      %v3916 = vadd.f32 0.0, %v3915
      %v3917 = vpop.f32.mrb[0].mxu0
      %v3918 = vpop.f32.mrb[0].mxu0
      %v3919 = vadd.f32 0.0, %v3918
      %v3920 = vpop.f32.mrb[0].mxu0
      %3921 = vmatprep.mubr.bf16.mxu0 0
      %3922 = vmatmul.mubr.bf16.gmra.mrb[0].mxu0 %v3229
      %v3923 = vpop.f32.mrb[0].mxu0
      %v3924 = vadd.f32 0.0, %v3923
      %v3925 = vpop.f32.mrb[0].mxu0
      %v3926 = vpop.f32.mrb[0].mxu0
      %v3927 = vadd.f32 0.0, %v3926
      %v3928 = vpop.f32.mrb[0].mxu0
      %3929 = vmatprep.mubr.bf16.mxu0 0
      %3930 = vmatmul.mubr.bf16.gmra.mrb[0].mxu0 %v3232
      %v3931 = vpop.f32.mrb[0].mxu0
      %v3932 = vadd.f32 0.0, %v3931
      %v3933 = vpop.f32.mrb[0].mxu0
      %v3934 = vpop.f32.mrb[0].mxu0
      %v3935 = vadd.f32 0.0, %v3934
      %v3936 = vpop.f32.mrb[0].mxu0
      %3937 = vmatprep.mubr.bf16.mxu0 0
      %3938 = vmatmul.mubr.bf16.gmra.mrb[0].mxu0 %v3235
      %v3939 = vpop.f32.mrb[0].mxu0
      %v3940 = vadd.f32 0.0, %v3939
      %v3941 = vpop.f32.mrb[0].mxu0
      %v3942 = vpop.f32.mrb[0].mxu0
      %v3943 = vadd.f32 0.0, %v3942
      %v3944 = vpop.f32.mrb[0].mxu0
      %3945 = vmatprep.mubr.bf16.mxu0 0
      %3946 = vmatmul.mubr.bf16.gmra.mrb[0].mxu0 %v3238
      %v3947 = vpop.f32.mrb[0].mxu0
      %v3948 = vadd.f32 0.0, %v3947
      %v3949 = vpop.f32.mrb[0].mxu0
      %v3950 = vpop.f32.mrb[0].mxu0
      %v3951 = vadd.f32 0.0, %v3950
      %v3952 = vpop.f32.mrb[0].mxu0
      %3953 = vmatprep.mubr.bf16.mxu0 0
      %3954 = vmatmul.mubr.bf16.gmra.mrb[0].mxu0 %v3241
      %v3955 = vpop.f32.mrb[0].mxu0
      %v3956 = vadd.f32 0.0, %v3955
      %v3957 = vpop.f32.mrb[0].mxu0
      %v3958 = vpop.f32.mrb[0].mxu0
      %v3959 = vadd.f32 0.0, %v3958
      %v3960 = vpop.f32.mrb[0].mxu0
      %3961 = vmatprep.mubr.bf16.mxu0 0
      %3962 = vmatmul.mubr.bf16.gmra.mrb[0].mxu0 %v3244
      %v3963 = vpop.f32.mrb[0].mxu0
      %v3964 = vadd.f32 0.0, %v3963
      %v3965 = vpop.f32.mrb[0].mxu0
      %v3966 = vpop.f32.mrb[0].mxu0
      %v3967 = vadd.f32 0.0, %v3966
      %v3968 = vpop.f32.mrb[0].mxu0
      %3969 = vmatprep.mubr.bf16.mxu0 0
      %3970 = vmatmul.mubr.bf16.gmra.mrb[0].mxu0 %v3247
      %v3971 = vpop.f32.mrb[0].mxu0
      %v3972 = vadd.f32 0.0, %v3971
      %v3973 = vpop.f32.mrb[0].mxu0
      %v3974 = vpop.f32.mrb[0].mxu0
      %v3975 = vadd.f32 0.0, %v3974
      %v3976 = vpop.f32.mrb[0].mxu0
      %3977 = vdwg.mxu0
      %v3979 = vsel %vm2138, %v3811, 0
      %3981 = vmatprep.subr.bf16.mxu0 0
      %3982 = vmatpush1.bf16.msra.mxu0 %v3979
      %3983 = vmatprep.subr.bf16.mxu0 0
      %3984 = vmatpush1.bf16.msra.mxu0 0
      %3985 = vmatprep.subr.bf16.mxu0 0
      %3986 = vmatpush1.bf16.msra.mxu0 0
      %3987 = vmatprep.subr.bf16.mxu0 0
      %3988 = vmatpush1.bf16.msra.mxu0 0
      %3989 = vmatprep.subr.bf16.mxu0 0
      %3990 = vmatpush1.bf16.msra.mxu0 0
      %3991 = vmatprep.subr.bf16.mxu0 0
      %3992 = vmatpush1.bf16.msra.mxu0 0
      %3993 = vmatprep.subr.bf16.mxu0 0
      %3994 = vmatpush1.bf16.msra.mxu0 0
      %3995 = vmatprep.subr.bf16.mxu0 0
      %3996 = vmatpush1.bf16.msra.mxu0 0
      %3997 = vmatprep.subr.bf16.mxu0 0
      %3998 = vmatpush1.bf16.msra.mxu0 0
      %3999 = vmatprep.subr.bf16.mxu0 0
      %4000 = vmatpush1.bf16.msra.mxu0 0
      %4001 = vmatprep.subr.bf16.mxu0 0
      %4002 = vmatpush1.bf16.msra.mxu0 0
      %4003 = vmatprep.subr.bf16.mxu0 0
      %4004 = vmatpush1.bf16.msra.mxu0 0
      %4005 = vmatprep.subr.bf16.mxu0 0
      %4006 = vmatpush1.bf16.msra.mxu0 0
      %4007 = vmatprep.subr.bf16.mxu0 0
      %4008 = vmatpush1.bf16.msra.mxu0 0
      %4009 = vmatprep.subr.bf16.mxu0 0
      %4010 = vmatpush1.bf16.msra.mxu0 0
      %4011 = vmatprep.subr.bf16.mxu0 0
      %4012 = vmatpush1.bf16.msra.mxu0 0
      %4013 = vmatprep.mubr.bf16.mxu0 0
      %4014 = vmatmul.mubr.bf16.gmra.mrb[0].mxu0 %v2908
      %v4015 = vpop.f32.mrb[0].mxu0
      %v4016 = vadd.f32 %v3852, %v4015
      %v4017 = vpop.f32.mrb[0].mxu0
      %v4018 = vpop.f32.mrb[0].mxu0
      %v4019 = vadd.f32 %v3855, %v4018
      %v4020 = vpop.f32.mrb[0].mxu0
      %4021 = vmatprep.mubr.bf16.mxu0 0
      %4022 = vmatmul.mubr.bf16.gmra.mrb[0].mxu0 %v2911
      %v4023 = vpop.f32.mrb[0].mxu0
      %v4024 = vadd.f32 %v3860, %v4023
      %v4025 = vpop.f32.mrb[0].mxu0
      %v4026 = vpop.f32.mrb[0].mxu0
      %v4027 = vadd.f32 %v3863, %v4026
      %v4028 = vpop.f32.mrb[0].mxu0
      %4029 = vmatprep.mubr.bf16.mxu0 0
      %4030 = vmatmul.mubr.bf16.gmra.mrb[0].mxu0 %v2914
      %v4031 = vpop.f32.mrb[0].mxu0
      %v4032 = vadd.f32 %v3868, %v4031
      %v4033 = vpop.f32.mrb[0].mxu0
      %v4034 = vpop.f32.mrb[0].mxu0
      %v4035 = vadd.f32 %v3871, %v4034
      %v4036 = vpop.f32.mrb[0].mxu0
      %4037 = vmatprep.mubr.bf16.mxu0 0
      %4038 = vmatmul.mubr.bf16.gmra.mrb[0].mxu0 %v2917
      %v4039 = vpop.f32.mrb[0].mxu0
      %v4040 = vadd.f32 %v3876, %v4039
      %v4041 = vpop.f32.mrb[0].mxu0
      %v4042 = vpop.f32.mrb[0].mxu0
      %v4043 = vadd.f32 %v3879, %v4042
      %v4044 = vpop.f32.mrb[0].mxu0
      %4045 = vmatprep.mubr.bf16.mxu0 0
      %4046 = vmatmul.mubr.bf16.gmra.mrb[0].mxu0 %v2920
      %v4047 = vpop.f32.mrb[0].mxu0
      %v4048 = vadd.f32 %v3884, %v4047
      %v4049 = vpop.f32.mrb[0].mxu0
      %v4050 = vpop.f32.mrb[0].mxu0
      %v4051 = vadd.f32 %v3887, %v4050
      %v4052 = vpop.f32.mrb[0].mxu0
      %4053 = vmatprep.mubr.bf16.mxu0 0
      %4054 = vmatmul.mubr.bf16.gmra.mrb[0].mxu0 %v2923
      %v4055 = vpop.f32.mrb[0].mxu0
      %v4056 = vadd.f32 %v3892, %v4055
      %v4057 = vpop.f32.mrb[0].mxu0
      %v4058 = vpop.f32.mrb[0].mxu0
      %v4059 = vadd.f32 %v3895, %v4058
      %v4060 = vpop.f32.mrb[0].mxu0
      %4061 = vmatprep.mubr.bf16.mxu0 0
      %4062 = vmatmul.mubr.bf16.gmra.mrb[0].mxu0 %v2926
      %v4063 = vpop.f32.mrb[0].mxu0
      %v4064 = vadd.f32 %v3900, %v4063
      %v4065 = vpop.f32.mrb[0].mxu0
      %v4066 = vpop.f32.mrb[0].mxu0
      %v4067 = vadd.f32 %v3903, %v4066
      %v4068 = vpop.f32.mrb[0].mxu0
      %4069 = vmatprep.mubr.bf16.mxu0 0
      %4070 = vmatmul.mubr.bf16.gmra.mrb[0].mxu0 %v2929
      %v4071 = vpop.f32.mrb[0].mxu0
      %v4072 = vadd.f32 %v3908, %v4071
      %v4073 = vpop.f32.mrb[0].mxu0
      %v4074 = vpop.f32.mrb[0].mxu0
      %v4075 = vadd.f32 %v3911, %v4074
      %v4076 = vpop.f32.mrb[0].mxu0
      %4077 = vmatprep.mubr.bf16.mxu0 0
      %4078 = vmatmul.mubr.bf16.gmra.mrb[0].mxu0 %v2932
      %v4079 = vpop.f32.mrb[0].mxu0
      %v4080 = vadd.f32 %v3916, %v4079
      %v4081 = vpop.f32.mrb[0].mxu0
      %v4082 = vpop.f32.mrb[0].mxu0
      %v4083 = vadd.f32 %v3919, %v4082
      %v4084 = vpop.f32.mrb[0].mxu0
      %4085 = vmatprep.mubr.bf16.mxu0 0
      %4086 = vmatmul.mubr.bf16.gmra.mrb[0].mxu0 %v2935
      %v4087 = vpop.f32.mrb[0].mxu0
      %v4088 = vadd.f32 %v3924, %v4087
      %v4089 = vpop.f32.mrb[0].mxu0
      %v4090 = vpop.f32.mrb[0].mxu0
      %v4091 = vadd.f32 %v3927, %v4090
      %v4092 = vpop.f32.mrb[0].mxu0
      %4093 = vmatprep.mubr.bf16.mxu0 0
      %4094 = vmatmul.mubr.bf16.gmra.mrb[0].mxu0 %v2938
      %v4095 = vpop.f32.mrb[0].mxu0
      %v4096 = vadd.f32 %v3932, %v4095
      %v4097 = vpop.f32.mrb[0].mxu0
      %v4098 = vpop.f32.mrb[0].mxu0
      %v4099 = vadd.f32 %v3935, %v4098
      %v4100 = vpop.f32.mrb[0].mxu0
      %4101 = vmatprep.mubr.bf16.mxu0 0
      %4102 = vmatmul.mubr.bf16.gmra.mrb[0].mxu0 %v2941
      %v4103 = vpop.f32.mrb[0].mxu0
      %v4104 = vadd.f32 %v3940, %v4103
      %v4105 = vpop.f32.mrb[0].mxu0
      %v4106 = vpop.f32.mrb[0].mxu0
      %v4107 = vadd.f32 %v3943, %v4106
      %v4108 = vpop.f32.mrb[0].mxu0
      %4109 = vmatprep.mubr.bf16.mxu0 0
      %4110 = vmatmul.mubr.bf16.gmra.mrb[0].mxu0 %v2944
      %v4111 = vpop.f32.mrb[0].mxu0
      %v4112 = vadd.f32 %v3948, %v4111
      %v4113 = vpop.f32.mrb[0].mxu0
      %v4114 = vpop.f32.mrb[0].mxu0
      %v4115 = vadd.f32 %v3951, %v4114
      %v4116 = vpop.f32.mrb[0].mxu0
      %4117 = vmatprep.mubr.bf16.mxu0 0
      %4118 = vmatmul.mubr.bf16.gmra.mrb[0].mxu0 %v2947
      %v4119 = vpop.f32.mrb[0].mxu0
      %v4120 = vadd.f32 %v3956, %v4119
      %v4121 = vpop.f32.mrb[0].mxu0
      %v4122 = vpop.f32.mrb[0].mxu0
      %v4123 = vadd.f32 %v3959, %v4122
      %v4124 = vpop.f32.mrb[0].mxu0
      %4125 = vmatprep.mubr.bf16.mxu0 0
      %4126 = vmatmul.mubr.bf16.gmra.mrb[0].mxu0 %v2950
      %v4127 = vpop.f32.mrb[0].mxu0
      %v4128 = vadd.f32 %v3964, %v4127
      %v4129 = vpop.f32.mrb[0].mxu0
      %v4130 = vpop.f32.mrb[0].mxu0
      %v4131 = vadd.f32 %v3967, %v4130
      %v4132 = vpop.f32.mrb[0].mxu0
      %4133 = vmatprep.mubr.bf16.mxu0 0
      %4134 = vmatmul.mubr.bf16.gmra.mrb[0].mxu0 %v2953
      %v4135 = vpop.f32.mrb[0].mxu0
      %v4136 = vadd.f32 %v3972, %v4135
      %v4137 = vpop.f32.mrb[0].mxu0
      %v4138 = vpop.f32.mrb[0].mxu0
      %v4139 = vadd.f32 %v3975, %v4138
      %v4140 = vpop.f32.mrb[0].mxu0
      %4141 = vdwg.mxu0
      %s4142 = scalar_lea.vmem %s224, 16
      %v4143 = vld [vmem:[%s4142] sm:$0x3]
      %v4145 = vsel %vm2138, %v4143, 0
      %4147 = vmatprep.subr.bf16.mxu0 0
      %4148 = vmatpush1.bf16.msra.mxu0 %v4145
      %4149 = vmatprep.subr.bf16.mxu0 0
      %4150 = vmatpush1.bf16.msra.mxu0 0
      %4151 = vmatprep.subr.bf16.mxu0 0
      %4152 = vmatpush1.bf16.msra.mxu0 0
      %4153 = vmatprep.subr.bf16.mxu0 0
      %4154 = vmatpush1.bf16.msra.mxu0 0
      %4155 = vmatprep.subr.bf16.mxu0 0
      %4156 = vmatpush1.bf16.msra.mxu0 0
      %4157 = vmatprep.subr.bf16.mxu0 0
      %4158 = vmatpush1.bf16.msra.mxu0 0
      %4159 = vmatprep.subr.bf16.mxu0 0
      %4160 = vmatpush1.bf16.msra.mxu0 0
      %4161 = vmatprep.subr.bf16.mxu0 0
      %4162 = vmatpush1.bf16.msra.mxu0 0
      %4163 = vmatprep.subr.bf16.mxu0 0
      %4164 = vmatpush1.bf16.msra.mxu0 0
      %4165 = vmatprep.subr.bf16.mxu0 0
      %4166 = vmatpush1.bf16.msra.mxu0 0
      %4167 = vmatprep.subr.bf16.mxu0 0
      %4168 = vmatpush1.bf16.msra.mxu0 0
      %4169 = vmatprep.subr.bf16.mxu0 0
      %4170 = vmatpush1.bf16.msra.mxu0 0
      %4171 = vmatprep.subr.bf16.mxu0 0
      %4172 = vmatpush1.bf16.msra.mxu0 0
      %4173 = vmatprep.subr.bf16.mxu0 0
      %4174 = vmatpush1.bf16.msra.mxu0 0
      %4175 = vmatprep.subr.bf16.mxu0 0
      %4176 = vmatpush1.bf16.msra.mxu0 0
      %4177 = vmatprep.subr.bf16.mxu0 0
      %4178 = vmatpush1.bf16.msra.mxu0 0
      %4179 = vmatprep.mubr.bf16.mxu0 0
      %4180 = vmatmul.mubr.bf16.gmra.mrb[0].mxu0 %v3496
      %v4181 = vpop.f32.mrb[0].mxu0
      %v4182 = vadd.f32 0.0, %v4181
      %v4183 = vpop.f32.mrb[0].mxu0
      %v4184 = vpop.f32.mrb[0].mxu0
      %v4185 = vadd.f32 0.0, %v4184
      %v4186 = vpop.f32.mrb[0].mxu0
      %4187 = vmatprep.mubr.bf16.mxu0 0
      %4188 = vmatmul.mubr.bf16.gmra.mrb[0].mxu0 %v3499
      %v4189 = vpop.f32.mrb[0].mxu0
      %v4190 = vadd.f32 0.0, %v4189
      %v4191 = vpop.f32.mrb[0].mxu0
      %v4192 = vpop.f32.mrb[0].mxu0
      %v4193 = vadd.f32 0.0, %v4192
      %v4194 = vpop.f32.mrb[0].mxu0
      %4195 = vmatprep.mubr.bf16.mxu0 0
      %4196 = vmatmul.mubr.bf16.gmra.mrb[0].mxu0 %v3502
      %v4197 = vpop.f32.mrb[0].mxu0
      %v4198 = vadd.f32 0.0, %v4197
      %v4199 = vpop.f32.mrb[0].mxu0
      %v4200 = vpop.f32.mrb[0].mxu0
      %v4201 = vadd.f32 0.0, %v4200
      %v4202 = vpop.f32.mrb[0].mxu0
      %4203 = vmatprep.mubr.bf16.mxu0 0
      %4204 = vmatmul.mubr.bf16.gmra.mrb[0].mxu0 %v3505
      %v4205 = vpop.f32.mrb[0].mxu0
      %v4206 = vadd.f32 0.0, %v4205
      %v4207 = vpop.f32.mrb[0].mxu0
      %v4208 = vpop.f32.mrb[0].mxu0
      %v4209 = vadd.f32 0.0, %v4208
      %v4210 = vpop.f32.mrb[0].mxu0
      %4211 = vmatprep.mubr.bf16.mxu0 0
      %4212 = vmatmul.mubr.bf16.gmra.mrb[0].mxu0 %v3508
      %v4213 = vpop.f32.mrb[0].mxu0
      %v4214 = vadd.f32 0.0, %v4213
      %v4215 = vpop.f32.mrb[0].mxu0
      %v4216 = vpop.f32.mrb[0].mxu0
      %v4217 = vadd.f32 0.0, %v4216
      %v4218 = vpop.f32.mrb[0].mxu0
      %4219 = vmatprep.mubr.bf16.mxu0 0
      %4220 = vmatmul.mubr.bf16.gmra.mrb[0].mxu0 %v3511
      %v4221 = vpop.f32.mrb[0].mxu0
      %v4222 = vadd.f32 0.0, %v4221
      %v4223 = vpop.f32.mrb[0].mxu0
      %v4224 = vpop.f32.mrb[0].mxu0
      %v4225 = vadd.f32 0.0, %v4224
      %v4226 = vpop.f32.mrb[0].mxu0
      %4227 = vmatprep.mubr.bf16.mxu0 0
      %4228 = vmatmul.mubr.bf16.gmra.mrb[0].mxu0 %v3514
      %v4229 = vpop.f32.mrb[0].mxu0
      %v4230 = vadd.f32 0.0, %v4229
      %v4231 = vpop.f32.mrb[0].mxu0
      %v4232 = vpop.f32.mrb[0].mxu0
      %v4233 = vadd.f32 0.0, %v4232
      %v4234 = vpop.f32.mrb[0].mxu0
      %4235 = vmatprep.mubr.bf16.mxu0 0
      %4236 = vmatmul.mubr.bf16.gmra.mrb[0].mxu0 %v3517
      %v4237 = vpop.f32.mrb[0].mxu0
      %v4238 = vadd.f32 0.0, %v4237
      %v4239 = vpop.f32.mrb[0].mxu0
      %v4240 = vpop.f32.mrb[0].mxu0
      %v4241 = vadd.f32 0.0, %v4240
      %v4242 = vpop.f32.mrb[0].mxu0
      %4243 = vmatprep.mubr.bf16.mxu0 0
      %4244 = vmatmul.mubr.bf16.gmra.mrb[0].mxu0 %v3520
      %v4245 = vpop.f32.mrb[0].mxu0
      %v4246 = vadd.f32 0.0, %v4245
      %v4247 = vpop.f32.mrb[0].mxu0
      %v4248 = vpop.f32.mrb[0].mxu0
      %v4249 = vadd.f32 0.0, %v4248
      %v4250 = vpop.f32.mrb[0].mxu0
      %4251 = vmatprep.mubr.bf16.mxu0 0
      %4252 = vmatmul.mubr.bf16.gmra.mrb[0].mxu0 %v3523
      %v4253 = vpop.f32.mrb[0].mxu0
      %v4254 = vadd.f32 0.0, %v4253
      %v4255 = vpop.f32.mrb[0].mxu0
      %v4256 = vpop.f32.mrb[0].mxu0
      %v4257 = vadd.f32 0.0, %v4256
      %v4258 = vpop.f32.mrb[0].mxu0
      %4259 = vmatprep.mubr.bf16.mxu0 0
      %4260 = vmatmul.mubr.bf16.gmra.mrb[0].mxu0 %v3526
      %v4261 = vpop.f32.mrb[0].mxu0
      %v4262 = vadd.f32 0.0, %v4261
      %v4263 = vpop.f32.mrb[0].mxu0
      %v4264 = vpop.f32.mrb[0].mxu0
      %v4265 = vadd.f32 0.0, %v4264
      %v4266 = vpop.f32.mrb[0].mxu0
      %4267 = vmatprep.mubr.bf16.mxu0 0
      %4268 = vmatmul.mubr.bf16.gmra.mrb[0].mxu0 %v3529
      %v4269 = vpop.f32.mrb[0].mxu0
      %v4270 = vadd.f32 0.0, %v4269
      %v4271 = vpop.f32.mrb[0].mxu0
      %v4272 = vpop.f32.mrb[0].mxu0
      %v4273 = vadd.f32 0.0, %v4272
      %v4274 = vpop.f32.mrb[0].mxu0
      %4275 = vmatprep.mubr.bf16.mxu0 0
      %4276 = vmatmul.mubr.bf16.gmra.mrb[0].mxu0 %v3532
      %v4277 = vpop.f32.mrb[0].mxu0
      %v4278 = vadd.f32 0.0, %v4277
      %v4279 = vpop.f32.mrb[0].mxu0
      %v4280 = vpop.f32.mrb[0].mxu0
      %v4281 = vadd.f32 0.0, %v4280
      %v4282 = vpop.f32.mrb[0].mxu0
      %4283 = vmatprep.mubr.bf16.mxu0 0
      %4284 = vmatmul.mubr.bf16.gmra.mrb[0].mxu0 %v3535
      %v4285 = vpop.f32.mrb[0].mxu0
      %v4286 = vadd.f32 0.0, %v4285
      %v4287 = vpop.f32.mrb[0].mxu0
      %v4288 = vpop.f32.mrb[0].mxu0
      %v4289 = vadd.f32 0.0, %v4288
      %v4290 = vpop.f32.mrb[0].mxu0
      %4291 = vmatprep.mubr.bf16.mxu0 0
      %4292 = vmatmul.mubr.bf16.gmra.mrb[0].mxu0 %v3538
      %v4293 = vpop.f32.mrb[0].mxu0
      %v4294 = vadd.f32 0.0, %v4293
      %v4295 = vpop.f32.mrb[0].mxu0
      %v4296 = vpop.f32.mrb[0].mxu0
      %v4297 = vadd.f32 0.0, %v4296
      %v4298 = vpop.f32.mrb[0].mxu0
      %4299 = vmatprep.mubr.bf16.mxu0 0
      %4300 = vmatmul.mubr.bf16.gmra.mrb[0].mxu0 %v3541
      %v4301 = vpop.f32.mrb[0].mxu0
      %v4302 = vadd.f32 0.0, %v4301
      %v4303 = vpop.f32.mrb[0].mxu0
      %v4304 = vpop.f32.mrb[0].mxu0
      %v4305 = vadd.f32 0.0, %v4304
      %v4306 = vpop.f32.mrb[0].mxu0
      %4307 = vdwg.mxu0
      %v4308 = vadd.f32 %v4016, %v4182
      %v4309 = vadd.f32 %v4019, %v4185
      %v4310 = vadd.f32 %v4024, %v4190
      %v4311 = vadd.f32 %v4027, %v4193
      %v4312 = vadd.f32 %v4032, %v4198
      %v4313 = vadd.f32 %v4035, %v4201
      %v4314 = vadd.f32 %v4040, %v4206
      %v4315 = vadd.f32 %v4043, %v4209
      %v4316 = vadd.f32 %v4048, %v4214
      %v4317 = vadd.f32 %v4051, %v4217
      %v4318 = vadd.f32 %v4056, %v4222
      %v4319 = vadd.f32 %v4059, %v4225
      %v4320 = vadd.f32 %v4064, %v4230
      %v4321 = vadd.f32 %v4067, %v4233
      %v4322 = vadd.f32 %v4072, %v4238
      %v4323 = vadd.f32 %v4075, %v4241
      %v4324 = vadd.f32 %v4080, %v4246
      %v4325 = vadd.f32 %v4083, %v4249
      %v4326 = vadd.f32 %v4088, %v4254
      %v4327 = vadd.f32 %v4091, %v4257
      %v4328 = vadd.f32 %v4096, %v4262
      %v4329 = vadd.f32 %v4099, %v4265
      %v4330 = vadd.f32 %v4104, %v4270
      %v4331 = vadd.f32 %v4107, %v4273
      %v4332 = vadd.f32 %v4112, %v4278
      %v4333 = vadd.f32 %v4115, %v4281
      %v4334 = vadd.f32 %v4120, %v4286
      %v4335 = vadd.f32 %v4123, %v4289
      %v4336 = vadd.f32 %v4128, %v4294
      %v4337 = vadd.f32 %v4131, %v4297
      %v4338 = vadd.f32 %v4136, %v4302
      %v4339 = vadd.f32 %v4139, %v4305
      %s4340 = scalar_lea.vmem %s224, 18
      %v4341 = vld [vmem:[%s4340] sm:$0x3]
      %v4342 = vunpack.c.l.b16 %v352
      %v4343 = vunpack.c.l.b16 %v353
      %v4344 = vunpack.c.l.b16 %v355
      %v4345 = vunpack.c.l.b16 %v356
      %v4346 = vunpack.c.l.b16 %v358
      %v4347 = vunpack.c.l.b16 %v359
      %v4348 = vunpack.c.l.b16 %v361
      %v4349 = vunpack.c.l.b16 %v362
      %v4350 = vunpack.c.l.b16 %v364
      %v4351 = vunpack.c.l.b16 %v365
      %v4352 = vunpack.c.l.b16 %v367
      %v4353 = vunpack.c.l.b16 %v368
      %v4354 = vunpack.c.l.b16 %v370
      %v4355 = vunpack.c.l.b16 %v371
      %v4356 = vunpack.c.l.b16 %v373
      %v4357 = vunpack.c.l.b16 %v374
      %v4358 = vunpack.c.l.b16 %v376
      %v4359 = vunpack.c.l.b16 %v377
      %v4360 = vunpack.c.l.b16 %v379
      %v4361 = vunpack.c.l.b16 %v380
      %v4362 = vunpack.c.l.b16 %v382
      %v4363 = vunpack.c.l.b16 %v383
      %v4364 = vunpack.c.l.b16 %v385
      %v4365 = vunpack.c.l.b16 %v386
      %v4366 = vunpack.c.l.b16 %v388
      %v4367 = vunpack.c.l.b16 %v389
      %v4368 = vunpack.c.l.b16 %v391
      %v4369 = vunpack.c.l.b16 %v392
      %v4370 = vunpack.c.l.b16 %v394
      %v4371 = vunpack.c.l.b16 %v395
      %v4372 = vunpack.c.l.b16 %v397
      %v4373 = vunpack.c.l.b16 %v398
      %v4374 = vpack.c.b16 %v4343, %v4342
      %v4375 = vpack.c.b16 %v4345, %v4344
      %v4376 = vpack.c.b16 %v4347, %v4346
      %v4377 = vpack.c.b16 %v4349, %v4348
      %v4378 = vpack.c.b16 %v4351, %v4350
      %v4379 = vpack.c.b16 %v4353, %v4352
      %v4380 = vpack.c.b16 %v4355, %v4354
      %v4381 = vpack.c.b16 %v4357, %v4356
      %v4382 = vpack.c.b16 %v4359, %v4358
      %v4383 = vpack.c.b16 %v4361, %v4360
      %v4384 = vpack.c.b16 %v4363, %v4362
      %v4385 = vpack.c.b16 %v4365, %v4364
      %v4386 = vpack.c.b16 %v4367, %v4366
      %v4387 = vpack.c.b16 %v4369, %v4368
      %v4388 = vpack.c.b16 %v4371, %v4370
      %v4389 = vpack.c.b16 %v4373, %v4372
      %v4391 = vsel %vm2089, %v4374, 0
      %v4394 = vsel %vm2089, %v4375, 0
      %v4397 = vsel %vm2089, %v4376, 0
      %v4400 = vsel %vm2089, %v4377, 0
      %v4403 = vsel %vm2089, %v4378, 0
      %v4406 = vsel %vm2089, %v4379, 0
      %v4409 = vsel %vm2089, %v4380, 0
      %v4412 = vsel %vm2089, %v4381, 0
      %v4415 = vsel %vm2089, %v4382, 0
      %v4418 = vsel %vm2089, %v4383, 0
      %v4421 = vsel %vm2089, %v4384, 0
      %v4424 = vsel %vm2089, %v4385, 0
      %v4427 = vsel %vm2089, %v4386, 0
      %v4430 = vsel %vm2089, %v4387, 0
      %v4433 = vsel %vm2089, %v4388, 0
      %v4436 = vsel %vm2089, %v4389, 0
      %v4439 = vsel %vm2138, %v4341, 0
      %4441 = vmatprep.subr.bf16.mxu0 0
      %4442 = vmatpush1.bf16.msra.mxu0 %v4439
      %4443 = vmatprep.subr.bf16.mxu0 0
      %4444 = vmatpush1.bf16.msra.mxu0 0
      %4445 = vmatprep.subr.bf16.mxu0 0
      %4446 = vmatpush1.bf16.msra.mxu0 0
      %4447 = vmatprep.subr.bf16.mxu0 0
      %4448 = vmatpush1.bf16.msra.mxu0 0
      %4449 = vmatprep.subr.bf16.mxu0 0
      %4450 = vmatpush1.bf16.msra.mxu0 0
      %4451 = vmatprep.subr.bf16.mxu0 0
      %4452 = vmatpush1.bf16.msra.mxu0 0
      %4453 = vmatprep.subr.bf16.mxu0 0
      %4454 = vmatpush1.bf16.msra.mxu0 0
      %4455 = vmatprep.subr.bf16.mxu0 0
      %4456 = vmatpush1.bf16.msra.mxu0 0
      %4457 = vmatprep.subr.bf16.mxu0 0
      %4458 = vmatpush1.bf16.msra.mxu0 0
      %4459 = vmatprep.subr.bf16.mxu0 0
      %4460 = vmatpush1.bf16.msra.mxu0 0
      %4461 = vmatprep.subr.bf16.mxu0 0
      %4462 = vmatpush1.bf16.msra.mxu0 0
      %4463 = vmatprep.subr.bf16.mxu0 0
      %4464 = vmatpush1.bf16.msra.mxu0 0
      %4465 = vmatprep.subr.bf16.mxu0 0
      %4466 = vmatpush1.bf16.msra.mxu0 0
      %4467 = vmatprep.subr.bf16.mxu0 0
      %4468 = vmatpush1.bf16.msra.mxu0 0
      %4469 = vmatprep.subr.bf16.mxu0 0
      %4470 = vmatpush1.bf16.msra.mxu0 0
      %4471 = vmatprep.subr.bf16.mxu0 0
      %4472 = vmatpush1.bf16.msra.mxu0 0
      %4473 = vmatprep.mubr.bf16.mxu0 0
      %4474 = vmatmul.mubr.bf16.gmra.mrb[0].mxu0 %v4391
      %v4475 = vpop.f32.mrb[0].mxu0
      %v4476 = vadd.f32 0.0, %v4475
      %v4477 = vpop.f32.mrb[0].mxu0
      %v4478 = vpop.f32.mrb[0].mxu0
      %v4479 = vadd.f32 0.0, %v4478
      %v4480 = vpop.f32.mrb[0].mxu0
      %4481 = vmatprep.mubr.bf16.mxu0 0
      %4482 = vmatmul.mubr.bf16.gmra.mrb[0].mxu0 %v4394
      %v4483 = vpop.f32.mrb[0].mxu0
      %v4484 = vadd.f32 0.0, %v4483
      %v4485 = vpop.f32.mrb[0].mxu0
      %v4486 = vpop.f32.mrb[0].mxu0
      %v4487 = vadd.f32 0.0, %v4486
      %v4488 = vpop.f32.mrb[0].mxu0
      %4489 = vmatprep.mubr.bf16.mxu0 0
      %4490 = vmatmul.mubr.bf16.gmra.mrb[0].mxu0 %v4397
      %v4491 = vpop.f32.mrb[0].mxu0
      %v4492 = vadd.f32 0.0, %v4491
      %v4493 = vpop.f32.mrb[0].mxu0
      %v4494 = vpop.f32.mrb[0].mxu0
      %v4495 = vadd.f32 0.0, %v4494
      %v4496 = vpop.f32.mrb[0].mxu0
      %4497 = vmatprep.mubr.bf16.mxu0 0
      %4498 = vmatmul.mubr.bf16.gmra.mrb[0].mxu0 %v4400
      %v4499 = vpop.f32.mrb[0].mxu0
      %v4500 = vadd.f32 0.0, %v4499
      %v4501 = vpop.f32.mrb[0].mxu0
      %v4502 = vpop.f32.mrb[0].mxu0
      %v4503 = vadd.f32 0.0, %v4502
      %v4504 = vpop.f32.mrb[0].mxu0
      %4505 = vmatprep.mubr.bf16.mxu0 0
      %4506 = vmatmul.mubr.bf16.gmra.mrb[0].mxu0 %v4403
      %v4507 = vpop.f32.mrb[0].mxu0
      %v4508 = vadd.f32 0.0, %v4507
      %v4509 = vpop.f32.mrb[0].mxu0
      %v4510 = vpop.f32.mrb[0].mxu0
      %v4511 = vadd.f32 0.0, %v4510
      %v4512 = vpop.f32.mrb[0].mxu0
      %4513 = vmatprep.mubr.bf16.mxu0 0
      %4514 = vmatmul.mubr.bf16.gmra.mrb[0].mxu0 %v4406
      %v4515 = vpop.f32.mrb[0].mxu0
      %v4516 = vadd.f32 0.0, %v4515
      %v4517 = vpop.f32.mrb[0].mxu0
      %v4518 = vpop.f32.mrb[0].mxu0
      %v4519 = vadd.f32 0.0, %v4518
      %v4520 = vpop.f32.mrb[0].mxu0
      %4521 = vmatprep.mubr.bf16.mxu0 0
      %4522 = vmatmul.mubr.bf16.gmra.mrb[0].mxu0 %v4409
      %v4523 = vpop.f32.mrb[0].mxu0
      %v4524 = vadd.f32 0.0, %v4523
      %v4525 = vpop.f32.mrb[0].mxu0
      %v4526 = vpop.f32.mrb[0].mxu0
      %v4527 = vadd.f32 0.0, %v4526
      %v4528 = vpop.f32.mrb[0].mxu0
      %4529 = vmatprep.mubr.bf16.mxu0 0
      %4530 = vmatmul.mubr.bf16.gmra.mrb[0].mxu0 %v4412
      %v4531 = vpop.f32.mrb[0].mxu0
      %v4532 = vadd.f32 0.0, %v4531
      %v4533 = vpop.f32.mrb[0].mxu0
      %v4534 = vpop.f32.mrb[0].mxu0
      %v4535 = vadd.f32 0.0, %v4534
      %v4536 = vpop.f32.mrb[0].mxu0
      %4537 = vmatprep.mubr.bf16.mxu0 0
      %4538 = vmatmul.mubr.bf16.gmra.mrb[0].mxu0 %v4415
      %v4539 = vpop.f32.mrb[0].mxu0
      %v4540 = vadd.f32 0.0, %v4539
      %v4541 = vpop.f32.mrb[0].mxu0
      %v4542 = vpop.f32.mrb[0].mxu0
      %v4543 = vadd.f32 0.0, %v4542
      %v4544 = vpop.f32.mrb[0].mxu0
      %4545 = vmatprep.mubr.bf16.mxu0 0
      %4546 = vmatmul.mubr.bf16.gmra.mrb[0].mxu0 %v4418
      %v4547 = vpop.f32.mrb[0].mxu0
      %v4548 = vadd.f32 0.0, %v4547
      %v4549 = vpop.f32.mrb[0].mxu0
      %v4550 = vpop.f32.mrb[0].mxu0
      %v4551 = vadd.f32 0.0, %v4550
      %v4552 = vpop.f32.mrb[0].mxu0
      %4553 = vmatprep.mubr.bf16.mxu0 0
      %4554 = vmatmul.mubr.bf16.gmra.mrb[0].mxu0 %v4421
      %v4555 = vpop.f32.mrb[0].mxu0
      %v4556 = vadd.f32 0.0, %v4555
      %v4557 = vpop.f32.mrb[0].mxu0
      %v4558 = vpop.f32.mrb[0].mxu0
      %v4559 = vadd.f32 0.0, %v4558
      %v4560 = vpop.f32.mrb[0].mxu0
      %4561 = vmatprep.mubr.bf16.mxu0 0
      %4562 = vmatmul.mubr.bf16.gmra.mrb[0].mxu0 %v4424
      %v4563 = vpop.f32.mrb[0].mxu0
      %v4564 = vadd.f32 0.0, %v4563
      %v4565 = vpop.f32.mrb[0].mxu0
      %v4566 = vpop.f32.mrb[0].mxu0
      %v4567 = vadd.f32 0.0, %v4566
      %v4568 = vpop.f32.mrb[0].mxu0
      %4569 = vmatprep.mubr.bf16.mxu0 0
      %4570 = vmatmul.mubr.bf16.gmra.mrb[0].mxu0 %v4427
      %v4571 = vpop.f32.mrb[0].mxu0
      %v4572 = vadd.f32 0.0, %v4571
      %v4573 = vpop.f32.mrb[0].mxu0
      %v4574 = vpop.f32.mrb[0].mxu0
      %v4575 = vadd.f32 0.0, %v4574
      %v4576 = vpop.f32.mrb[0].mxu0
      %4577 = vmatprep.mubr.bf16.mxu0 0
      %4578 = vmatmul.mubr.bf16.gmra.mrb[0].mxu0 %v4430
      %v4579 = vpop.f32.mrb[0].mxu0
      %v4580 = vadd.f32 0.0, %v4579
      %v4581 = vpop.f32.mrb[0].mxu0
      %v4582 = vpop.f32.mrb[0].mxu0
      %v4583 = vadd.f32 0.0, %v4582
      %v4584 = vpop.f32.mrb[0].mxu0
      %4585 = vmatprep.mubr.bf16.mxu0 0
      %4586 = vmatmul.mubr.bf16.gmra.mrb[0].mxu0 %v4433
      %v4587 = vpop.f32.mrb[0].mxu0
      %v4588 = vadd.f32 0.0, %v4587
      %v4589 = vpop.f32.mrb[0].mxu0
      %v4590 = vpop.f32.mrb[0].mxu0
      %v4591 = vadd.f32 0.0, %v4590
      %v4592 = vpop.f32.mrb[0].mxu0
      %4593 = vmatprep.mubr.bf16.mxu0 0
      %4594 = vmatmul.mubr.bf16.gmra.mrb[0].mxu0 %v4436
      %v4595 = vpop.f32.mrb[0].mxu0
      %v4596 = vadd.f32 0.0, %v4595
      %v4597 = vpop.f32.mrb[0].mxu0
      %v4598 = vpop.f32.mrb[0].mxu0
      %v4599 = vadd.f32 0.0, %v4598
      %v4600 = vpop.f32.mrb[0].mxu0
      %4601 = vdwg.mxu0
      %v4602 = vadd.f32 %v4308, %v4476
      %v4603 = vadd.f32 %v4309, %v4479
      %v4604 = vadd.f32 %v4310, %v4484
      %v4605 = vadd.f32 %v4311, %v4487
      %v4606 = vadd.f32 %v4312, %v4492
      %v4607 = vadd.f32 %v4313, %v4495
      %v4608 = vadd.f32 %v4314, %v4500
      %v4609 = vadd.f32 %v4315, %v4503
      %v4610 = vadd.f32 %v4316, %v4508
      %v4611 = vadd.f32 %v4317, %v4511
      %v4612 = vadd.f32 %v4318, %v4516
      %v4613 = vadd.f32 %v4319, %v4519
      %v4614 = vadd.f32 %v4320, %v4524
      %v4615 = vadd.f32 %v4321, %v4527
      %v4616 = vadd.f32 %v4322, %v4532
      %v4617 = vadd.f32 %v4323, %v4535
      %v4618 = vadd.f32 %v4324, %v4540
      %v4619 = vadd.f32 %v4325, %v4543
      %v4620 = vadd.f32 %v4326, %v4548
      %v4621 = vadd.f32 %v4327, %v4551
      %v4622 = vadd.f32 %v4328, %v4556
      %v4623 = vadd.f32 %v4329, %v4559
      %v4624 = vadd.f32 %v4330, %v4564
      %v4625 = vadd.f32 %v4331, %v4567
      %v4626 = vadd.f32 %v4332, %v4572
      %v4627 = vadd.f32 %v4333, %v4575
      %v4628 = vadd.f32 %v4334, %v4580
      %v4629 = vadd.f32 %v4335, %v4583
      %v4630 = vadd.f32 %v4336, %v4588
      %v4631 = vadd.f32 %v4337, %v4591
      %v4632 = vadd.f32 %v4338, %v4596
      %v4633 = vadd.f32 %v4339, %v4599
      %s4634 = scalar_lea.vmem %s224, 20
      %v4635 = vld [vmem:[%s4634] sm:$0x3]
      %v4636 = vunpack.c.l.b16 %v1507
      %v4637 = vunpack.c.l.b16 %v1517
      %v4638 = vunpack.c.l.b16 %v1531
      %v4639 = vunpack.c.l.b16 %v1541
      %v4640 = vunpack.c.l.b16 %v1555
      %v4641 = vunpack.c.l.b16 %v1565
      %v4642 = vunpack.c.l.b16 %v1579
      %v4643 = vunpack.c.l.b16 %v1589
      %v4644 = vunpack.c.l.b16 %v1603
      %v4645 = vunpack.c.l.b16 %v1613
      %v4646 = vunpack.c.l.b16 %v1627
      %v4647 = vunpack.c.l.b16 %v1637
      %v4648 = vunpack.c.l.b16 %v1651
      %v4649 = vunpack.c.l.b16 %v1661
      %v4650 = vunpack.c.l.b16 %v1675
      %v4651 = vunpack.c.l.b16 %v1685
      %v4652 = vunpack.c.l.b16 %v1699
      %v4653 = vunpack.c.l.b16 %v1709
      %v4654 = vunpack.c.l.b16 %v1723
      %v4655 = vunpack.c.l.b16 %v1733
      %v4656 = vunpack.c.l.b16 %v1747
      %v4657 = vunpack.c.l.b16 %v1757
      %v4658 = vunpack.c.l.b16 %v1771
      %v4659 = vunpack.c.l.b16 %v1781
      %v4660 = vunpack.c.l.b16 %v1795
      %v4661 = vunpack.c.l.b16 %v1805
      %v4662 = vunpack.c.l.b16 %v1819
      %v4663 = vunpack.c.l.b16 %v1829
      %v4664 = vunpack.c.l.b16 %v1843
      %v4665 = vunpack.c.l.b16 %v1853
      %v4666 = vunpack.c.l.b16 %v1867
      %v4667 = vunpack.c.l.b16 %v1877
      %v4668 = vpack.c.b16 %v4637, %v4636
      %v4669 = vpack.c.b16 %v4639, %v4638
      %v4670 = vpack.c.b16 %v4641, %v4640
      %v4671 = vpack.c.b16 %v4643, %v4642
      %v4672 = vpack.c.b16 %v4645, %v4644
      %v4673 = vpack.c.b16 %v4647, %v4646
      %v4674 = vpack.c.b16 %v4649, %v4648
      %v4675 = vpack.c.b16 %v4651, %v4650
      %v4676 = vpack.c.b16 %v4653, %v4652
      %v4677 = vpack.c.b16 %v4655, %v4654
      %v4678 = vpack.c.b16 %v4657, %v4656
      %v4679 = vpack.c.b16 %v4659, %v4658
      %v4680 = vpack.c.b16 %v4661, %v4660
      %v4681 = vpack.c.b16 %v4663, %v4662
      %v4682 = vpack.c.b16 %v4665, %v4664
      %v4683 = vpack.c.b16 %v4667, %v4666
      %v4685 = vsel %vm2089, %v4668, 0
      %v4688 = vsel %vm2089, %v4669, 0
      %v4691 = vsel %vm2089, %v4670, 0
      %v4694 = vsel %vm2089, %v4671, 0
      %v4697 = vsel %vm2089, %v4672, 0
      %v4700 = vsel %vm2089, %v4673, 0
      %v4703 = vsel %vm2089, %v4674, 0
      %v4706 = vsel %vm2089, %v4675, 0
      %v4709 = vsel %vm2089, %v4676, 0
      %v4712 = vsel %vm2089, %v4677, 0
      %v4715 = vsel %vm2089, %v4678, 0
      %v4718 = vsel %vm2089, %v4679, 0
      %v4721 = vsel %vm2089, %v4680, 0
      %v4724 = vsel %vm2089, %v4681, 0
      %v4727 = vsel %vm2089, %v4682, 0
      %v4730 = vsel %vm2089, %v4683, 0
      %v4733 = vsel %vm2138, %v4635, 0
      %4735 = vmatprep.subr.bf16.mxu0 0
      %4736 = vmatpush1.bf16.msra.mxu0 %v4733
      %4737 = vmatprep.subr.bf16.mxu0 0
      %4738 = vmatpush1.bf16.msra.mxu0 0
      %4739 = vmatprep.subr.bf16.mxu0 0
      %4740 = vmatpush1.bf16.msra.mxu0 0
      %4741 = vmatprep.subr.bf16.mxu0 0
      %4742 = vmatpush1.bf16.msra.mxu0 0
      %4743 = vmatprep.subr.bf16.mxu0 0
      %4744 = vmatpush1.bf16.msra.mxu0 0
      %4745 = vmatprep.subr.bf16.mxu0 0
      %4746 = vmatpush1.bf16.msra.mxu0 0
      %4747 = vmatprep.subr.bf16.mxu0 0
      %4748 = vmatpush1.bf16.msra.mxu0 0
      %4749 = vmatprep.subr.bf16.mxu0 0
      %4750 = vmatpush1.bf16.msra.mxu0 0
      %4751 = vmatprep.subr.bf16.mxu0 0
      %4752 = vmatpush1.bf16.msra.mxu0 0
      %4753 = vmatprep.subr.bf16.mxu0 0
      %4754 = vmatpush1.bf16.msra.mxu0 0
      %4755 = vmatprep.subr.bf16.mxu0 0
      %4756 = vmatpush1.bf16.msra.mxu0 0
      %4757 = vmatprep.subr.bf16.mxu0 0
      %4758 = vmatpush1.bf16.msra.mxu0 0
      %4759 = vmatprep.subr.bf16.mxu0 0
      %4760 = vmatpush1.bf16.msra.mxu0 0
      %4761 = vmatprep.subr.bf16.mxu0 0
      %4762 = vmatpush1.bf16.msra.mxu0 0
      %4763 = vmatprep.subr.bf16.mxu0 0
      %4764 = vmatpush1.bf16.msra.mxu0 0
      %4765 = vmatprep.subr.bf16.mxu0 0
      %4766 = vmatpush1.bf16.msra.mxu0 0
      %4767 = vmatprep.mubr.bf16.mxu0 0
      %4768 = vmatmul.mubr.bf16.gmra.mrb[0].mxu0 %v4685
      %v4769 = vpop.f32.mrb[0].mxu0
      %v4770 = vadd.f32 0.0, %v4769
      %v4771 = vpop.f32.mrb[0].mxu0
      %v4772 = vpop.f32.mrb[0].mxu0
      %v4773 = vadd.f32 0.0, %v4772
      %v4774 = vpop.f32.mrb[0].mxu0
      %4775 = vmatprep.mubr.bf16.mxu0 0
      %4776 = vmatmul.mubr.bf16.gmra.mrb[0].mxu0 %v4688
      %v4777 = vpop.f32.mrb[0].mxu0
      %v4778 = vadd.f32 0.0, %v4777
      %v4779 = vpop.f32.mrb[0].mxu0
      %v4780 = vpop.f32.mrb[0].mxu0
      %v4781 = vadd.f32 0.0, %v4780
      %v4782 = vpop.f32.mrb[0].mxu0
      %4783 = vmatprep.mubr.bf16.mxu0 0
      %4784 = vmatmul.mubr.bf16.gmra.mrb[0].mxu0 %v4691
      %v4785 = vpop.f32.mrb[0].mxu0
      %v4786 = vadd.f32 0.0, %v4785
      %v4787 = vpop.f32.mrb[0].mxu0
      %v4788 = vpop.f32.mrb[0].mxu0
      %v4789 = vadd.f32 0.0, %v4788
      %v4790 = vpop.f32.mrb[0].mxu0
      %4791 = vmatprep.mubr.bf16.mxu0 0
      %4792 = vmatmul.mubr.bf16.gmra.mrb[0].mxu0 %v4694
      %v4793 = vpop.f32.mrb[0].mxu0
      %v4794 = vadd.f32 0.0, %v4793
      %v4795 = vpop.f32.mrb[0].mxu0
      %v4796 = vpop.f32.mrb[0].mxu0
      %v4797 = vadd.f32 0.0, %v4796
      %v4798 = vpop.f32.mrb[0].mxu0
      %4799 = vmatprep.mubr.bf16.mxu0 0
      %4800 = vmatmul.mubr.bf16.gmra.mrb[0].mxu0 %v4697
      %v4801 = vpop.f32.mrb[0].mxu0
      %v4802 = vadd.f32 0.0, %v4801
      %v4803 = vpop.f32.mrb[0].mxu0
      %v4804 = vpop.f32.mrb[0].mxu0
      %v4805 = vadd.f32 0.0, %v4804
      %v4806 = vpop.f32.mrb[0].mxu0
      %4807 = vmatprep.mubr.bf16.mxu0 0
      %4808 = vmatmul.mubr.bf16.gmra.mrb[0].mxu0 %v4700
      %v4809 = vpop.f32.mrb[0].mxu0
      %v4810 = vadd.f32 0.0, %v4809
      %v4811 = vpop.f32.mrb[0].mxu0
      %v4812 = vpop.f32.mrb[0].mxu0
      %v4813 = vadd.f32 0.0, %v4812
      %v4814 = vpop.f32.mrb[0].mxu0
      %4815 = vmatprep.mubr.bf16.mxu0 0
      %4816 = vmatmul.mubr.bf16.gmra.mrb[0].mxu0 %v4703
      %v4817 = vpop.f32.mrb[0].mxu0
      %v4818 = vadd.f32 0.0, %v4817
      %v4819 = vpop.f32.mrb[0].mxu0
      %v4820 = vpop.f32.mrb[0].mxu0
      %v4821 = vadd.f32 0.0, %v4820
      %v4822 = vpop.f32.mrb[0].mxu0
      %4823 = vmatprep.mubr.bf16.mxu0 0
      %4824 = vmatmul.mubr.bf16.gmra.mrb[0].mxu0 %v4706
      %v4825 = vpop.f32.mrb[0].mxu0
      %v4826 = vadd.f32 0.0, %v4825
      %v4827 = vpop.f32.mrb[0].mxu0
      %v4828 = vpop.f32.mrb[0].mxu0
      %v4829 = vadd.f32 0.0, %v4828
      %v4830 = vpop.f32.mrb[0].mxu0
      %4831 = vmatprep.mubr.bf16.mxu0 0
      %4832 = vmatmul.mubr.bf16.gmra.mrb[0].mxu0 %v4709
      %v4833 = vpop.f32.mrb[0].mxu0
      %v4834 = vadd.f32 0.0, %v4833
      %v4835 = vpop.f32.mrb[0].mxu0
      %v4836 = vpop.f32.mrb[0].mxu0
      %v4837 = vadd.f32 0.0, %v4836
      %v4838 = vpop.f32.mrb[0].mxu0
      %4839 = vmatprep.mubr.bf16.mxu0 0
      %4840 = vmatmul.mubr.bf16.gmra.mrb[0].mxu0 %v4712
      %v4841 = vpop.f32.mrb[0].mxu0
      %v4842 = vadd.f32 0.0, %v4841
      %v4843 = vpop.f32.mrb[0].mxu0
      %v4844 = vpop.f32.mrb[0].mxu0
      %v4845 = vadd.f32 0.0, %v4844
      %v4846 = vpop.f32.mrb[0].mxu0
      %4847 = vmatprep.mubr.bf16.mxu0 0
      %4848 = vmatmul.mubr.bf16.gmra.mrb[0].mxu0 %v4715
      %v4849 = vpop.f32.mrb[0].mxu0
      %v4850 = vadd.f32 0.0, %v4849
      %v4851 = vpop.f32.mrb[0].mxu0
      %v4852 = vpop.f32.mrb[0].mxu0
      %v4853 = vadd.f32 0.0, %v4852
      %v4854 = vpop.f32.mrb[0].mxu0
      %4855 = vmatprep.mubr.bf16.mxu0 0
      %4856 = vmatmul.mubr.bf16.gmra.mrb[0].mxu0 %v4718
      %v4857 = vpop.f32.mrb[0].mxu0
      %v4858 = vadd.f32 0.0, %v4857
      %v4859 = vpop.f32.mrb[0].mxu0
      %v4860 = vpop.f32.mrb[0].mxu0
      %v4861 = vadd.f32 0.0, %v4860
      %v4862 = vpop.f32.mrb[0].mxu0
      %4863 = vmatprep.mubr.bf16.mxu0 0
      %4864 = vmatmul.mubr.bf16.gmra.mrb[0].mxu0 %v4721
      %v4865 = vpop.f32.mrb[0].mxu0
      %v4866 = vadd.f32 0.0, %v4865
      %v4867 = vpop.f32.mrb[0].mxu0
      %v4868 = vpop.f32.mrb[0].mxu0
      %v4869 = vadd.f32 0.0, %v4868
      %v4870 = vpop.f32.mrb[0].mxu0
      %4871 = vmatprep.mubr.bf16.mxu0 0
      %4872 = vmatmul.mubr.bf16.gmra.mrb[0].mxu0 %v4724
      %v4873 = vpop.f32.mrb[0].mxu0
      %v4874 = vadd.f32 0.0, %v4873
      %v4875 = vpop.f32.mrb[0].mxu0
      %v4876 = vpop.f32.mrb[0].mxu0
      %v4877 = vadd.f32 0.0, %v4876
      %v4878 = vpop.f32.mrb[0].mxu0
      %4879 = vmatprep.mubr.bf16.mxu0 0
      %4880 = vmatmul.mubr.bf16.gmra.mrb[0].mxu0 %v4727
      %v4881 = vpop.f32.mrb[0].mxu0
      %v4882 = vadd.f32 0.0, %v4881
      %v4883 = vpop.f32.mrb[0].mxu0
      %v4884 = vpop.f32.mrb[0].mxu0
      %v4885 = vadd.f32 0.0, %v4884
      %v4886 = vpop.f32.mrb[0].mxu0
      %4887 = vmatprep.mubr.bf16.mxu0 0
      %4888 = vmatmul.mubr.bf16.gmra.mrb[0].mxu0 %v4730
      %v4889 = vpop.f32.mrb[0].mxu0
      %v4890 = vadd.f32 0.0, %v4889
      %v4891 = vpop.f32.mrb[0].mxu0
      %v4892 = vpop.f32.mrb[0].mxu0
      %v4893 = vadd.f32 0.0, %v4892
      %v4894 = vpop.f32.mrb[0].mxu0
      %4895 = vdwg.mxu0
      %v4896 = vadd.f32 %v4602, %v4770
      %v4897 = vadd.f32 %v4603, %v4773
      %v4898 = vadd.f32 %v4604, %v4778
      %v4899 = vadd.f32 %v4605, %v4781
      %v4900 = vadd.f32 %v4606, %v4786
      %v4901 = vadd.f32 %v4607, %v4789
      %v4902 = vadd.f32 %v4608, %v4794
      %v4903 = vadd.f32 %v4609, %v4797
      %v4904 = vadd.f32 %v4610, %v4802
      %v4905 = vadd.f32 %v4611, %v4805
      %v4906 = vadd.f32 %v4612, %v4810
      %v4907 = vadd.f32 %v4613, %v4813
      %v4908 = vadd.f32 %v4614, %v4818
      %v4909 = vadd.f32 %v4615, %v4821
      %v4910 = vadd.f32 %v4616, %v4826
      %v4911 = vadd.f32 %v4617, %v4829
      %v4912 = vadd.f32 %v4618, %v4834
      %v4913 = vadd.f32 %v4619, %v4837
      %v4914 = vadd.f32 %v4620, %v4842
      %v4915 = vadd.f32 %v4621, %v4845
      %v4916 = vadd.f32 %v4622, %v4850
      %v4917 = vadd.f32 %v4623, %v4853
      %v4918 = vadd.f32 %v4624, %v4858
      %v4919 = vadd.f32 %v4625, %v4861
      %v4920 = vadd.f32 %v4626, %v4866
      %v4921 = vadd.f32 %v4627, %v4869
      %v4922 = vadd.f32 %v4628, %v4874
      %v4923 = vadd.f32 %v4629, %v4877
      %v4924 = vadd.f32 %v4630, %v4882
      %v4925 = vadd.f32 %v4631, %v4885
      %v4926 = vadd.f32 %v4632, %v4890
      %v4927 = vadd.f32 %v4633, %v4893
      %s4928 = scalar_lea.vmem %s224, 22
      %v4929 = vld [vmem:[%s4928] sm:$0x3]
      %v4930 = vunpack.c.l.b16 %v1929
      %v4931 = vunpack.c.l.b16 %v1932
      %v4932 = vunpack.c.l.b16 %v1936
      %v4933 = vunpack.c.l.b16 %v1939
      %v4934 = vunpack.c.l.b16 %v1943
      %v4935 = vunpack.c.l.b16 %v1946
      %v4936 = vunpack.c.l.b16 %v1950
      %v4937 = vunpack.c.l.b16 %v1953
      %v4938 = vunpack.c.l.b16 %v1957
      %v4939 = vunpack.c.l.b16 %v1960
      %v4940 = vunpack.c.l.b16 %v1964
      %v4941 = vunpack.c.l.b16 %v1967
      %v4942 = vunpack.c.l.b16 %v1971
      %v4943 = vunpack.c.l.b16 %v1974
      %v4944 = vunpack.c.l.b16 %v1978
      %v4945 = vunpack.c.l.b16 %v1981
      %v4946 = vunpack.c.l.b16 %v1985
      %v4947 = vunpack.c.l.b16 %v1988
      %v4948 = vunpack.c.l.b16 %v1992
      %v4949 = vunpack.c.l.b16 %v1995
      %v4950 = vunpack.c.l.b16 %v1999
      %v4951 = vunpack.c.l.b16 %v2002
      %v4952 = vunpack.c.l.b16 %v2006
      %v4953 = vunpack.c.l.b16 %v2009
      %v4954 = vunpack.c.l.b16 %v2013
      %v4955 = vunpack.c.l.b16 %v2016
      %v4956 = vunpack.c.l.b16 %v2020
      %v4957 = vunpack.c.l.b16 %v2023
      %v4958 = vunpack.c.l.b16 %v2027
      %v4959 = vunpack.c.l.b16 %v2030
      %v4960 = vunpack.c.l.b16 %v2034
      %v4961 = vunpack.c.l.b16 %v2037
      %v4962 = vpack.c.b16 %v4931, %v4930
      %v4963 = vpack.c.b16 %v4933, %v4932
      %v4964 = vpack.c.b16 %v4935, %v4934
      %v4965 = vpack.c.b16 %v4937, %v4936
      %v4966 = vpack.c.b16 %v4939, %v4938
      %v4967 = vpack.c.b16 %v4941, %v4940
      %v4968 = vpack.c.b16 %v4943, %v4942
      %v4969 = vpack.c.b16 %v4945, %v4944
      %v4970 = vpack.c.b16 %v4947, %v4946
      %v4971 = vpack.c.b16 %v4949, %v4948
      %v4972 = vpack.c.b16 %v4951, %v4950
      %v4973 = vpack.c.b16 %v4953, %v4952
      %v4974 = vpack.c.b16 %v4955, %v4954
      %v4975 = vpack.c.b16 %v4957, %v4956
      %v4976 = vpack.c.b16 %v4959, %v4958
      %v4977 = vpack.c.b16 %v4961, %v4960
      %v4979 = vsel %vm2089, %v4962, 0
      %v4982 = vsel %vm2089, %v4963, 0
      %v4985 = vsel %vm2089, %v4964, 0
      %v4988 = vsel %vm2089, %v4965, 0
      %v4991 = vsel %vm2089, %v4966, 0
      %v4994 = vsel %vm2089, %v4967, 0
      %v4997 = vsel %vm2089, %v4968, 0
      %v5000 = vsel %vm2089, %v4969, 0
      %v5003 = vsel %vm2089, %v4970, 0
      %v5006 = vsel %vm2089, %v4971, 0
      %v5009 = vsel %vm2089, %v4972, 0
      %v5012 = vsel %vm2089, %v4973, 0
      %v5015 = vsel %vm2089, %v4974, 0
      %v5018 = vsel %vm2089, %v4975, 0
      %v5021 = vsel %vm2089, %v4976, 0
      %v5024 = vsel %vm2089, %v4977, 0
      %v5027 = vsel %vm2138, %v4929, 0
      %5029 = vmatprep.subr.bf16.mxu0 0
      %5030 = vmatpush1.bf16.msra.mxu0 %v5027
      %5031 = vmatprep.subr.bf16.mxu0 0
      %5032 = vmatpush1.bf16.msra.mxu0 0
      %5033 = vmatprep.subr.bf16.mxu0 0
      %5034 = vmatpush1.bf16.msra.mxu0 0
      %5035 = vmatprep.subr.bf16.mxu0 0
      %5036 = vmatpush1.bf16.msra.mxu0 0
      %5037 = vmatprep.subr.bf16.mxu0 0
      %5038 = vmatpush1.bf16.msra.mxu0 0
      %5039 = vmatprep.subr.bf16.mxu0 0
      %5040 = vmatpush1.bf16.msra.mxu0 0
      %5041 = vmatprep.subr.bf16.mxu0 0
      %5042 = vmatpush1.bf16.msra.mxu0 0
      %5043 = vmatprep.subr.bf16.mxu0 0
      %5044 = vmatpush1.bf16.msra.mxu0 0
      %5045 = vmatprep.subr.bf16.mxu0 0
      %5046 = vmatpush1.bf16.msra.mxu0 0
      %5047 = vmatprep.subr.bf16.mxu0 0
      %5048 = vmatpush1.bf16.msra.mxu0 0
      %5049 = vmatprep.subr.bf16.mxu0 0
      %5050 = vmatpush1.bf16.msra.mxu0 0
      %5051 = vmatprep.subr.bf16.mxu0 0
      %5052 = vmatpush1.bf16.msra.mxu0 0
      %5053 = vmatprep.subr.bf16.mxu0 0
      %5054 = vmatpush1.bf16.msra.mxu0 0
      %5055 = vmatprep.subr.bf16.mxu0 0
      %5056 = vmatpush1.bf16.msra.mxu0 0
      %5057 = vmatprep.subr.bf16.mxu0 0
      %5058 = vmatpush1.bf16.msra.mxu0 0
      %5059 = vmatprep.subr.bf16.mxu0 0
      %5060 = vmatpush1.bf16.msra.mxu0 0
      %5061 = vmatprep.mubr.bf16.mxu0 0
      %5062 = vmatmul.mubr.bf16.gmra.mrb[0].mxu0 %v4979
      %v5063 = vpop.f32.mrb[0].mxu0
      %v5064 = vadd.f32 0.0, %v5063
      %v5065 = vpop.f32.mrb[0].mxu0
      %v5066 = vpop.f32.mrb[0].mxu0
      %v5067 = vadd.f32 0.0, %v5066
      %v5068 = vpop.f32.mrb[0].mxu0
      %5069 = vmatprep.mubr.bf16.mxu0 0
      %5070 = vmatmul.mubr.bf16.gmra.mrb[0].mxu0 %v4982
      %v5071 = vpop.f32.mrb[0].mxu0
      %v5072 = vadd.f32 0.0, %v5071
      %v5073 = vpop.f32.mrb[0].mxu0
      %v5074 = vpop.f32.mrb[0].mxu0
      %v5075 = vadd.f32 0.0, %v5074
      %v5076 = vpop.f32.mrb[0].mxu0
      %5077 = vmatprep.mubr.bf16.mxu0 0
      %5078 = vmatmul.mubr.bf16.gmra.mrb[0].mxu0 %v4985
      %v5079 = vpop.f32.mrb[0].mxu0
      %v5080 = vadd.f32 0.0, %v5079
      %v5081 = vpop.f32.mrb[0].mxu0
      %v5082 = vpop.f32.mrb[0].mxu0
      %v5083 = vadd.f32 0.0, %v5082
      %v5084 = vpop.f32.mrb[0].mxu0
      %5085 = vmatprep.mubr.bf16.mxu0 0
      %5086 = vmatmul.mubr.bf16.gmra.mrb[0].mxu0 %v4988
      %v5087 = vpop.f32.mrb[0].mxu0
      %v5088 = vadd.f32 0.0, %v5087
      %v5089 = vpop.f32.mrb[0].mxu0
      %v5090 = vpop.f32.mrb[0].mxu0
      %v5091 = vadd.f32 0.0, %v5090
      %v5092 = vpop.f32.mrb[0].mxu0
      %5093 = vmatprep.mubr.bf16.mxu0 0
      %5094 = vmatmul.mubr.bf16.gmra.mrb[0].mxu0 %v4991
      %v5095 = vpop.f32.mrb[0].mxu0
      %v5096 = vadd.f32 0.0, %v5095
      %v5097 = vpop.f32.mrb[0].mxu0
      %v5098 = vpop.f32.mrb[0].mxu0
      %v5099 = vadd.f32 0.0, %v5098
      %v5100 = vpop.f32.mrb[0].mxu0
      %5101 = vmatprep.mubr.bf16.mxu0 0
      %5102 = vmatmul.mubr.bf16.gmra.mrb[0].mxu0 %v4994
      %v5103 = vpop.f32.mrb[0].mxu0
      %v5104 = vadd.f32 0.0, %v5103
      %v5105 = vpop.f32.mrb[0].mxu0
      %v5106 = vpop.f32.mrb[0].mxu0
      %v5107 = vadd.f32 0.0, %v5106
      %v5108 = vpop.f32.mrb[0].mxu0
      %5109 = vmatprep.mubr.bf16.mxu0 0
      %5110 = vmatmul.mubr.bf16.gmra.mrb[0].mxu0 %v4997
      %v5111 = vpop.f32.mrb[0].mxu0
      %v5112 = vadd.f32 0.0, %v5111
      %v5113 = vpop.f32.mrb[0].mxu0
      %v5114 = vpop.f32.mrb[0].mxu0
      %v5115 = vadd.f32 0.0, %v5114
      %v5116 = vpop.f32.mrb[0].mxu0
      %5117 = vmatprep.mubr.bf16.mxu0 0
      %5118 = vmatmul.mubr.bf16.gmra.mrb[0].mxu0 %v5000
      %v5119 = vpop.f32.mrb[0].mxu0
      %v5120 = vadd.f32 0.0, %v5119
      %v5121 = vpop.f32.mrb[0].mxu0
      %v5122 = vpop.f32.mrb[0].mxu0
      %v5123 = vadd.f32 0.0, %v5122
      %v5124 = vpop.f32.mrb[0].mxu0
      %5125 = vmatprep.mubr.bf16.mxu0 0
      %5126 = vmatmul.mubr.bf16.gmra.mrb[0].mxu0 %v5003
      %v5127 = vpop.f32.mrb[0].mxu0
      %v5128 = vadd.f32 0.0, %v5127
      %v5129 = vpop.f32.mrb[0].mxu0
      %v5130 = vpop.f32.mrb[0].mxu0
      %v5131 = vadd.f32 0.0, %v5130
      %v5132 = vpop.f32.mrb[0].mxu0
      %5133 = vmatprep.mubr.bf16.mxu0 0
      %5134 = vmatmul.mubr.bf16.gmra.mrb[0].mxu0 %v5006
      %v5135 = vpop.f32.mrb[0].mxu0
      %v5136 = vadd.f32 0.0, %v5135
      %v5137 = vpop.f32.mrb[0].mxu0
      %v5138 = vpop.f32.mrb[0].mxu0
      %v5139 = vadd.f32 0.0, %v5138
      %v5140 = vpop.f32.mrb[0].mxu0
      %5141 = vmatprep.mubr.bf16.mxu0 0
      %5142 = vmatmul.mubr.bf16.gmra.mrb[0].mxu0 %v5009
      %v5143 = vpop.f32.mrb[0].mxu0
      %v5144 = vadd.f32 0.0, %v5143
      %v5145 = vpop.f32.mrb[0].mxu0
      %v5146 = vpop.f32.mrb[0].mxu0
      %v5147 = vadd.f32 0.0, %v5146
      %v5148 = vpop.f32.mrb[0].mxu0
      %5149 = vmatprep.mubr.bf16.mxu0 0
      %5150 = vmatmul.mubr.bf16.gmra.mrb[0].mxu0 %v5012
      %v5151 = vpop.f32.mrb[0].mxu0
      %v5152 = vadd.f32 0.0, %v5151
      %v5153 = vpop.f32.mrb[0].mxu0
      %v5154 = vpop.f32.mrb[0].mxu0
      %v5155 = vadd.f32 0.0, %v5154
      %v5156 = vpop.f32.mrb[0].mxu0
      %5157 = vmatprep.mubr.bf16.mxu0 0
      %5158 = vmatmul.mubr.bf16.gmra.mrb[0].mxu0 %v5015
      %v5159 = vpop.f32.mrb[0].mxu0
      %v5160 = vadd.f32 0.0, %v5159
      %v5161 = vpop.f32.mrb[0].mxu0
      %v5162 = vpop.f32.mrb[0].mxu0
      %v5163 = vadd.f32 0.0, %v5162
      %v5164 = vpop.f32.mrb[0].mxu0
      %5165 = vmatprep.mubr.bf16.mxu0 0
      %5166 = vmatmul.mubr.bf16.gmra.mrb[0].mxu0 %v5018
      %v5167 = vpop.f32.mrb[0].mxu0
      %v5168 = vadd.f32 0.0, %v5167
      %v5169 = vpop.f32.mrb[0].mxu0
      %v5170 = vpop.f32.mrb[0].mxu0
      %v5171 = vadd.f32 0.0, %v5170
      %v5172 = vpop.f32.mrb[0].mxu0
      %5173 = vmatprep.mubr.bf16.mxu0 0
      %5174 = vmatmul.mubr.bf16.gmra.mrb[0].mxu0 %v5021
      %v5175 = vpop.f32.mrb[0].mxu0
      %v5176 = vadd.f32 0.0, %v5175
      %v5177 = vpop.f32.mrb[0].mxu0
      %v5178 = vpop.f32.mrb[0].mxu0
      %v5179 = vadd.f32 0.0, %v5178
      %v5180 = vpop.f32.mrb[0].mxu0
      %5181 = vmatprep.mubr.bf16.mxu0 0
      %5182 = vmatmul.mubr.bf16.gmra.mrb[0].mxu0 %v5024
      %v5183 = vpop.f32.mrb[0].mxu0
      %v5184 = vadd.f32 0.0, %v5183
      %v5185 = vpop.f32.mrb[0].mxu0
      %v5186 = vpop.f32.mrb[0].mxu0
      %v5187 = vadd.f32 0.0, %v5186
      %v5188 = vpop.f32.mrb[0].mxu0
      %5189 = vdwg.mxu0
      %v5190 = vadd.f32 %v4896, %v5064
      %v5191 = vadd.f32 %v4897, %v5067
      %v5192 = vadd.f32 %v4898, %v5072
      %v5193 = vadd.f32 %v4899, %v5075
      %v5194 = vadd.f32 %v4900, %v5080
      %v5195 = vadd.f32 %v4901, %v5083
      %v5196 = vadd.f32 %v4902, %v5088
      %v5197 = vadd.f32 %v4903, %v5091
      %v5198 = vadd.f32 %v4904, %v5096
      %v5199 = vadd.f32 %v4905, %v5099
      %v5200 = vadd.f32 %v4906, %v5104
      %v5201 = vadd.f32 %v4907, %v5107
      %v5202 = vadd.f32 %v4908, %v5112
      %v5203 = vadd.f32 %v4909, %v5115
      %v5204 = vadd.f32 %v4910, %v5120
      %v5205 = vadd.f32 %v4911, %v5123
      %v5206 = vadd.f32 %v4912, %v5128
      %v5207 = vadd.f32 %v4913, %v5131
      %v5208 = vadd.f32 %v4914, %v5136
      %v5209 = vadd.f32 %v4915, %v5139
      %v5210 = vadd.f32 %v4916, %v5144
      %v5211 = vadd.f32 %v4917, %v5147
      %v5212 = vadd.f32 %v4918, %v5152
      %v5213 = vadd.f32 %v4919, %v5155
      %v5214 = vadd.f32 %v4920, %v5160
      %v5215 = vadd.f32 %v4921, %v5163
      %v5216 = vadd.f32 %v4922, %v5168
      %v5217 = vadd.f32 %v4923, %v5171
      %v5218 = vadd.f32 %v4924, %v5176
      %v5219 = vadd.f32 %v4925, %v5179
      %v5220 = vadd.f32 %v4926, %v5184
      %v5221 = vadd.f32 %v4927, %v5187
      %v5222 = vadd.f32 %v5190, %v3743
      %v5223 = vadd.f32 %v5191, %v3743
      %v5224 = vadd.f32 %v5192, %v3743
      %v5225 = vadd.f32 %v5193, %v3743
      %v5226 = vadd.f32 %v5194, %v3743
      %v5227 = vadd.f32 %v5195, %v3743
      %v5228 = vadd.f32 %v5196, %v3743
      %v5229 = vadd.f32 %v5197, %v3743
      %v5230 = vadd.f32 %v5198, %v3743
      %v5231 = vadd.f32 %v5199, %v3743
      %v5232 = vadd.f32 %v5200, %v3743
      %v5233 = vadd.f32 %v5201, %v3743
      %v5234 = vadd.f32 %v5202, %v3743
      %v5235 = vadd.f32 %v5203, %v3743
      %v5236 = vadd.f32 %v5204, %v3743
      %v5237 = vadd.f32 %v5205, %v3743
      %v5238 = vadd.f32 %v5206, %v3743
      %v5239 = vadd.f32 %v5207, %v3743
      %v5240 = vadd.f32 %v5208, %v3743
      %v5241 = vadd.f32 %v5209, %v3743
      %v5242 = vadd.f32 %v5210, %v3743
      %v5243 = vadd.f32 %v5211, %v3743
      %v5244 = vadd.f32 %v5212, %v3743
      %v5245 = vadd.f32 %v5213, %v3743
      %v5246 = vadd.f32 %v5214, %v3743
      %v5247 = vadd.f32 %v5215, %v3743
      %v5248 = vadd.f32 %v5216, %v3743
      %v5249 = vadd.f32 %v5217, %v3743
      %v5250 = vadd.f32 %v5218, %v3743
      %v5251 = vadd.f32 %v5219, %v3743
      %v5252 = vadd.f32 %v5220, %v3743
      %v5253 = vadd.f32 %v5221, %v3743
      %s5254 = scalar_lea.vmem %s240, 16
      %5255 = vst.msk [vmem:[%s5254] sm:$0xff] %vm3777, %v5222
      %5256 = vst.msk [vmem:[%s5254 + $0x8] sm:$0xff] %vm3777, %v5223
      %5257 = vst.msk [vmem:[%s5254 + $0x20] sm:$0xff] %vm3777, %v5224
      %5258 = vst.msk [vmem:[%s5254 + $0x28] sm:$0xff] %vm3777, %v5225
      %5259 = vst.msk [vmem:[%s5254 + $0x40] sm:$0xff] %vm3777, %v5226
      %5260 = vst.msk [vmem:[%s5254 + $0x48] sm:$0xff] %vm3777, %v5227
      %5261 = vst.msk [vmem:[%s5254 + $0x60] sm:$0xff] %vm3777, %v5228
      %5262 = vst.msk [vmem:[%s5254 + $0x68] sm:$0xff] %vm3777, %v5229
      %5263 = vst.msk [vmem:[%s5254 + $0x80] sm:$0xff] %vm3777, %v5230
      %5264 = vst.msk [vmem:[%s5254 + $0x88] sm:$0xff] %vm3777, %v5231
      %5265 = vst.msk [vmem:[%s5254 + $0xa0] sm:$0xff] %vm3777, %v5232
      %5266 = vst.msk [vmem:[%s5254 + $0xa8] sm:$0xff] %vm3777, %v5233
      %5267 = vst.msk [vmem:[%s5254 + $0xc0] sm:$0xff] %vm3777, %v5234
      %5268 = vst.msk [vmem:[%s5254 + $0xc8] sm:$0xff] %vm3777, %v5235
      %5269 = vst.msk [vmem:[%s5254 + $0xe0] sm:$0xff] %vm3777, %v5236
      %5270 = vst.msk [vmem:[%s5254 + $0xe8] sm:$0xff] %vm3777, %v5237
      %5271 = vst.msk [vmem:[%s5254 + $0x100] sm:$0xff] %vm3777, %v5238
      %5272 = vst.msk [vmem:[%s5254 + $0x108] sm:$0xff] %vm3777, %v5239
      %5273 = vst.msk [vmem:[%s5254 + $0x120] sm:$0xff] %vm3777, %v5240
      %5274 = vst.msk [vmem:[%s5254 + $0x128] sm:$0xff] %vm3777, %v5241
      %5275 = vst.msk [vmem:[%s5254 + $0x140] sm:$0xff] %vm3777, %v5242
      %5276 = vst.msk [vmem:[%s5254 + $0x148] sm:$0xff] %vm3777, %v5243
      %5277 = vst.msk [vmem:[%s5254 + $0x160] sm:$0xff] %vm3777, %v5244
      %5278 = vst.msk [vmem:[%s5254 + $0x168] sm:$0xff] %vm3777, %v5245
      %5279 = vst.msk [vmem:[%s5254 + $0x180] sm:$0xff] %vm3777, %v5246
      %5280 = vst.msk [vmem:[%s5254 + $0x188] sm:$0xff] %vm3777, %v5247
      %5281 = vst.msk [vmem:[%s5254 + $0x1a0] sm:$0xff] %vm3777, %v5248
      %5282 = vst.msk [vmem:[%s5254 + $0x1a8] sm:$0xff] %vm3777, %v5249
      %5283 = vst.msk [vmem:[%s5254 + $0x1c0] sm:$0xff] %vm3777, %v5250
      %5284 = vst.msk [vmem:[%s5254 + $0x1c8] sm:$0xff] %vm3777, %v5251
      %5285 = vst.msk [vmem:[%s5254 + $0x1e0] sm:$0xff] %vm3777, %v5252
      %5286 = vst.msk [vmem:[%s5254 + $0x1e8] sm:$0xff] %vm3777, %v5253
      %s5287 = smul.u32 16, %s21
      %p5288 = scmp.lt.s32.totalorder %s19, 1
      %s5289 = scalar_select %p5288, %s19, 1
      %p5290 = scmp.lt.s32.totalorder %s5287, 15
      %s5291 = scalar_select %p5290, %s5287, 15
      %p5292 = scmp.lt.s32.totalorder %s20, 0
      %s5293 = scalar_select %p5292, %s20, 0
      %s5294 = smul.addr %s5291, 4
      %s5295 = sadd.s32 %s5293, %s5294
      %s5296 = smul.addr %s5289, 64
      %s5297 = sadd.s32 %s5295, %s5296
      %s5298 = smul.addr %s5297, 8
      %s5299 = scalar_lea.vmem %s3, %s5298
      // Predicated region
      $region33: #{upsample_forward.1} parent=31 // pred_check
        %p5300 = pneg %p133
      $region34: #{upsample_forward.1} parent=31 // pred_check_branch
        %5302 = sbr.rel (%p5300) target = $region36
      $region35: #{upsample_forward.1} parent=31 // pred_region
        %s5303 = smul.u32 16, %s21
      $region36: #{upsample_forward.1} parent=31 // pred_fallthru
        _
    $region32: #{upsample_forward.1} parent=5 // pred_fallthru
      _
    %p5304 = scmp.le.s32.totalorder 2, %s9
    // Predicated region
    $region37: #{upsample_forward.1} parent=5 // pred_check
      %p5305 = pneg %p5304
    $region38: #{upsample_forward.1} parent=5 // pred_check_branch
      %5307 = sbr.rel (%p5305) target = $region40
    $region39: #{upsample_forward.1} parent=5 // pred_region
      %s5308 = ssub.s32 %s9, 2
      // Predicated region
      $region41: #{upsample_forward.1} parent=39 // pred_check
        %p5309 = pneg %p139
      $region42: #{upsample_forward.1} parent=39 // pred_check_branch
        %5311 = sbr.rel (%p5309) target = $region44
      $region43: #{upsample_forward.1} parent=39 // pred_region
        %s5312 = smul.u32 16, %s24
        %p5313 = scmp.lt.s32.totalorder %s22, 1
        %s5314 = scalar_select %p5313, %s22, 1
        %p5315 = scmp.lt.s32.totalorder %s5312, 15
        %s5316 = scalar_select %p5315, %s5312, 15
        %p5317 = scmp.lt.s32.totalorder %s23, 0
        %s5318 = scalar_select %p5317, %s23, 0
        %s5319 = smul.addr %s5316, 4
        %s5320 = sadd.s32 %s5318, %s5319
        %s5321 = smul.addr %s5314, 64
        %s5322 = sadd.s32 %s5320, %s5321
        %s5323 = smul.addr %s5322, 8
        %s5324 = scalar_lea.vmem %s3, %s5323
      $region44: #{upsample_forward.1} parent=39 // pred_fallthru
        _
    $region40: #{upsample_forward.1} parent=5 // pred_fallthru
      _
  $region6: #{upsample_forward.1} parent=0 // loop_footer
    %s13 = sadd.s32 1, %s9
  $region7: #{upsample_forward.1} parent=0 // loop_footer_branch
    %8 = sbr.rel target = $region3
  $region8: #{upsample_forward.1} parent=0 // loop_exit
    _

</llo_original>
